<compile_context>
chip_gen: v7x
topology: tpu7x:2x2x1
jax: 0.10.0
libtpu: 0.0.40
codegen_flags: <defaults>
</compile_context>

<pallas_src>
import functools

import jax
import jax.numpy as jnp
from jax.experimental import pallas as pl
from jax.experimental.pallas import tpu as pltpu

# ----- hyper-parameters (the `args` object of the torch module) -----
KERNEL = 5          # args.kernel
DILATION = 1        # args.dilation
HIDDEN_MULT = 2     # args.hidden_size  (hidden channels = C * HIDDEN_MULT)
PAD = DILATION * (KERNEL - 1) // 2 + 1
LEAKY_SLOPE = 0.01
BN_EPS = 1e-5

# The length arithmetic (conv1 out = Th + 2*PAD - dil*(K-1) = Th + 2, then exactly Th
# after the fixed 3-tap second conv) only holds for odd KERNEL / even dil*(K-1).
assert KERNEL % 2 == 1 and (DILATION * (KERNEL - 1)) % 2 == 0, \
    "replication-pad length arithmetic requires an odd kernel"
assert 2 * PAD - DILATION * (KERNEL - 1) == 2, "conv output-length arithmetic broken"


def _round_up(x, m):
    return (x + m - 1) // m * m


# ------------------------------------ Pallas kernel -----------------------------------
def level_idcn_kernel(x_ref, w1_ref, b1_ref, w2_ref, b2_ref,
                      bn_scale_ref, bn_shift_ref, wb_ref,
                      out_even_ref, out_odd_ref, *, lane_split, ch, th):
    bblk = x_ref.shape[0]
    hh = w1_ref.shape[3]
    l1p = _round_up(th + 2, 8)                          # conv1 rows, 8-aligned
    lp = _round_up(l1p + DILATION * (KERNEL - 1), 8)    # padded rows, 8-aligned

    # ---- in-kernel even/odd split (torch Splitting) --------------------------------
    if lane_split:
        # wrapper presented x as (B, Th, 2C); even/odd are contiguous lane slices.
        xe = x_ref[:, :, 0:ch]                          # (bblk, Th, C) even steps
        xo = x_ref[:, :, ch:2 * ch]                     # (bblk, Th, C) odd  steps
    else:
        # small C: stride-2 sublane reads (cheaper than sub-128 lane shuffles).
        xe = x_ref[:, pl.ds(0, th, 2), :]
        xo = x_ref[:, pl.ds(1, th, 2), :]

    def block(x, idx):
        # ReplicationPad1d(PAD) -> Conv1d(C->H, K, dil) -> LeakyReLU(0.01)
        # -> Dropout (identity in eval) -> Conv1d(H->C, 3) -> Tanh
        # bf16 is cast ONCE before padding/windowing; accumulation stays f32.
        xb = x.astype(jnp.bfloat16)
        top = jnp.broadcast_to(xb[:, 0:1, :], (bblk, PAD, ch))
        bot = jnp.broadcast_to(xb[:, th - 1:th, :], (bblk, lp - th - PAD, ch))
        xp = jnp.concatenate([top, xb, bot], axis=1)     # (bblk, lp, C) bf16

        # conv1: K per-tap matmuls accumulated in f32 (no im2col lane concat).
        # All dim-merges are 8-aligned (l1p % 8 == 0, th % 8 == 0) -> no relayout.
        # Rows >= th+2 of the conv1 output are alignment slack and never read below.
        def tap1(j):
            sl = xp[:, j * DILATION:j * DILATION + l1p, :].reshape(bblk * l1p, ch)
            return jnp.dot(sl, w1_ref[idx, j], preferred_element_type=jnp.float32)

        hid = tap1(0)
        for j in range(1, KERNEL):
            hid = hid + tap1(j)
        hid = hid + b1_ref[idx]                          # (bblk*l1p, H) f32
        hid = jnp.where(hid >= 0, hid, LEAKY_SLOPE * hid)        # LeakyReLU in f32
        hid = hid.astype(jnp.bfloat16).reshape(bblk, l1p, hh)    # bf16 once, early

        # conv2 (3 taps): same per-tap scheme, contraction H on the MXU.
        def tap2(j):
            sl = hid[:, j:j + th, :].reshape(bblk * th, hh)
            return jnp.dot(sl, w2_ref[idx, j], preferred_element_type=jnp.float32)

        y = tap2(0) + tap2(1) + tap2(2) + b2_ref[idx]    # (bblk*th, C) f32
        return jnp.tanh(y).reshape(bblk, th, ch)

    # ---- modified (args.INN=True) Interactor coupling.  Slabs: 0=phi 1=psi 2=U 3=P
    d = xo * jnp.exp(block(xe, 0))
    c = xe * jnp.exp(block(xo, 1))
    x_even_update = c + block(d, 2)
    x_odd_update = d - block(c, 3)

    # ---- BottleneckBlock: Conv1x1(ReLU(BatchNorm1d(x))), BN eval stats folded ------
    # torch's final .permute(0,2,1) brings the even output to (B, T/2, C), which is
    # exactly our time-major layout, so no transpose is needed here.
    y = x_even_update * bn_scale_ref[...] + bn_shift_ref[...]
    y = jnp.maximum(y, 0.0)
    ye = jnp.dot(y.reshape(bblk * th, ch).astype(jnp.bfloat16), wb_ref[...],
                 preferred_element_type=jnp.float32)
    out_even_ref[...] = ye.reshape(bblk, th, ch)

    # Odd output in torch-native (B, C, T/2) layout: one batched XLU transpose and a
    # single wide store (replaces the previous per-batch Python loop).
    out_odd_ref[...] = jnp.transpose(x_odd_update, (0, 2, 1))


# ------------------------------------- wrapper -----------------------------------------
def _tpu_vmem_bytes():
    try:
        info = pltpu.get_tpu_info()
        cap = getattr(info, "vmem_capacity_bytes", None)
        if cap:
            return int(cap)
    except Exception:
        pass
    return 64 * 1024 * 1024        # conservative default (v7x-sized)


def _vmem_limit_bytes(phys):
    # v7x: 64 MiB physical -> leave headroom for Mosaic scratch + pipeline buffers.
    # v5e/v6e: 128 MiB physical -> raise the limit so bigger batch folds fit.
    if phys <= 64 * 1024 * 1024:
        return 40 * 1024 * 1024
    return 64 * 1024 * 1024


def _cores_per_chip():
    # >1 only on megacore-style chips (e.g. v7x: 2 TensorCores/chip).
    try:
        return max(1, int(getattr(jax.devices()[0], "num_cores", 1)))
    except Exception:
        return 1


def _per_batch_row_bytes(T, C, H):
    # Rough per-batch-row working-set estimate for one grid step (activations only).
    th = T // 2
    l1p = _round_up(th + 2, 8)
    lp = _round_up(l1p + DILATION * (KERNEL - 1), 8)
    act = (T * C + 8 * th * C) * 4            # x block, xe/xo/d/c/updates/outputs (f32)
    act += lp * C * 2 + l1p * H * 6           # bf16 padded input, f32+bf16 hidden
    return int(act * 2.5)                     # double-buffering + transient slack


def _pick_block_batch(B, per_row, budget, cores):
    # Largest batch fold that (a) fits the VMEM budget and (b) keeps >= cores grid
    # steps on multi-TensorCore chips (megacore sharding); on 1-TC chips (v5e/v6e)
    # bblk grows freely -> fewer grid steps, bigger matmul M dim.
    min_steps = min(cores, B)
    for cand in sorted((d for d in range(1, B + 1) if B % d == 0), reverse=True):
        if cand > 1 and cand * per_row > budget:
            continue
        if cand > 1 and cores > 1 and (B // cand) < min_steps:
            continue
        return cand
    return 1


@jax.jit
def level_idcn_forward(x, w1, b1, w2, b2, bn_scale, bn_shift, wb):
    # x: (B, T, C), T even, (T//2) % 8 == 0.
    # Returns (even_out (B, T/2, C), odd_out (B, C, T/2)) — the torch output layouts.
    B, T, C = x.shape
    assert T % 2 == 0, "time length must be even for the odd/even split"
    Th = T // 2
    assert Th % 8 == 0, "T//2 must be a multiple of 8 (sublane-aligned dim merges)"
    H = w1.shape[3]

    vmem_limit = _vmem_limit_bytes(_tpu_vmem_bytes())
    cores = _cores_per_chip()
    per_row = _per_batch_row_bytes(T, C, H)
    bblk = _pick_block_batch(B, per_row, int(vmem_limit * 0.6), cores)
    grid = (B // bblk,)

    # Even/odd split strategy: for 128-aligned C a metadata-only reshape makes the
    # split two free lane slices; for small C keep the (proven) stride-2 sublane read.
    lane_split = (C % 128 == 0)
    if lane_split:
        x_in = x.reshape(B, Th, 2 * C)
        x_spec = pl.BlockSpec((bblk, Th, 2 * C), lambda b: (b, 0, 0))
    else:
        x_in = x
        x_spec = pl.BlockSpec((bblk, T, C), lambda b: (b, 0, 0))

    def full(shape):
        return pl.BlockSpec(shape, lambda b, _n=len(shape): (0,) * _n)

    kernel = functools.partial(level_idcn_kernel, lane_split=lane_split, ch=C, th=Th)

    out_even, out_odd = pl.pallas_call(
        kernel,
        out_shape=(jax.ShapeDtypeStruct((B, Th, C), jnp.float32),
                   jax.ShapeDtypeStruct((B, C, Th), jnp.float32)),
        grid=grid,
        in_specs=[
            x_spec,                       # x (split in-kernel)
            full((4, KERNEL, C, H)),      # conv1 per-tap weights (bf16)
            full((4, 1, H)),              # conv1 biases (f32)
            full((4, 3, H, C)),           # conv2 per-tap weights (bf16)
            full((4, 1, C)),              # conv2 biases (f32)
            full((1, C)),                 # folded BN scale
            full((1, C)),                 # folded BN shift
            full((C, C)),                 # bottleneck 1x1 weight (bf16)
        ],
        out_specs=(pl.BlockSpec((bblk, Th, C), lambda b: (b, 0, 0)),
                   pl.BlockSpec((bblk, C, Th), lambda b: (b, 0, 0))),
        compiler_params=pltpu.CompilerParams(
            dimension_semantics=("parallel",),
            vmem_limit_bytes=vmem_limit),
    )(x_in, w1, b1, w2, b2, bn_scale, bn_shift, wb)
    return out_even, out_odd


# --------------------------- deterministic parameter construction ----------------------
def make_params(key, C):
    H = C * HIDDEN_MULT
    ks = jax.random.split(key, 24)
    ki = iter(range(24))

    def conv_taps(k, out_ch, in_ch, ksz):
        # torch Conv1d weight (out, in, K) -> per-tap slabs (K, in, out).
        w = 0.1 * jax.random.normal(k, (out_ch, in_ch, ksz), jnp.float32)
        return jnp.transpose(w, (2, 1, 0))

    w1_l, b1_l, w2_l, b2_l = [], [], [], []
    for _ in range(4):   # phi, psi, U, P
        w1_l.append(conv_taps(ks[next(ki)], H, C, KERNEL))
        b1_l.append(0.1 * jax.random.normal(ks[next(ki)], (1, H), jnp.float32))
        w2_l.append(conv_taps(ks[next(ki)], C, H, 3))
        b2_l.append(0.1 * jax.random.normal(ks[next(ki)], (1, C), jnp.float32))
    w1 = jnp.stack(w1_l).astype(jnp.bfloat16)    # (4, K, C, H)  MXU operand -> bf16
    b1 = jnp.stack(b1_l)                         # (4, 1, H)     f32
    w2 = jnp.stack(w2_l).astype(jnp.bfloat16)    # (4, 3, H, C)
    b2 = jnp.stack(b2_l)                         # (4, 1, C)

    # BatchNorm1d (eval): y = gamma * (x - mean) / sqrt(var + eps) + beta
    gamma = 1.0 + 0.1 * jax.random.normal(ks[next(ki)], (C,), jnp.float32)
    beta = 0.1 * jax.random.normal(ks[next(ki)], (C,), jnp.float32)
    mean = 0.1 * jax.random.normal(ks[next(ki)], (C,), jnp.float32)
    var = 1.0 + 0.1 * jnp.abs(jax.random.normal(ks[next(ki)], (C,), jnp.float32))
    scale = gamma / jnp.sqrt(var + BN_EPS)
    shift = beta - mean * scale
    bn_scale = scale.reshape(1, C)
    bn_shift = shift.reshape(1, C)

    # Bottleneck Conv1d(C, C, kernel_size=1, bias=False): weight (out, in, 1)
    wb_t = 0.1 * jax.random.normal(ks[next(ki)], (C, C, 1), jnp.float32)
    wb = jnp.transpose(wb_t[:, :, 0], (1, 0)).astype(jnp.bfloat16)   # (Cin, Cout)

    return w1, b1, w2, b2, bn_scale, bn_shift, wb


if __name__ == "__main__":
    key = jax.random.PRNGKey(0)
    k_x, k_p = jax.random.split(key)

    B, T, C = 2, 32, 8          # small shapes; T//2 = 16 keeps all merges 8-aligned
    x = jax.random.normal(k_x, (B, T, C), jnp.float32)
    params = make_params(k_p, C)

    even_out, odd_out = level_idcn_forward(x, *params)
    jax.block_until_ready(even_out)
    jax.block_until_ready(odd_out)

    assert even_out.shape == (B, T // 2, C)
    assert odd_out.shape == (B, C, T // 2)
    print("KERNEL_OK")
</pallas_src>

<mosaic_0001>
module attributes {stable_mosaic.version = 11 : i64} {
  func.func @level_idcn_kernel(%arg0: i32, %arg1: memref<2x32x8xf32, #tpu.memory_space<vmem>>, %arg2: memref<4x5x8x16xbf16, #tpu.memory_space<vmem>>, %arg3: memref<4x1x16xf32, #tpu.memory_space<vmem>>, %arg4: memref<4x3x16x8xbf16, #tpu.memory_space<vmem>>, %arg5: memref<4x1x8xf32, #tpu.memory_space<vmem>>, %arg6: memref<1x8xf32, #tpu.memory_space<vmem>>, %arg7: memref<1x8xf32, #tpu.memory_space<vmem>>, %arg8: memref<8x8xbf16, #tpu.memory_space<vmem>>, %arg9: memref<2x16x8xf32, #tpu.memory_space<vmem>>, %arg10: memref<2x8x16xf32, #tpu.memory_space<vmem>>) attributes {dimension_semantics = [#tpu.dimension_semantics<parallel>], iteration_bounds = array<i64: 1>, scalar_prefetch = 0 : i64, scratch_operands = 0 : i64, tpu.core_type = #tpu.core_type<tc>, window_params = [{transform_indices = @transform_0, window_bounds = array<i64: 2, 32, 8>}, {pipeline_mode = #tpu.pipeline_mode<synchronous>, transform_indices = @transform_1, window_bounds = array<i64: 4, 5, 8, 16>}, {pipeline_mode = #tpu.pipeline_mode<synchronous>, transform_indices = @transform_2, window_bounds = array<i64: 4, 1, 16>}, {pipeline_mode = #tpu.pipeline_mode<synchronous>, transform_indices = @transform_3, window_bounds = array<i64: 4, 3, 16, 8>}, {pipeline_mode = #tpu.pipeline_mode<synchronous>, transform_indices = @transform_4, window_bounds = array<i64: 4, 1, 8>}, {pipeline_mode = #tpu.pipeline_mode<synchronous>, transform_indices = @transform_5, window_bounds = array<i64: 1, 8>}, {pipeline_mode = #tpu.pipeline_mode<synchronous>, transform_indices = @transform_6, window_bounds = array<i64: 1, 8>}, {pipeline_mode = #tpu.pipeline_mode<synchronous>, transform_indices = @transform_7, window_bounds = array<i64: 8, 8>}, {transform_indices = @transform_8, window_bounds = array<i64: 2, 16, 8>}, {transform_indices = @transform_9, window_bounds = array<i64: 2, 8, 16>}]} {
    %c0 = arith.constant 0 : index
    %c0_0 = arith.constant 0 : index
    %c0_1 = arith.constant 0 : index
    %0 = tpu.strided_load %arg1[%c0, %c0_0, %c0_1] {strides = array<i32: 1, 2, 1>} : memref<2x32x8xf32, #tpu.memory_space<vmem>>, vector<2x16x8xf32>
    %c0_2 = arith.constant 0 : index
    %c1 = arith.constant 1 : index
    %c0_3 = arith.constant 0 : index
    %1 = tpu.strided_load %arg1[%c0_2, %c1, %c0_3] {strides = array<i32: 1, 2, 1>} : memref<2x32x8xf32, #tpu.memory_space<vmem>>, vector<2x16x8xf32>
    %2 = arith.truncf %0 : vector<2x16x8xf32> to vector<2x16x8xbf16>
    %3 = vector.extract_strided_slice %2 {offsets = [0, 0, 0], sizes = [2, 1, 8], strides = [1, 1, 1]} : vector<2x16x8xbf16> to vector<2x1x8xbf16>
    %4 = vector.shape_cast %3 : vector<2x1x8xbf16> to vector<2x1x8xbf16>
    %5 = vector.broadcast %4 : vector<2x1x8xbf16> to vector<2x3x8xbf16>
    %6 = vector.extract_strided_slice %2 {offsets = [0, 15, 0], sizes = [2, 1, 8], strides = [1, 1, 1]} : vector<2x16x8xbf16> to vector<2x1x8xbf16>
    %7 = vector.shape_cast %6 : vector<2x1x8xbf16> to vector<2x1x8xbf16>
    %8 = vector.broadcast %7 : vector<2x1x8xbf16> to vector<2x13x8xbf16>
    %9 = tpu.concatenate %5, %2, %8 in 1 : vector<2x3x8xbf16>, vector<2x16x8xbf16>, vector<2x13x8xbf16> -> vector<2x32x8xbf16>
    %10 = vector.extract_strided_slice %9 {offsets = [0, 0, 0], sizes = [2, 24, 8], strides = [1, 1, 1]} : vector<2x32x8xbf16> to vector<2x24x8xbf16>
    %11 = vector.shape_cast %10 : vector<2x24x8xbf16> to vector<48x8xbf16>
    %c0_4 = arith.constant 0 : index
    %c0_5 = arith.constant 0 : index
    %c0_6 = arith.constant 0 : index
    %c0_7 = arith.constant 0 : index
    %12 = vector.load %arg2[%c0_4, %c0_5, %c0_6, %c0_7] : memref<4x5x8x16xbf16, #tpu.memory_space<vmem>>, vector<1x1x8x16xbf16>
    %13 = vector.shape_cast %12 : vector<1x1x8x16xbf16> to vector<8x16xbf16>
    %cst = arith.constant dense<0.000000e+00> : vector<48x16xf32>
    %14 = tpu.matmul %11, %13, %cst {dimension_numbers = #tpu.dot_dimension_numbers<[1], [0], [0], [1], [0, 0, 1, 1], [], []>} : vector<48x8xbf16>, vector<8x16xbf16>, vector<48x16xf32> -> vector<48x16xf32>
    %15 = vector.extract_strided_slice %9 {offsets = [0, 1, 0], sizes = [2, 24, 8], strides = [1, 1, 1]} : vector<2x32x8xbf16> to vector<2x24x8xbf16>
    %16 = vector.shape_cast %15 : vector<2x24x8xbf16> to vector<48x8xbf16>
    %c0_8 = arith.constant 0 : index
    %c1_9 = arith.constant 1 : index
    %c0_10 = arith.constant 0 : index
    %c0_11 = arith.constant 0 : index
    %17 = vector.load %arg2[%c0_8, %c1_9, %c0_10, %c0_11] : memref<4x5x8x16xbf16, #tpu.memory_space<vmem>>, vector<1x1x8x16xbf16>
    %18 = vector.shape_cast %17 : vector<1x1x8x16xbf16> to vector<8x16xbf16>
    %cst_12 = arith.constant dense<0.000000e+00> : vector<48x16xf32>
    %19 = tpu.matmul %16, %18, %cst_12 {dimension_numbers = #tpu.dot_dimension_numbers<[1], [0], [0], [1], [0, 0, 1, 1], [], []>} : vector<48x8xbf16>, vector<8x16xbf16>, vector<48x16xf32> -> vector<48x16xf32>
    %20 = arith.addf %14, %19 : vector<48x16xf32>
    %21 = vector.extract_strided_slice %9 {offsets = [0, 2, 0], sizes = [2, 24, 8], strides = [1, 1, 1]} : vector<2x32x8xbf16> to vector<2x24x8xbf16>
    %22 = vector.shape_cast %21 : vector<2x24x8xbf16> to vector<48x8xbf16>
    %c0_13 = arith.constant 0 : index
    %c2 = arith.constant 2 : index
    %c0_14 = arith.constant 0 : index
    %c0_15 = arith.constant 0 : index
    %23 = vector.load %arg2[%c0_13, %c2, %c0_14, %c0_15] : memref<4x5x8x16xbf16, #tpu.memory_space<vmem>>, vector<1x1x8x16xbf16>
    %24 = vector.shape_cast %23 : vector<1x1x8x16xbf16> to vector<8x16xbf16>
    %cst_16 = arith.constant dense<0.000000e+00> : vector<48x16xf32>
    %25 = tpu.matmul %22, %24, %cst_16 {dimension_numbers = #tpu.dot_dimension_numbers<[1], [0], [0], [1], [0, 0, 1, 1], [], []>} : vector<48x8xbf16>, vector<8x16xbf16>, vector<48x16xf32> -> vector<48x16xf32>
    %26 = arith.addf %20, %25 : vector<48x16xf32>
    %27 = vector.extract_strided_slice %9 {offsets = [0, 3, 0], sizes = [2, 24, 8], strides = [1, 1, 1]} : vector<2x32x8xbf16> to vector<2x24x8xbf16>
    %28 = vector.shape_cast %27 : vector<2x24x8xbf16> to vector<48x8xbf16>
    %c0_17 = arith.constant 0 : index
    %c3 = arith.constant 3 : index
    %c0_18 = arith.constant 0 : index
    %c0_19 = arith.constant 0 : index
    %29 = vector.load %arg2[%c0_17, %c3, %c0_18, %c0_19] : memref<4x5x8x16xbf16, #tpu.memory_space<vmem>>, vector<1x1x8x16xbf16>
    %30 = vector.shape_cast %29 : vector<1x1x8x16xbf16> to vector<8x16xbf16>
    %cst_20 = arith.constant dense<0.000000e+00> : vector<48x16xf32>
    %31 = tpu.matmul %28, %30, %cst_20 {dimension_numbers = #tpu.dot_dimension_numbers<[1], [0], [0], [1], [0, 0, 1, 1], [], []>} : vector<48x8xbf16>, vector<8x16xbf16>, vector<48x16xf32> -> vector<48x16xf32>
    %32 = arith.addf %26, %31 : vector<48x16xf32>
    %33 = vector.extract_strided_slice %9 {offsets = [0, 4, 0], sizes = [2, 24, 8], strides = [1, 1, 1]} : vector<2x32x8xbf16> to vector<2x24x8xbf16>
    %34 = vector.shape_cast %33 : vector<2x24x8xbf16> to vector<48x8xbf16>
    %c0_21 = arith.constant 0 : index
    %c4 = arith.constant 4 : index
    %c0_22 = arith.constant 0 : index
    %c0_23 = arith.constant 0 : index
    %35 = vector.load %arg2[%c0_21, %c4, %c0_22, %c0_23] : memref<4x5x8x16xbf16, #tpu.memory_space<vmem>>, vector<1x1x8x16xbf16>
    %36 = vector.shape_cast %35 : vector<1x1x8x16xbf16> to vector<8x16xbf16>
    %cst_24 = arith.constant dense<0.000000e+00> : vector<48x16xf32>
    %37 = tpu.matmul %34, %36, %cst_24 {dimension_numbers = #tpu.dot_dimension_numbers<[1], [0], [0], [1], [0, 0, 1, 1], [], []>} : vector<48x8xbf16>, vector<8x16xbf16>, vector<48x16xf32> -> vector<48x16xf32>
    %38 = arith.addf %32, %37 : vector<48x16xf32>
    %c0_25 = arith.constant 0 : index
    %c0_26 = arith.constant 0 : index
    %c0_27 = arith.constant 0 : index
    %39 = vector.load %arg3[%c0_25, %c0_26, %c0_27] : memref<4x1x16xf32, #tpu.memory_space<vmem>>, vector<1x1x16xf32>
    %40 = vector.shape_cast %39 : vector<1x1x16xf32> to vector<1x16xf32>
    %41 = vector.broadcast %40 : vector<1x16xf32> to vector<48x16xf32>
    %42 = arith.addf %38, %41 : vector<48x16xf32>
    %cst_28 = arith.constant 0.000000e+00 : f32
    %43 = vector.broadcast %cst_28 : f32 to vector<48x16xf32>
    %44 = arith.cmpf oge, %42, %43 : vector<48x16xf32>
    %cst_29 = arith.constant 0.00999999977 : f32
    %45 = vector.broadcast %cst_29 : f32 to vector<48x16xf32>
    %46 = arith.mulf %45, %42 : vector<48x16xf32>
    %47 = arith.select %44, %42, %46 : vector<48x16xi1>, vector<48x16xf32>
    %48 = arith.truncf %47 : vector<48x16xf32> to vector<48x16xbf16>
    %49 = vector.shape_cast %48 : vector<48x16xbf16> to vector<2x24x16xbf16>
    %50 = vector.extract_strided_slice %49 {offsets = [0, 0, 0], sizes = [2, 16, 16], strides = [1, 1, 1]} : vector<2x24x16xbf16> to vector<2x16x16xbf16>
    %51 = vector.shape_cast %50 : vector<2x16x16xbf16> to vector<32x16xbf16>
    %c0_30 = arith.constant 0 : index
    %c0_31 = arith.constant 0 : index
    %c0_32 = arith.constant 0 : index
    %c0_33 = arith.constant 0 : index
    %52 = vector.load %arg4[%c0_30, %c0_31, %c0_32, %c0_33] : memref<4x3x16x8xbf16, #tpu.memory_space<vmem>>, vector<1x1x16x8xbf16>
    %53 = vector.shape_cast %52 : vector<1x1x16x8xbf16> to vector<16x8xbf16>
    %cst_34 = arith.constant dense<0.000000e+00> : vector<32x8xf32>
    %54 = tpu.matmul %51, %53, %cst_34 {dimension_numbers = #tpu.dot_dimension_numbers<[1], [0], [0], [1], [0, 0, 1, 1], [], []>} : vector<32x16xbf16>, vector<16x8xbf16>, vector<32x8xf32> -> vector<32x8xf32>
    %55 = vector.extract_strided_slice %49 {offsets = [0, 1, 0], sizes = [2, 16, 16], strides = [1, 1, 1]} : vector<2x24x16xbf16> to vector<2x16x16xbf16>
    %56 = vector.shape_cast %55 : vector<2x16x16xbf16> to vector<32x16xbf16>
    %c0_35 = arith.constant 0 : index
    %c1_36 = arith.constant 1 : index
    %c0_37 = arith.constant 0 : index
    %c0_38 = arith.constant 0 : index
    %57 = vector.load %arg4[%c0_35, %c1_36, %c0_37, %c0_38] : memref<4x3x16x8xbf16, #tpu.memory_space<vmem>>, vector<1x1x16x8xbf16>
    %58 = vector.shape_cast %57 : vector<1x1x16x8xbf16> to vector<16x8xbf16>
    %cst_39 = arith.constant dense<0.000000e+00> : vector<32x8xf32>
    %59 = tpu.matmul %56, %58, %cst_39 {dimension_numbers = #tpu.dot_dimension_numbers<[1], [0], [0], [1], [0, 0, 1, 1], [], []>} : vector<32x16xbf16>, vector<16x8xbf16>, vector<32x8xf32> -> vector<32x8xf32>
    %60 = arith.addf %54, %59 : vector<32x8xf32>
    %61 = vector.extract_strided_slice %49 {offsets = [0, 2, 0], sizes = [2, 16, 16], strides = [1, 1, 1]} : vector<2x24x16xbf16> to vector<2x16x16xbf16>
    %62 = vector.shape_cast %61 : vector<2x16x16xbf16> to vector<32x16xbf16>
    %c0_40 = arith.constant 0 : index
    %c2_41 = arith.constant 2 : index
    %c0_42 = arith.constant 0 : index
    %c0_43 = arith.constant 0 : index
    %63 = vector.load %arg4[%c0_40, %c2_41, %c0_42, %c0_43] : memref<4x3x16x8xbf16, #tpu.memory_space<vmem>>, vector<1x1x16x8xbf16>
    %64 = vector.shape_cast %63 : vector<1x1x16x8xbf16> to vector<16x8xbf16>
    %cst_44 = arith.constant dense<0.000000e+00> : vector<32x8xf32>
    %65 = tpu.matmul %62, %64, %cst_44 {dimension_numbers = #tpu.dot_dimension_numbers<[1], [0], [0], [1], [0, 0, 1, 1], [], []>} : vector<32x16xbf16>, vector<16x8xbf16>, vector<32x8xf32> -> vector<32x8xf32>
    %66 = arith.addf %60, %65 : vector<32x8xf32>
    %c0_45 = arith.constant 0 : index
    %c0_46 = arith.constant 0 : index
    %c0_47 = arith.constant 0 : index
    %67 = vector.load %arg5[%c0_45, %c0_46, %c0_47] : memref<4x1x8xf32, #tpu.memory_space<vmem>>, vector<1x1x8xf32>
    %68 = vector.shape_cast %67 : vector<1x1x8xf32> to vector<1x8xf32>
    %69 = vector.broadcast %68 : vector<1x8xf32> to vector<32x8xf32>
    %70 = arith.addf %66, %69 : vector<32x8xf32>
    %71 = math.tanh %70 : vector<32x8xf32>
    %72 = vector.shape_cast %71 : vector<32x8xf32> to vector<2x16x8xf32>
    %73 = math.exp %72 : vector<2x16x8xf32>
    %74 = arith.mulf %1, %73 : vector<2x16x8xf32>
    %75 = arith.truncf %1 : vector<2x16x8xf32> to vector<2x16x8xbf16>
    %76 = vector.extract_strided_slice %75 {offsets = [0, 0, 0], sizes = [2, 1, 8], strides = [1, 1, 1]} : vector<2x16x8xbf16> to vector<2x1x8xbf16>
    %77 = vector.shape_cast %76 : vector<2x1x8xbf16> to vector<2x1x8xbf16>
    %78 = vector.broadcast %77 : vector<2x1x8xbf16> to vector<2x3x8xbf16>
    %79 = vector.extract_strided_slice %75 {offsets = [0, 15, 0], sizes = [2, 1, 8], strides = [1, 1, 1]} : vector<2x16x8xbf16> to vector<2x1x8xbf16>
    %80 = vector.shape_cast %79 : vector<2x1x8xbf16> to vector<2x1x8xbf16>
    %81 = vector.broadcast %80 : vector<2x1x8xbf16> to vector<2x13x8xbf16>
    %82 = tpu.concatenate %78, %75, %81 in 1 : vector<2x3x8xbf16>, vector<2x16x8xbf16>, vector<2x13x8xbf16> -> vector<2x32x8xbf16>
    %83 = vector.extract_strided_slice %82 {offsets = [0, 0, 0], sizes = [2, 24, 8], strides = [1, 1, 1]} : vector<2x32x8xbf16> to vector<2x24x8xbf16>
    %84 = vector.shape_cast %83 : vector<2x24x8xbf16> to vector<48x8xbf16>
    %c1_48 = arith.constant 1 : index
    %c0_49 = arith.constant 0 : index
    %c0_50 = arith.constant 0 : index
    %c0_51 = arith.constant 0 : index
    %85 = vector.load %arg2[%c1_48, %c0_49, %c0_50, %c0_51] : memref<4x5x8x16xbf16, #tpu.memory_space<vmem>>, vector<1x1x8x16xbf16>
    %86 = vector.shape_cast %85 : vector<1x1x8x16xbf16> to vector<8x16xbf16>
    %cst_52 = arith.constant dense<0.000000e+00> : vector<48x16xf32>
    %87 = tpu.matmul %84, %86, %cst_52 {dimension_numbers = #tpu.dot_dimension_numbers<[1], [0], [0], [1], [0, 0, 1, 1], [], []>} : vector<48x8xbf16>, vector<8x16xbf16>, vector<48x16xf32> -> vector<48x16xf32>
    %88 = vector.extract_strided_slice %82 {offsets = [0, 1, 0], sizes = [2, 24, 8], strides = [1, 1, 1]} : vector<2x32x8xbf16> to vector<2x24x8xbf16>
    %89 = vector.shape_cast %88 : vector<2x24x8xbf16> to vector<48x8xbf16>
    %c1_53 = arith.constant 1 : index
    %c1_54 = arith.constant 1 : index
    %c0_55 = arith.constant 0 : index
    %c0_56 = arith.constant 0 : index
    %90 = vector.load %arg2[%c1_53, %c1_54, %c0_55, %c0_56] : memref<4x5x8x16xbf16, #tpu.memory_space<vmem>>, vector<1x1x8x16xbf16>
    %91 = vector.shape_cast %90 : vector<1x1x8x16xbf16> to vector<8x16xbf16>
    %cst_57 = arith.constant dense<0.000000e+00> : vector<48x16xf32>
    %92 = tpu.matmul %89, %91, %cst_57 {dimension_numbers = #tpu.dot_dimension_numbers<[1], [0], [0], [1], [0, 0, 1, 1], [], []>} : vector<48x8xbf16>, vector<8x16xbf16>, vector<48x16xf32> -> vector<48x16xf32>
    %93 = arith.addf %87, %92 : vector<48x16xf32>
    %94 = vector.extract_strided_slice %82 {offsets = [0, 2, 0], sizes = [2, 24, 8], strides = [1, 1, 1]} : vector<2x32x8xbf16> to vector<2x24x8xbf16>
    %95 = vector.shape_cast %94 : vector<2x24x8xbf16> to vector<48x8xbf16>
    %c1_58 = arith.constant 1 : index
    %c2_59 = arith.constant 2 : index
    %c0_60 = arith.constant 0 : index
    %c0_61 = arith.constant 0 : index
    %96 = vector.load %arg2[%c1_58, %c2_59, %c0_60, %c0_61] : memref<4x5x8x16xbf16, #tpu.memory_space<vmem>>, vector<1x1x8x16xbf16>
    %97 = vector.shape_cast %96 : vector<1x1x8x16xbf16> to vector<8x16xbf16>
    %cst_62 = arith.constant dense<0.000000e+00> : vector<48x16xf32>
    %98 = tpu.matmul %95, %97, %cst_62 {dimension_numbers = #tpu.dot_dimension_numbers<[1], [0], [0], [1], [0, 0, 1, 1], [], []>} : vector<48x8xbf16>, vector<8x16xbf16>, vector<48x16xf32> -> vector<48x16xf32>
    %99 = arith.addf %93, %98 : vector<48x16xf32>
    %100 = vector.extract_strided_slice %82 {offsets = [0, 3, 0], sizes = [2, 24, 8], strides = [1, 1, 1]} : vector<2x32x8xbf16> to vector<2x24x8xbf16>
    %101 = vector.shape_cast %100 : vector<2x24x8xbf16> to vector<48x8xbf16>
    %c1_63 = arith.constant 1 : index
    %c3_64 = arith.constant 3 : index
    %c0_65 = arith.constant 0 : index
    %c0_66 = arith.constant 0 : index
    %102 = vector.load %arg2[%c1_63, %c3_64, %c0_65, %c0_66] : memref<4x5x8x16xbf16, #tpu.memory_space<vmem>>, vector<1x1x8x16xbf16>
    %103 = vector.shape_cast %102 : vector<1x1x8x16xbf16> to vector<8x16xbf16>
    %cst_67 = arith.constant dense<0.000000e+00> : vector<48x16xf32>
    %104 = tpu.matmul %101, %103, %cst_67 {dimension_numbers = #tpu.dot_dimension_numbers<[1], [0], [0], [1], [0, 0, 1, 1], [], []>} : vector<48x8xbf16>, vector<8x16xbf16>, vector<48x16xf32> -> vector<48x16xf32>
    %105 = arith.addf %99, %104 : vector<48x16xf32>
    %106 = vector.extract_strided_slice %82 {offsets = [0, 4, 0], sizes = [2, 24, 8], strides = [1, 1, 1]} : vector<2x32x8xbf16> to vector<2x24x8xbf16>
    %107 = vector.shape_cast %106 : vector<2x24x8xbf16> to vector<48x8xbf16>
    %c1_68 = arith.constant 1 : index
    %c4_69 = arith.constant 4 : index
    %c0_70 = arith.constant 0 : index
    %c0_71 = arith.constant 0 : index
    %108 = vector.load %arg2[%c1_68, %c4_69, %c0_70, %c0_71] : memref<4x5x8x16xbf16, #tpu.memory_space<vmem>>, vector<1x1x8x16xbf16>
    %109 = vector.shape_cast %108 : vector<1x1x8x16xbf16> to vector<8x16xbf16>
    %cst_72 = arith.constant dense<0.000000e+00> : vector<48x16xf32>
    %110 = tpu.matmul %107, %109, %cst_72 {dimension_numbers = #tpu.dot_dimension_numbers<[1], [0], [0], [1], [0, 0, 1, 1], [], []>} : vector<48x8xbf16>, vector<8x16xbf16>, vector<48x16xf32> -> vector<48x16xf32>
    %111 = arith.addf %105, %110 : vector<48x16xf32>
    %c1_73 = arith.constant 1 : index
    %c0_74 = arith.constant 0 : index
    %c0_75 = arith.constant 0 : index
    %112 = vector.load %arg3[%c1_73, %c0_74, %c0_75] : memref<4x1x16xf32, #tpu.memory_space<vmem>>, vector<1x1x16xf32>
    %113 = vector.shape_cast %112 : vector<1x1x16xf32> to vector<1x16xf32>
    %114 = vector.broadcast %113 : vector<1x16xf32> to vector<48x16xf32>
    %115 = arith.addf %111, %114 : vector<48x16xf32>
    %cst_76 = arith.constant 0.000000e+00 : f32
    %116 = vector.broadcast %cst_76 : f32 to vector<48x16xf32>
    %117 = arith.cmpf oge, %115, %116 : vector<48x16xf32>
    %cst_77 = arith.constant 0.00999999977 : f32
    %118 = vector.broadcast %cst_77 : f32 to vector<48x16xf32>
    %119 = arith.mulf %118, %115 : vector<48x16xf32>
    %120 = arith.select %117, %115, %119 : vector<48x16xi1>, vector<48x16xf32>
    %121 = arith.truncf %120 : vector<48x16xf32> to vector<48x16xbf16>
    %122 = vector.shape_cast %121 : vector<48x16xbf16> to vector<2x24x16xbf16>
    %123 = vector.extract_strided_slice %122 {offsets = [0, 0, 0], sizes = [2, 16, 16], strides = [1, 1, 1]} : vector<2x24x16xbf16> to vector<2x16x16xbf16>
    %124 = vector.shape_cast %123 : vector<2x16x16xbf16> to vector<32x16xbf16>
    %c1_78 = arith.constant 1 : index
    %c0_79 = arith.constant 0 : index
    %c0_80 = arith.constant 0 : index
    %c0_81 = arith.constant 0 : index
    %125 = vector.load %arg4[%c1_78, %c0_79, %c0_80, %c0_81] : memref<4x3x16x8xbf16, #tpu.memory_space<vmem>>, vector<1x1x16x8xbf16>
    %126 = vector.shape_cast %125 : vector<1x1x16x8xbf16> to vector<16x8xbf16>
    %cst_82 = arith.constant dense<0.000000e+00> : vector<32x8xf32>
    %127 = tpu.matmul %124, %126, %cst_82 {dimension_numbers = #tpu.dot_dimension_numbers<[1], [0], [0], [1], [0, 0, 1, 1], [], []>} : vector<32x16xbf16>, vector<16x8xbf16>, vector<32x8xf32> -> vector<32x8xf32>
    %128 = vector.extract_strided_slice %122 {offsets = [0, 1, 0], sizes = [2, 16, 16], strides = [1, 1, 1]} : vector<2x24x16xbf16> to vector<2x16x16xbf16>
    %129 = vector.shape_cast %128 : vector<2x16x16xbf16> to vector<32x16xbf16>
    %c1_83 = arith.constant 1 : index
    %c1_84 = arith.constant 1 : index
    %c0_85 = arith.constant 0 : index
    %c0_86 = arith.constant 0 : index
    %130 = vector.load %arg4[%c1_83, %c1_84, %c0_85, %c0_86] : memref<4x3x16x8xbf16, #tpu.memory_space<vmem>>, vector<1x1x16x8xbf16>
    %131 = vector.shape_cast %130 : vector<1x1x16x8xbf16> to vector<16x8xbf16>
    %cst_87 = arith.constant dense<0.000000e+00> : vector<32x8xf32>
    %132 = tpu.matmul %129, %131, %cst_87 {dimension_numbers = #tpu.dot_dimension_numbers<[1], [0], [0], [1], [0, 0, 1, 1], [], []>} : vector<32x16xbf16>, vector<16x8xbf16>, vector<32x8xf32> -> vector<32x8xf32>
    %133 = arith.addf %127, %132 : vector<32x8xf32>
    %134 = vector.extract_strided_slice %122 {offsets = [0, 2, 0], sizes = [2, 16, 16], strides = [1, 1, 1]} : vector<2x24x16xbf16> to vector<2x16x16xbf16>
    %135 = vector.shape_cast %134 : vector<2x16x16xbf16> to vector<32x16xbf16>
    %c1_88 = arith.constant 1 : index
    %c2_89 = arith.constant 2 : index
    %c0_90 = arith.constant 0 : index
    %c0_91 = arith.constant 0 : index
    %136 = vector.load %arg4[%c1_88, %c2_89, %c0_90, %c0_91] : memref<4x3x16x8xbf16, #tpu.memory_space<vmem>>, vector<1x1x16x8xbf16>
    %137 = vector.shape_cast %136 : vector<1x1x16x8xbf16> to vector<16x8xbf16>
    %cst_92 = arith.constant dense<0.000000e+00> : vector<32x8xf32>
    %138 = tpu.matmul %135, %137, %cst_92 {dimension_numbers = #tpu.dot_dimension_numbers<[1], [0], [0], [1], [0, 0, 1, 1], [], []>} : vector<32x16xbf16>, vector<16x8xbf16>, vector<32x8xf32> -> vector<32x8xf32>
    %139 = arith.addf %133, %138 : vector<32x8xf32>
    %c1_93 = arith.constant 1 : index
    %c0_94 = arith.constant 0 : index
    %c0_95 = arith.constant 0 : index
    %140 = vector.load %arg5[%c1_93, %c0_94, %c0_95] : memref<4x1x8xf32, #tpu.memory_space<vmem>>, vector<1x1x8xf32>
    %141 = vector.shape_cast %140 : vector<1x1x8xf32> to vector<1x8xf32>
    %142 = vector.broadcast %141 : vector<1x8xf32> to vector<32x8xf32>
    %143 = arith.addf %139, %142 : vector<32x8xf32>
    %144 = math.tanh %143 : vector<32x8xf32>
    %145 = vector.shape_cast %144 : vector<32x8xf32> to vector<2x16x8xf32>
    %146 = math.exp %145 : vector<2x16x8xf32>
    %147 = arith.mulf %0, %146 : vector<2x16x8xf32>
    %148 = arith.truncf %74 : vector<2x16x8xf32> to vector<2x16x8xbf16>
    %149 = vector.extract_strided_slice %148 {offsets = [0, 0, 0], sizes = [2, 1, 8], strides = [1, 1, 1]} : vector<2x16x8xbf16> to vector<2x1x8xbf16>
    %150 = vector.shape_cast %149 : vector<2x1x8xbf16> to vector<2x1x8xbf16>
    %151 = vector.broadcast %150 : vector<2x1x8xbf16> to vector<2x3x8xbf16>
    %152 = vector.extract_strided_slice %148 {offsets = [0, 15, 0], sizes = [2, 1, 8], strides = [1, 1, 1]} : vector<2x16x8xbf16> to vector<2x1x8xbf16>
    %153 = vector.shape_cast %152 : vector<2x1x8xbf16> to vector<2x1x8xbf16>
    %154 = vector.broadcast %153 : vector<2x1x8xbf16> to vector<2x13x8xbf16>
    %155 = tpu.concatenate %151, %148, %154 in 1 : vector<2x3x8xbf16>, vector<2x16x8xbf16>, vector<2x13x8xbf16> -> vector<2x32x8xbf16>
    %156 = vector.extract_strided_slice %155 {offsets = [0, 0, 0], sizes = [2, 24, 8], strides = [1, 1, 1]} : vector<2x32x8xbf16> to vector<2x24x8xbf16>
    %157 = vector.shape_cast %156 : vector<2x24x8xbf16> to vector<48x8xbf16>
    %c2_96 = arith.constant 2 : index
    %c0_97 = arith.constant 0 : index
    %c0_98 = arith.constant 0 : index
    %c0_99 = arith.constant 0 : index
    %158 = vector.load %arg2[%c2_96, %c0_97, %c0_98, %c0_99] : memref<4x5x8x16xbf16, #tpu.memory_space<vmem>>, vector<1x1x8x16xbf16>
    %159 = vector.shape_cast %158 : vector<1x1x8x16xbf16> to vector<8x16xbf16>
    %cst_100 = arith.constant dense<0.000000e+00> : vector<48x16xf32>
    %160 = tpu.matmul %157, %159, %cst_100 {dimension_numbers = #tpu.dot_dimension_numbers<[1], [0], [0], [1], [0, 0, 1, 1], [], []>} : vector<48x8xbf16>, vector<8x16xbf16>, vector<48x16xf32> -> vector<48x16xf32>
    %161 = vector.extract_strided_slice %155 {offsets = [0, 1, 0], sizes = [2, 24, 8], strides = [1, 1, 1]} : vector<2x32x8xbf16> to vector<2x24x8xbf16>
    %162 = vector.shape_cast %161 : vector<2x24x8xbf16> to vector<48x8xbf16>
    %c2_101 = arith.constant 2 : index
    %c1_102 = arith.constant 1 : index
    %c0_103 = arith.constant 0 : index
    %c0_104 = arith.constant 0 : index
    %163 = vector.load %arg2[%c2_101, %c1_102, %c0_103, %c0_104] : memref<4x5x8x16xbf16, #tpu.memory_space<vmem>>, vector<1x1x8x16xbf16>
    %164 = vector.shape_cast %163 : vector<1x1x8x16xbf16> to vector<8x16xbf16>
    %cst_105 = arith.constant dense<0.000000e+00> : vector<48x16xf32>
    %165 = tpu.matmul %162, %164, %cst_105 {dimension_numbers = #tpu.dot_dimension_numbers<[1], [0], [0], [1], [0, 0, 1, 1], [], []>} : vector<48x8xbf16>, vector<8x16xbf16>, vector<48x16xf32> -> vector<48x16xf32>
    %166 = arith.addf %160, %165 : vector<48x16xf32>
    %167 = vector.extract_strided_slice %155 {offsets = [0, 2, 0], sizes = [2, 24, 8], strides = [1, 1, 1]} : vector<2x32x8xbf16> to vector<2x24x8xbf16>
    %168 = vector.shape_cast %167 : vector<2x24x8xbf16> to vector<48x8xbf16>
    %c2_106 = arith.constant 2 : index
    %c2_107 = arith.constant 2 : index
    %c0_108 = arith.constant 0 : index
    %c0_109 = arith.constant 0 : index
    %169 = vector.load %arg2[%c2_106, %c2_107, %c0_108, %c0_109] : memref<4x5x8x16xbf16, #tpu.memory_space<vmem>>, vector<1x1x8x16xbf16>
    %170 = vector.shape_cast %169 : vector<1x1x8x16xbf16> to vector<8x16xbf16>
    %cst_110 = arith.constant dense<0.000000e+00> : vector<48x16xf32>
    %171 = tpu.matmul %168, %170, %cst_110 {dimension_numbers = #tpu.dot_dimension_numbers<[1], [0], [0], [1], [0, 0, 1, 1], [], []>} : vector<48x8xbf16>, vector<8x16xbf16>, vector<48x16xf32> -> vector<48x16xf32>
    %172 = arith.addf %166, %171 : vector<48x16xf32>
    %173 = vector.extract_strided_slice %155 {offsets = [0, 3, 0], sizes = [2, 24, 8], strides = [1, 1, 1]} : vector<2x32x8xbf16> to vector<2x24x8xbf16>
    %174 = vector.shape_cast %173 : vector<2x24x8xbf16> to vector<48x8xbf16>
    %c2_111 = arith.constant 2 : index
    %c3_112 = arith.constant 3 : index
    %c0_113 = arith.constant 0 : index
    %c0_114 = arith.constant 0 : index
    %175 = vector.load %arg2[%c2_111, %c3_112, %c0_113, %c0_114] : memref<4x5x8x16xbf16, #tpu.memory_space<vmem>>, vector<1x1x8x16xbf16>
    %176 = vector.shape_cast %175 : vector<1x1x8x16xbf16> to vector<8x16xbf16>
    %cst_115 = arith.constant dense<0.000000e+00> : vector<48x16xf32>
    %177 = tpu.matmul %174, %176, %cst_115 {dimension_numbers = #tpu.dot_dimension_numbers<[1], [0], [0], [1], [0, 0, 1, 1], [], []>} : vector<48x8xbf16>, vector<8x16xbf16>, vector<48x16xf32> -> vector<48x16xf32>
    %178 = arith.addf %172, %177 : vector<48x16xf32>
    %179 = vector.extract_strided_slice %155 {offsets = [0, 4, 0], sizes = [2, 24, 8], strides = [1, 1, 1]} : vector<2x32x8xbf16> to vector<2x24x8xbf16>
    %180 = vector.shape_cast %179 : vector<2x24x8xbf16> to vector<48x8xbf16>
    %c2_116 = arith.constant 2 : index
    %c4_117 = arith.constant 4 : index
    %c0_118 = arith.constant 0 : index
    %c0_119 = arith.constant 0 : index
    %181 = vector.load %arg2[%c2_116, %c4_117, %c0_118, %c0_119] : memref<4x5x8x16xbf16, #tpu.memory_space<vmem>>, vector<1x1x8x16xbf16>
    %182 = vector.shape_cast %181 : vector<1x1x8x16xbf16> to vector<8x16xbf16>
    %cst_120 = arith.constant dense<0.000000e+00> : vector<48x16xf32>
    %183 = tpu.matmul %180, %182, %cst_120 {dimension_numbers = #tpu.dot_dimension_numbers<[1], [0], [0], [1], [0, 0, 1, 1], [], []>} : vector<48x8xbf16>, vector<8x16xbf16>, vector<48x16xf32> -> vector<48x16xf32>
    %184 = arith.addf %178, %183 : vector<48x16xf32>
    %c2_121 = arith.constant 2 : index
    %c0_122 = arith.constant 0 : index
    %c0_123 = arith.constant 0 : index
    %185 = vector.load %arg3[%c2_121, %c0_122, %c0_123] : memref<4x1x16xf32, #tpu.memory_space<vmem>>, vector<1x1x16xf32>
    %186 = vector.shape_cast %185 : vector<1x1x16xf32> to vector<1x16xf32>
    %187 = vector.broadcast %186 : vector<1x16xf32> to vector<48x16xf32>
    %188 = arith.addf %184, %187 : vector<48x16xf32>
    %cst_124 = arith.constant 0.000000e+00 : f32
    %189 = vector.broadcast %cst_124 : f32 to vector<48x16xf32>
    %190 = arith.cmpf oge, %188, %189 : vector<48x16xf32>
    %cst_125 = arith.constant 0.00999999977 : f32
    %191 = vector.broadcast %cst_125 : f32 to vector<48x16xf32>
    %192 = arith.mulf %191, %188 : vector<48x16xf32>
    %193 = arith.select %190, %188, %192 : vector<48x16xi1>, vector<48x16xf32>
    %194 = arith.truncf %193 : vector<48x16xf32> to vector<48x16xbf16>
    %195 = vector.shape_cast %194 : vector<48x16xbf16> to vector<2x24x16xbf16>
    %196 = vector.extract_strided_slice %195 {offsets = [0, 0, 0], sizes = [2, 16, 16], strides = [1, 1, 1]} : vector<2x24x16xbf16> to vector<2x16x16xbf16>
    %197 = vector.shape_cast %196 : vector<2x16x16xbf16> to vector<32x16xbf16>
    %c2_126 = arith.constant 2 : index
    %c0_127 = arith.constant 0 : index
    %c0_128 = arith.constant 0 : index
    %c0_129 = arith.constant 0 : index
    %198 = vector.load %arg4[%c2_126, %c0_127, %c0_128, %c0_129] : memref<4x3x16x8xbf16, #tpu.memory_space<vmem>>, vector<1x1x16x8xbf16>
    %199 = vector.shape_cast %198 : vector<1x1x16x8xbf16> to vector<16x8xbf16>
    %cst_130 = arith.constant dense<0.000000e+00> : vector<32x8xf32>
    %200 = tpu.matmul %197, %199, %cst_130 {dimension_numbers = #tpu.dot_dimension_numbers<[1], [0], [0], [1], [0, 0, 1, 1], [], []>} : vector<32x16xbf16>, vector<16x8xbf16>, vector<32x8xf32> -> vector<32x8xf32>
    %201 = vector.extract_strided_slice %195 {offsets = [0, 1, 0], sizes = [2, 16, 16], strides = [1, 1, 1]} : vector<2x24x16xbf16> to vector<2x16x16xbf16>
    %202 = vector.shape_cast %201 : vector<2x16x16xbf16> to vector<32x16xbf16>
    %c2_131 = arith.constant 2 : index
    %c1_132 = arith.constant 1 : index
    %c0_133 = arith.constant 0 : index
    %c0_134 = arith.constant 0 : index
    %203 = vector.load %arg4[%c2_131, %c1_132, %c0_133, %c0_134] : memref<4x3x16x8xbf16, #tpu.memory_space<vmem>>, vector<1x1x16x8xbf16>
    %204 = vector.shape_cast %203 : vector<1x1x16x8xbf16> to vector<16x8xbf16>
    %cst_135 = arith.constant dense<0.000000e+00> : vector<32x8xf32>
    %205 = tpu.matmul %202, %204, %cst_135 {dimension_numbers = #tpu.dot_dimension_numbers<[1], [0], [0], [1], [0, 0, 1, 1], [], []>} : vector<32x16xbf16>, vector<16x8xbf16>, vector<32x8xf32> -> vector<32x8xf32>
    %206 = arith.addf %200, %205 : vector<32x8xf32>
    %207 = vector.extract_strided_slice %195 {offsets = [0, 2, 0], sizes = [2, 16, 16], strides = [1, 1, 1]} : vector<2x24x16xbf16> to vector<2x16x16xbf16>
    %208 = vector.shape_cast %207 : vector<2x16x16xbf16> to vector<32x16xbf16>
    %c2_136 = arith.constant 2 : index
    %c2_137 = arith.constant 2 : index
    %c0_138 = arith.constant 0 : index
    %c0_139 = arith.constant 0 : index
    %209 = vector.load %arg4[%c2_136, %c2_137, %c0_138, %c0_139] : memref<4x3x16x8xbf16, #tpu.memory_space<vmem>>, vector<1x1x16x8xbf16>
    %210 = vector.shape_cast %209 : vector<1x1x16x8xbf16> to vector<16x8xbf16>
    %cst_140 = arith.constant dense<0.000000e+00> : vector<32x8xf32>
    %211 = tpu.matmul %208, %210, %cst_140 {dimension_numbers = #tpu.dot_dimension_numbers<[1], [0], [0], [1], [0, 0, 1, 1], [], []>} : vector<32x16xbf16>, vector<16x8xbf16>, vector<32x8xf32> -> vector<32x8xf32>
    %212 = arith.addf %206, %211 : vector<32x8xf32>
    %c2_141 = arith.constant 2 : index
    %c0_142 = arith.constant 0 : index
    %c0_143 = arith.constant 0 : index
    %213 = vector.load %arg5[%c2_141, %c0_142, %c0_143] : memref<4x1x8xf32, #tpu.memory_space<vmem>>, vector<1x1x8xf32>
    %214 = vector.shape_cast %213 : vector<1x1x8xf32> to vector<1x8xf32>
    %215 = vector.broadcast %214 : vector<1x8xf32> to vector<32x8xf32>
    %216 = arith.addf %212, %215 : vector<32x8xf32>
    %217 = math.tanh %216 : vector<32x8xf32>
    %218 = vector.shape_cast %217 : vector<32x8xf32> to vector<2x16x8xf32>
    %219 = arith.addf %147, %218 : vector<2x16x8xf32>
    %220 = arith.truncf %147 : vector<2x16x8xf32> to vector<2x16x8xbf16>
    %221 = vector.extract_strided_slice %220 {offsets = [0, 0, 0], sizes = [2, 1, 8], strides = [1, 1, 1]} : vector<2x16x8xbf16> to vector<2x1x8xbf16>
    %222 = vector.shape_cast %221 : vector<2x1x8xbf16> to vector<2x1x8xbf16>
    %223 = vector.broadcast %222 : vector<2x1x8xbf16> to vector<2x3x8xbf16>
    %224 = vector.extract_strided_slice %220 {offsets = [0, 15, 0], sizes = [2, 1, 8], strides = [1, 1, 1]} : vector<2x16x8xbf16> to vector<2x1x8xbf16>
    %225 = vector.shape_cast %224 : vector<2x1x8xbf16> to vector<2x1x8xbf16>
    %226 = vector.broadcast %225 : vector<2x1x8xbf16> to vector<2x13x8xbf16>
    %227 = tpu.concatenate %223, %220, %226 in 1 : vector<2x3x8xbf16>, vector<2x16x8xbf16>, vector<2x13x8xbf16> -> vector<2x32x8xbf16>
    %228 = vector.extract_strided_slice %227 {offsets = [0, 0, 0], sizes = [2, 24, 8], strides = [1, 1, 1]} : vector<2x32x8xbf16> to vector<2x24x8xbf16>
    %229 = vector.shape_cast %228 : vector<2x24x8xbf16> to vector<48x8xbf16>
    %c3_144 = arith.constant 3 : index
    %c0_145 = arith.constant 0 : index
    %c0_146 = arith.constant 0 : index
    %c0_147 = arith.constant 0 : index
    %230 = vector.load %arg2[%c3_144, %c0_145, %c0_146, %c0_147] : memref<4x5x8x16xbf16, #tpu.memory_space<vmem>>, vector<1x1x8x16xbf16>
    %231 = vector.shape_cast %230 : vector<1x1x8x16xbf16> to vector<8x16xbf16>
    %cst_148 = arith.constant dense<0.000000e+00> : vector<48x16xf32>
    %232 = tpu.matmul %229, %231, %cst_148 {dimension_numbers = #tpu.dot_dimension_numbers<[1], [0], [0], [1], [0, 0, 1, 1], [], []>} : vector<48x8xbf16>, vector<8x16xbf16>, vector<48x16xf32> -> vector<48x16xf32>
    %233 = vector.extract_strided_slice %227 {offsets = [0, 1, 0], sizes = [2, 24, 8], strides = [1, 1, 1]} : vector<2x32x8xbf16> to vector<2x24x8xbf16>
    %234 = vector.shape_cast %233 : vector<2x24x8xbf16> to vector<48x8xbf16>
    %c3_149 = arith.constant 3 : index
    %c1_150 = arith.constant 1 : index
    %c0_151 = arith.constant 0 : index
    %c0_152 = arith.constant 0 : index
    %235 = vector.load %arg2[%c3_149, %c1_150, %c0_151, %c0_152] : memref<4x5x8x16xbf16, #tpu.memory_space<vmem>>, vector<1x1x8x16xbf16>
    %236 = vector.shape_cast %235 : vector<1x1x8x16xbf16> to vector<8x16xbf16>
    %cst_153 = arith.constant dense<0.000000e+00> : vector<48x16xf32>
    %237 = tpu.matmul %234, %236, %cst_153 {dimension_numbers = #tpu.dot_dimension_numbers<[1], [0], [0], [1], [0, 0, 1, 1], [], []>} : vector<48x8xbf16>, vector<8x16xbf16>, vector<48x16xf32> -> vector<48x16xf32>
    %238 = arith.addf %232, %237 : vector<48x16xf32>
    %239 = vector.extract_strided_slice %227 {offsets = [0, 2, 0], sizes = [2, 24, 8], strides = [1, 1, 1]} : vector<2x32x8xbf16> to vector<2x24x8xbf16>
    %240 = vector.shape_cast %239 : vector<2x24x8xbf16> to vector<48x8xbf16>
    %c3_154 = arith.constant 3 : index
    %c2_155 = arith.constant 2 : index
    %c0_156 = arith.constant 0 : index
    %c0_157 = arith.constant 0 : index
    %241 = vector.load %arg2[%c3_154, %c2_155, %c0_156, %c0_157] : memref<4x5x8x16xbf16, #tpu.memory_space<vmem>>, vector<1x1x8x16xbf16>
    %242 = vector.shape_cast %241 : vector<1x1x8x16xbf16> to vector<8x16xbf16>
    %cst_158 = arith.constant dense<0.000000e+00> : vector<48x16xf32>
    %243 = tpu.matmul %240, %242, %cst_158 {dimension_numbers = #tpu.dot_dimension_numbers<[1], [0], [0], [1], [0, 0, 1, 1], [], []>} : vector<48x8xbf16>, vector<8x16xbf16>, vector<48x16xf32> -> vector<48x16xf32>
    %244 = arith.addf %238, %243 : vector<48x16xf32>
    %245 = vector.extract_strided_slice %227 {offsets = [0, 3, 0], sizes = [2, 24, 8], strides = [1, 1, 1]} : vector<2x32x8xbf16> to vector<2x24x8xbf16>
    %246 = vector.shape_cast %245 : vector<2x24x8xbf16> to vector<48x8xbf16>
    %c3_159 = arith.constant 3 : index
    %c3_160 = arith.constant 3 : index
    %c0_161 = arith.constant 0 : index
    %c0_162 = arith.constant 0 : index
    %247 = vector.load %arg2[%c3_159, %c3_160, %c0_161, %c0_162] : memref<4x5x8x16xbf16, #tpu.memory_space<vmem>>, vector<1x1x8x16xbf16>
    %248 = vector.shape_cast %247 : vector<1x1x8x16xbf16> to vector<8x16xbf16>
    %cst_163 = arith.constant dense<0.000000e+00> : vector<48x16xf32>
    %249 = tpu.matmul %246, %248, %cst_163 {dimension_numbers = #tpu.dot_dimension_numbers<[1], [0], [0], [1], [0, 0, 1, 1], [], []>} : vector<48x8xbf16>, vector<8x16xbf16>, vector<48x16xf32> -> vector<48x16xf32>
    %250 = arith.addf %244, %249 : vector<48x16xf32>
    %251 = vector.extract_strided_slice %227 {offsets = [0, 4, 0], sizes = [2, 24, 8], strides = [1, 1, 1]} : vector<2x32x8xbf16> to vector<2x24x8xbf16>
    %252 = vector.shape_cast %251 : vector<2x24x8xbf16> to vector<48x8xbf16>
    %c3_164 = arith.constant 3 : index
    %c4_165 = arith.constant 4 : index
    %c0_166 = arith.constant 0 : index
    %c0_167 = arith.constant 0 : index
    %253 = vector.load %arg2[%c3_164, %c4_165, %c0_166, %c0_167] : memref<4x5x8x16xbf16, #tpu.memory_space<vmem>>, vector<1x1x8x16xbf16>
    %254 = vector.shape_cast %253 : vector<1x1x8x16xbf16> to vector<8x16xbf16>
    %cst_168 = arith.constant dense<0.000000e+00> : vector<48x16xf32>
    %255 = tpu.matmul %252, %254, %cst_168 {dimension_numbers = #tpu.dot_dimension_numbers<[1], [0], [0], [1], [0, 0, 1, 1], [], []>} : vector<48x8xbf16>, vector<8x16xbf16>, vector<48x16xf32> -> vector<48x16xf32>
    %256 = arith.addf %250, %255 : vector<48x16xf32>
    %c3_169 = arith.constant 3 : index
    %c0_170 = arith.constant 0 : index
    %c0_171 = arith.constant 0 : index
    %257 = vector.load %arg3[%c3_169, %c0_170, %c0_171] : memref<4x1x16xf32, #tpu.memory_space<vmem>>, vector<1x1x16xf32>
    %258 = vector.shape_cast %257 : vector<1x1x16xf32> to vector<1x16xf32>
    %259 = vector.broadcast %258 : vector<1x16xf32> to vector<48x16xf32>
    %260 = arith.addf %256, %259 : vector<48x16xf32>
    %cst_172 = arith.constant 0.000000e+00 : f32
    %261 = vector.broadcast %cst_172 : f32 to vector<48x16xf32>
    %262 = arith.cmpf oge, %260, %261 : vector<48x16xf32>
    %cst_173 = arith.constant 0.00999999977 : f32
    %263 = vector.broadcast %cst_173 : f32 to vector<48x16xf32>
    %264 = arith.mulf %263, %260 : vector<48x16xf32>
    %265 = arith.select %262, %260, %264 : vector<48x16xi1>, vector<48x16xf32>
    %266 = arith.truncf %265 : vector<48x16xf32> to vector<48x16xbf16>
    %267 = vector.shape_cast %266 : vector<48x16xbf16> to vector<2x24x16xbf16>
    %268 = vector.extract_strided_slice %267 {offsets = [0, 0, 0], sizes = [2, 16, 16], strides = [1, 1, 1]} : vector<2x24x16xbf16> to vector<2x16x16xbf16>
    %269 = vector.shape_cast %268 : vector<2x16x16xbf16> to vector<32x16xbf16>
    %c3_174 = arith.constant 3 : index
    %c0_175 = arith.constant 0 : index
    %c0_176 = arith.constant 0 : index
    %c0_177 = arith.constant 0 : index
    %270 = vector.load %arg4[%c3_174, %c0_175, %c0_176, %c0_177] : memref<4x3x16x8xbf16, #tpu.memory_space<vmem>>, vector<1x1x16x8xbf16>
    %271 = vector.shape_cast %270 : vector<1x1x16x8xbf16> to vector<16x8xbf16>
    %cst_178 = arith.constant dense<0.000000e+00> : vector<32x8xf32>
    %272 = tpu.matmul %269, %271, %cst_178 {dimension_numbers = #tpu.dot_dimension_numbers<[1], [0], [0], [1], [0, 0, 1, 1], [], []>} : vector<32x16xbf16>, vector<16x8xbf16>, vector<32x8xf32> -> vector<32x8xf32>
    %273 = vector.extract_strided_slice %267 {offsets = [0, 1, 0], sizes = [2, 16, 16], strides = [1, 1, 1]} : vector<2x24x16xbf16> to vector<2x16x16xbf16>
    %274 = vector.shape_cast %273 : vector<2x16x16xbf16> to vector<32x16xbf16>
    %c3_179 = arith.constant 3 : index
    %c1_180 = arith.constant 1 : index
    %c0_181 = arith.constant 0 : index
    %c0_182 = arith.constant 0 : index
    %275 = vector.load %arg4[%c3_179, %c1_180, %c0_181, %c0_182] : memref<4x3x16x8xbf16, #tpu.memory_space<vmem>>, vector<1x1x16x8xbf16>
    %276 = vector.shape_cast %275 : vector<1x1x16x8xbf16> to vector<16x8xbf16>
    %cst_183 = arith.constant dense<0.000000e+00> : vector<32x8xf32>
    %277 = tpu.matmul %274, %276, %cst_183 {dimension_numbers = #tpu.dot_dimension_numbers<[1], [0], [0], [1], [0, 0, 1, 1], [], []>} : vector<32x16xbf16>, vector<16x8xbf16>, vector<32x8xf32> -> vector<32x8xf32>
    %278 = arith.addf %272, %277 : vector<32x8xf32>
    %279 = vector.extract_strided_slice %267 {offsets = [0, 2, 0], sizes = [2, 16, 16], strides = [1, 1, 1]} : vector<2x24x16xbf16> to vector<2x16x16xbf16>
    %280 = vector.shape_cast %279 : vector<2x16x16xbf16> to vector<32x16xbf16>
    %c3_184 = arith.constant 3 : index
    %c2_185 = arith.constant 2 : index
    %c0_186 = arith.constant 0 : index
    %c0_187 = arith.constant 0 : index
    %281 = vector.load %arg4[%c3_184, %c2_185, %c0_186, %c0_187] : memref<4x3x16x8xbf16, #tpu.memory_space<vmem>>, vector<1x1x16x8xbf16>
    %282 = vector.shape_cast %281 : vector<1x1x16x8xbf16> to vector<16x8xbf16>
    %cst_188 = arith.constant dense<0.000000e+00> : vector<32x8xf32>
    %283 = tpu.matmul %280, %282, %cst_188 {dimension_numbers = #tpu.dot_dimension_numbers<[1], [0], [0], [1], [0, 0, 1, 1], [], []>} : vector<32x16xbf16>, vector<16x8xbf16>, vector<32x8xf32> -> vector<32x8xf32>
    %284 = arith.addf %278, %283 : vector<32x8xf32>
    %c3_189 = arith.constant 3 : index
    %c0_190 = arith.constant 0 : index
    %c0_191 = arith.constant 0 : index
    %285 = vector.load %arg5[%c3_189, %c0_190, %c0_191] : memref<4x1x8xf32, #tpu.memory_space<vmem>>, vector<1x1x8xf32>
    %286 = vector.shape_cast %285 : vector<1x1x8xf32> to vector<1x8xf32>
    %287 = vector.broadcast %286 : vector<1x8xf32> to vector<32x8xf32>
    %288 = arith.addf %284, %287 : vector<32x8xf32>
    %289 = math.tanh %288 : vector<32x8xf32>
    %290 = vector.shape_cast %289 : vector<32x8xf32> to vector<2x16x8xf32>
    %291 = arith.subf %74, %290 : vector<2x16x8xf32>
    %c0_192 = arith.constant 0 : index
    %c0_193 = arith.constant 0 : index
    %292 = vector.load %arg6[%c0_192, %c0_193] : memref<1x8xf32, #tpu.memory_space<vmem>>, vector<1x8xf32>
    %293 = vector.shape_cast %292 : vector<1x8xf32> to vector<1x1x8xf32>
    %294 = vector.broadcast %293 : vector<1x1x8xf32> to vector<2x16x8xf32>
    %295 = arith.mulf %219, %294 : vector<2x16x8xf32>
    %c0_194 = arith.constant 0 : index
    %c0_195 = arith.constant 0 : index
    %296 = vector.load %arg7[%c0_194, %c0_195] : memref<1x8xf32, #tpu.memory_space<vmem>>, vector<1x8xf32>
    %297 = vector.shape_cast %296 : vector<1x8xf32> to vector<1x1x8xf32>
    %298 = vector.broadcast %297 : vector<1x1x8xf32> to vector<2x16x8xf32>
    %299 = arith.addf %295, %298 : vector<2x16x8xf32>
    %cst_196 = arith.constant 0.000000e+00 : f32
    %300 = vector.broadcast %cst_196 : f32 to vector<2x16x8xf32>
    %301 = arith.maximumf %299, %300 : vector<2x16x8xf32>
    %302 = vector.shape_cast %301 : vector<2x16x8xf32> to vector<32x8xf32>
    %303 = arith.truncf %302 : vector<32x8xf32> to vector<32x8xbf16>
    %c0_197 = arith.constant 0 : index
    %c0_198 = arith.constant 0 : index
    %304 = vector.load %arg8[%c0_197, %c0_198] : memref<8x8xbf16, #tpu.memory_space<vmem>>, vector<8x8xbf16>
    %cst_199 = arith.constant dense<0.000000e+00> : vector<32x8xf32>
    %305 = tpu.matmul %303, %304, %cst_199 {dimension_numbers = #tpu.dot_dimension_numbers<[1], [0], [0], [1], [0, 0, 1, 1], [], []>} : vector<32x8xbf16>, vector<8x8xbf16>, vector<32x8xf32> -> vector<32x8xf32>
    %306 = vector.shape_cast %305 : vector<32x8xf32> to vector<2x16x8xf32>
    %c0_200 = arith.constant 0 : index
    %c0_201 = arith.constant 0 : index
    %c0_202 = arith.constant 0 : index
    %307 = vector.load %arg9[%c0_200, %c0_201, %c0_202] : memref<2x16x8xf32, #tpu.memory_space<vmem>>, vector<2x16x8xf32>
    tpu.vector_store %arg9[%c0_200, %c0_201, %c0_202], %306 {strides = array<i32>} : memref<2x16x8xf32, #tpu.memory_space<vmem>>, vector<2x16x8xf32>,
    %308 = tpu.transpose %291, [0, 2, 1] : vector<2x16x8xf32> -> vector<2x8x16xf32>
    %c0_203 = arith.constant 0 : index
    %c0_204 = arith.constant 0 : index
    %c0_205 = arith.constant 0 : index
    %309 = vector.load %arg10[%c0_203, %c0_204, %c0_205] : memref<2x8x16xf32, #tpu.memory_space<vmem>>, vector<2x8x16xf32>
    tpu.vector_store %arg10[%c0_203, %c0_204, %c0_205], %308 {strides = array<i32>} : memref<2x8x16xf32, #tpu.memory_space<vmem>>, vector<2x8x16xf32>,
    return
  }
  func.func @transform_0(%arg0: i32) -> (i32, i32, i32) {
    %c0_i32 = arith.constant 0 : i32
    %c0_i32_0 = arith.constant 0 : i32
    %c0_i32_1 = arith.constant 0 : i32
    return %arg0, %c0_i32, %c0_i32_0 : i32, i32, i32
  }
  func.func @transform_1(%arg0: i32) -> (i32, i32, i32, i32) {
    %c0_i32 = arith.constant 0 : i32
    %c0_i32_0 = arith.constant 0 : i32
    %c0_i32_1 = arith.constant 0 : i32
    %c0_i32_2 = arith.constant 0 : i32
    %c0_i32_3 = arith.constant 0 : i32
    return %c0_i32, %c0_i32_0, %c0_i32_1, %c0_i32_2 : i32, i32, i32, i32
  }
  func.func @transform_2(%arg0: i32) -> (i32, i32, i32) {
    %c0_i32 = arith.constant 0 : i32
    %c0_i32_0 = arith.constant 0 : i32
    %c0_i32_1 = arith.constant 0 : i32
    %c0_i32_2 = arith.constant 0 : i32
    return %c0_i32, %c0_i32_0, %c0_i32_1 : i32, i32, i32
  }
  func.func @transform_3(%arg0: i32) -> (i32, i32, i32, i32) {
    %c0_i32 = arith.constant 0 : i32
    %c0_i32_0 = arith.constant 0 : i32
    %c0_i32_1 = arith.constant 0 : i32
    %c0_i32_2 = arith.constant 0 : i32
    %c0_i32_3 = arith.constant 0 : i32
    return %c0_i32, %c0_i32_0, %c0_i32_1, %c0_i32_2 : i32, i32, i32, i32
  }
  func.func @transform_4(%arg0: i32) -> (i32, i32, i32) {
    %c0_i32 = arith.constant 0 : i32
    %c0_i32_0 = arith.constant 0 : i32
    %c0_i32_1 = arith.constant 0 : i32
    %c0_i32_2 = arith.constant 0 : i32
    return %c0_i32, %c0_i32_0, %c0_i32_1 : i32, i32, i32
  }
  func.func @transform_5(%arg0: i32) -> (i32, i32) {
    %c0_i32 = arith.constant 0 : i32
    %c0_i32_0 = arith.constant 0 : i32
    %c0_i32_1 = arith.constant 0 : i32
    return %c0_i32, %c0_i32_0 : i32, i32
  }
  func.func @transform_6(%arg0: i32) -> (i32, i32) {
    %c0_i32 = arith.constant 0 : i32
    %c0_i32_0 = arith.constant 0 : i32
    %c0_i32_1 = arith.constant 0 : i32
    return %c0_i32, %c0_i32_0 : i32, i32
  }
  func.func @transform_7(%arg0: i32) -> (i32, i32) {
    %c0_i32 = arith.constant 0 : i32
    %c0_i32_0 = arith.constant 0 : i32
    %c0_i32_1 = arith.constant 0 : i32
    return %c0_i32, %c0_i32_0 : i32, i32
  }
  func.func @transform_8(%arg0: i32) -> (i32, i32, i32) {
    %c0_i32 = arith.constant 0 : i32
    %c0_i32_0 = arith.constant 0 : i32
    %c0_i32_1 = arith.constant 0 : i32
    return %arg0, %c0_i32, %c0_i32_0 : i32, i32, i32
  }
  func.func @transform_9(%arg0: i32) -> (i32, i32, i32) {
    %c0_i32 = arith.constant 0 : i32
    %c0_i32_0 = arith.constant 0 : i32
    %c0_i32_1 = arith.constant 0 : i32
    return %arg0, %c0_i32, %c0_i32_0 : i32, i32, i32
  }
}

</mosaic_0001>

<llo_original>
// kernel: level_idcn_forward.1
$region0: #{level_idcn_forward.1}
  #allocation0 [shape = 'u32[]', space=smem, size = 0x4, offset = 0x4, fixed_abs, tag = 'smem constant byte address 0x4 - core index']
  #allocation1 [shape = 'u32[144,128]{1,0:T(1,128)}', space=vmem, size = 0x12000, scoped, tag = 'internal scratch']
  %s0 = inlined_call_operand.vmem [shape: f32[2,32,8], index: 0, kind: input, shape index: {}]
  %s1 = inlined_call_operand.vmem [shape: bf16[4,5,8,16], index: 1, kind: input, shape index: {}]
  %s2 = inlined_call_operand.vmem [shape: f32[4,1,16], index: 2, kind: input, shape index: {}]
  %s3 = inlined_call_operand.vmem [shape: bf16[4,3,16,8], index: 3, kind: input, shape index: {}]
  %s4 = inlined_call_operand.vmem [shape: f32[4,1,8], index: 4, kind: input, shape index: {}]
  %s5 = inlined_call_operand.vmem [shape: f32[1,8], index: 5, kind: input, shape index: {}]
  %s6 = inlined_call_operand.vmem [shape: f32[1,8], index: 6, kind: input, shape index: {}]
  %s7 = inlined_call_operand.vmem [shape: bf16[8,8], index: 7, kind: input, shape index: {}]
  %s8 = inlined_call_operand.vmem [shape: f32[2,16,8], index: 8, kind: output, shape index: {0}]
  %s9 = inlined_call_operand.hbm [shape: f32[2,8,16], index: 9, kind: output, shape index: {1}]
  %10 = xla_tuple %s8, %s9
  %s11 = sld [smem:[#allocation0]]
  $region50: #{level_idcn_forward.1} parent=0
    _
  %s13 = ssub.s32 1, %s11
  %s14 = scalar_select 0, %s13, %s11
  $region1: #{level_idcn_forward.1} parent=0
    #allocation2 [shape = 'u8[8192]{0}', space=vmem, size = 0x2000, scoped, tag = 'output window, operand 1, single buffered']
    #allocation3 [shape = 's32[1]{0}', space=sflag, size = 0x4, scoped, tag = 'scoped memory for level_idcn_forward.1']
    %15 = vsyncpa [#allocation3], 0
    // Predicated region
    $region2: #{level_idcn_forward.1} parent=1 // pred_check
      _
    $region3: #{level_idcn_forward.1} parent=1 // pred_check_branch
      %17 = sbr.rel (0) target = $region5
    $region4: #{level_idcn_forward.1} parent=1 // pred_region
      _
    $region5: #{level_idcn_forward.1} parent=1 // pred_fallthru
      _
    // Predicated region
    $region6: #{level_idcn_forward.1} parent=1 // pred_check
      _
    $region7: #{level_idcn_forward.1} parent=1 // pred_check_branch
      %19 = sbr.rel (0) target = $region9
    $region8: #{level_idcn_forward.1} parent=1 // pred_region
      _
    $region9: #{level_idcn_forward.1} parent=1 // pred_fallthru
      _
    // Predicated region
    $region10: #{level_idcn_forward.1} parent=1 // pred_check
      _
    $region11: #{level_idcn_forward.1} parent=1 // pred_check_branch
      %21 = sbr.rel (0) target = $region13
    $region12: #{level_idcn_forward.1} parent=1 // pred_region
      _
    $region13: #{level_idcn_forward.1} parent=1 // pred_fallthru
      _
    // Predicated region
    $region14: #{level_idcn_forward.1} parent=1 // pred_check
      _
    $region15: #{level_idcn_forward.1} parent=1 // pred_check_branch
      %23 = sbr.rel (0) target = $region17
    $region16: #{level_idcn_forward.1} parent=1 // pred_region
      _
    $region17: #{level_idcn_forward.1} parent=1 // pred_fallthru
      _
    // Predicated region
    $region18: #{level_idcn_forward.1} parent=1 // pred_check
      _
    $region19: #{level_idcn_forward.1} parent=1 // pred_check_branch
      %25 = sbr.rel (0) target = $region21
    $region20: #{level_idcn_forward.1} parent=1 // pred_region
      _
    $region21: #{level_idcn_forward.1} parent=1 // pred_fallthru
      _
    // Predicated region
    $region22: #{level_idcn_forward.1} parent=1 // pred_check
      _
    $region23: #{level_idcn_forward.1} parent=1 // pred_check_branch
      %27 = sbr.rel (0) target = $region25
    $region24: #{level_idcn_forward.1} parent=1 // pred_region
      _
    $region25: #{level_idcn_forward.1} parent=1 // pred_fallthru
      _
    // Predicated region
    $region26: #{level_idcn_forward.1} parent=1 // pred_check
      _
    $region27: #{level_idcn_forward.1} parent=1 // pred_check_branch
      %29 = sbr.rel (0) target = $region29
    $region28: #{level_idcn_forward.1} parent=1 // pred_region
      _
    $region29: #{level_idcn_forward.1} parent=1 // pred_fallthru
      _
    // Predicated region
    $region30: #{level_idcn_forward.1} parent=1 // pred_check
      _
    $region31: #{level_idcn_forward.1} parent=1 // pred_check_branch
      %31 = sbr.rel (0) target = $region33
    $region32: #{level_idcn_forward.1} parent=1 // pred_region
      _
    $region33: #{level_idcn_forward.1} parent=1 // pred_fallthru
      _
    %v33 = vld [vmem:[%s0] ss:$2 sm:$0xff]
    %s34 = scalar_lea.vmem %s0, 16
    %v35 = vld [vmem:[%s34] ss:$2 sm:$0xff]
    %s36 = scalar_lea.vmem %s0, 32
    %v37 = vld [vmem:[%s36] ss:$2 sm:$0xff]
    %s38 = scalar_lea.vmem %s0, 48
    %v39 = vld [vmem:[%s38] ss:$2 sm:$0xff]
    %s40 = scalar_lea.vmem %s0, 1
    %v41 = vld [vmem:[%s40] ss:$2 sm:$0xff]
    %s42 = scalar_lea.vmem %s0, 17
    %v43 = vld [vmem:[%s42] ss:$2 sm:$0xff]
    %s44 = scalar_lea.vmem %s0, 33
    %v45 = vld [vmem:[%s44] ss:$2 sm:$0xff]
    %s46 = scalar_lea.vmem %s0, 49
    %v47 = vld [vmem:[%s46] ss:$2 sm:$0xff]
    %v48 = vpack.c.bf16 %v35, %v33
    %v49 = vpack.c.bf16 %v39, %v37
    %v51 = vpack.i.b16 %v48, %v48
    %v53 = vlaneseq
    %v54 = vshrl.u32 %v53, 7
    %v55 = vsub.s32 0, %v54
    %v56 = vrot.slane %v51, %v55
    %v58 = vpack.i.b16 %v49, %v49
    %v60 = vlaneseq
    %v61 = vshrl.u32 %v60, 7
    %v62 = vsub.s32 0, %v61
    %v63 = vrot.slane %v58, %v62
    %v64 = vshrl.u32 %v48, 16
    %v65 = vpack.i.b16 %v64, %v64
    %v67 = vlaneseq
    %v68 = vshrl.u32 %v67, 7
    %v69 = vsub.s32 7, %v68
    %v70 = vrot.slane %v65, %v69
    %v71 = vshrl.u32 %v49, 16
    %v72 = vpack.i.b16 %v71, %v71
    %v74 = vlaneseq
    %v75 = vshrl.u32 %v74, 7
    %v76 = vsub.s32 7, %v75
    %v77 = vrot.slane %v72, %v76
    %v79 = vrot.slane %v64, 6
    %v80 = vshll.u32 %v48, 16
    %v82 = vrot.slane %v80, 7
    %v83 = vor.u32 %v79, %v82
    %v85 = vrot.slane %v71, 6
    %v86 = vshll.u32 %v49, 16
    %v88 = vrot.slane %v86, 7
    %v89 = vor.u32 %v85, %v88
    %vm92 = vcmask 1041408
    %vm93 = vsmask.f32 1280
    %vm94 = vmand %vm92, %vm93
    %v95 = vsel %vm94, %v56, %v83
    %v96 = vsel %vm94, %v63, %v89
    %v97 = vsel %vm94, %v83, %v70
    %v98 = vsel %vm94, %v89, %v77
    %v103 = vunpack.c.l.b16 %v95
    %v104 = vunpack.c.h.b16 %v95
    %v105 = vunpack.c.l.b16 %v97
    %v106 = vunpack.c.l.b16 %v96
    %v107 = vunpack.c.h.b16 %v96
    %v108 = vunpack.c.l.b16 %v98
    %v109 = vld [vmem:[%s1] sm:$0xf]
    %v110 = vunpack.c.h.b16 %v97
    %v111 = vunpack.c.h.b16 %v98
    %v112 = vpack.c.b16 %v103, %v103
    %v113 = vpack.c.b16 %v104, %v104
    %v114 = vpack.c.b16 %v105, %v105
    %v115 = vpack.c.b16 %v110, %v110
    %v116 = vpack.c.b16 %v106, %v106
    %v117 = vpack.c.b16 %v107, %v107
    %v118 = vpack.c.b16 %v108, %v108
    %v119 = vpack.c.b16 %v111, %v111
    %vm120 = vsmask.f32 3328
    %vm121 = vsmask.f32 7440
    %vm122 = vmor %vm120, %vm121
    %v124 = vshrl.u32 %v112, 16
    %v126 = vrot.slane %v124, 4
    %v127 = vshll.u32 %v112, 16
    %v129 = vrot.slane %v127, 5
    %v130 = vor.u32 %v126, %v129
    %v131 = vrot.slane %v130, 4
    %v133 = vshll.u32 %v113, 16
    %v135 = vrot.slane %v133, 5
    %v136 = vsel %vm122, %v131, %v135
    %v137 = vshrl.u32 %v113, 16
    %v139 = vrot.slane %v137, 4
    %v140 = vor.u32 %v139, %v135
    %v141 = vrot.slane %v140, 4
    %v143 = vshll.u32 %v114, 16
    %v145 = vrot.slane %v143, 5
    %v146 = vsel %vm122, %v141, %v145
    %v147 = vshrl.u32 %v114, 16
    %v149 = vrot.slane %v147, 4
    %v150 = vor.u32 %v149, %v145
    %v151 = vrot.slane %v150, 4
    %v153 = vshll.u32 %v115, 16
    %v155 = vrot.slane %v153, 5
    %v156 = vsel %vm122, %v151, %v155
    %v158 = vshrl.u32 %v116, 16
    %v160 = vrot.slane %v158, 4
    %v161 = vshll.u32 %v116, 16
    %v163 = vrot.slane %v161, 5
    %v164 = vor.u32 %v160, %v163
    %v165 = vrot.slane %v164, 4
    %v167 = vshll.u32 %v117, 16
    %v169 = vrot.slane %v167, 5
    %v170 = vsel %vm122, %v165, %v169
    %v171 = vshrl.u32 %v117, 16
    %v173 = vrot.slane %v171, 4
    %v174 = vor.u32 %v173, %v169
    %v175 = vrot.slane %v174, 4
    %v177 = vshll.u32 %v118, 16
    %v179 = vrot.slane %v177, 5
    %v180 = vsel %vm122, %v175, %v179
    %v181 = vshrl.u32 %v118, 16
    %v183 = vrot.slane %v181, 4
    %v184 = vor.u32 %v183, %v179
    %v185 = vrot.slane %v184, 4
    %v187 = vshll.u32 %v119, 16
    %v189 = vrot.slane %v187, 5
    %v190 = vsel %vm122, %v185, %v189
    %s191 = scalar_lea.vmem %s1, 4
    %v192 = vld [vmem:[%s191] sm:$0xf]
    %v193 = vunpack.c.l.b16 %v136
    %v194 = vunpack.c.l.b16 %v146
    %v195 = vunpack.c.l.b16 %v156
    %v196 = vunpack.c.l.b16 %v170
    %v197 = vunpack.c.l.b16 %v180
    %v198 = vunpack.c.l.b16 %v190
    %v199 = vpack.c.b16 %v194, %v193
    %v200 = vpack.c.b16 %v196, %v195
    %v201 = vpack.c.b16 %v198, %v197
    %vm202 = vcmask 64512
    %v204 = vsel %vm202, %v199, 0
    %v207 = vsel %vm202, %v200, 0
    %v210 = vsel %vm202, %v201, 0
    %vm212 = vcmask 1043456
    %v214 = vsel %vm212, %v192, 0
    %216 = vmatprep.subr.bf16.mxu0 0
    %217 = vmatpush1.bf16.msra.mxu0 %v214
    %218 = vmatprep.subr.bf16.mxu0 0
    %219 = vmatpush1.bf16.msra.mxu0 0
    %220 = vmatprep.subr.bf16.mxu0 0
    %221 = vmatpush1.bf16.msra.mxu0 0
    %222 = vmatprep.subr.bf16.mxu0 0
    %223 = vmatpush1.bf16.msra.mxu0 0
    %224 = vmatprep.subr.bf16.mxu0 0
    %225 = vmatpush1.bf16.msra.mxu0 0
    %226 = vmatprep.subr.bf16.mxu0 0
    %227 = vmatpush1.bf16.msra.mxu0 0
    %228 = vmatprep.subr.bf16.mxu0 0
    %229 = vmatpush1.bf16.msra.mxu0 0
    %230 = vmatprep.subr.bf16.mxu0 0
    %231 = vmatpush1.bf16.msra.mxu0 0
    %232 = vmatprep.subr.bf16.mxu0 0
    %233 = vmatpush1.bf16.msra.mxu0 0
    %234 = vmatprep.subr.bf16.mxu0 0
    %235 = vmatpush1.bf16.msra.mxu0 0
    %236 = vmatprep.subr.bf16.mxu0 0
    %237 = vmatpush1.bf16.msra.mxu0 0
    %238 = vmatprep.subr.bf16.mxu0 0
    %239 = vmatpush1.bf16.msra.mxu0 0
    %240 = vmatprep.subr.bf16.mxu0 0
    %241 = vmatpush1.bf16.msra.mxu0 0
    %242 = vmatprep.subr.bf16.mxu0 0
    %243 = vmatpush1.bf16.msra.mxu0 0
    %244 = vmatprep.subr.bf16.mxu0 0
    %245 = vmatpush1.bf16.msra.mxu0 0
    %246 = vmatprep.subr.bf16.mxu0 0
    %247 = vmatpush1.bf16.msra.mxu0 0
    %248 = vmatprep.mubr.bf16.mxu0 0
    %249 = vmatmul.mubr.bf16.gmra.mrb[0].mxu0 %v204
    %v250 = vpop.f32.mrb[0].mxu0
    %v251 = vadd.f32 0.0, %v250
    %v252 = vpop.f32.mrb[0].mxu0
    %v253 = vpop.f32.mrb[0].mxu0
    %v254 = vadd.f32 0.0, %v253
    %v255 = vpop.f32.mrb[0].mxu0
    %256 = vmatprep.mubr.bf16.mxu0 0
    %257 = vmatmul.mubr.bf16.gmra.mrb[0].mxu0 %v207
    %v258 = vpop.f32.mrb[0].mxu0
    %v259 = vadd.f32 0.0, %v258
    %v260 = vpop.f32.mrb[0].mxu0
    %v261 = vpop.f32.mrb[0].mxu0
    %v262 = vadd.f32 0.0, %v261
    %v263 = vpop.f32.mrb[0].mxu0
    %264 = vmatprep.mubr.bf16.mxu0 0
    %265 = vmatmul.mubr.bf16.gmra.mrb[0].mxu0 %v210
    %v266 = vpop.f32.mrb[0].mxu0
    %v267 = vadd.f32 0.0, %v266
    %v268 = vpop.f32.mrb[0].mxu0
    %v269 = vpop.f32.mrb[0].mxu0
    %v270 = vadd.f32 0.0, %v269
    %v271 = vpop.f32.mrb[0].mxu0
    %272 = vdwg.mxu0
    %v273 = vpack.c.b16 %v104, %v103
    %v274 = vpack.c.b16 %v106, %v105
    %v275 = vpack.c.b16 %v108, %v107
    %v277 = vsel %vm202, %v273, 0
    %v280 = vsel %vm202, %v274, 0
    %v283 = vsel %vm202, %v275, 0
    %v286 = vsel %vm212, %v109, 0
    %288 = vmatprep.subr.bf16.mxu0 0
    %289 = vmatpush1.bf16.msra.mxu0 %v286
    %290 = vmatprep.subr.bf16.mxu0 0
    %291 = vmatpush1.bf16.msra.mxu0 0
    %292 = vmatprep.subr.bf16.mxu0 0
    %293 = vmatpush1.bf16.msra.mxu0 0
    %294 = vmatprep.subr.bf16.mxu0 0
    %295 = vmatpush1.bf16.msra.mxu0 0
    %296 = vmatprep.subr.bf16.mxu0 0
    %297 = vmatpush1.bf16.msra.mxu0 0
    %298 = vmatprep.subr.bf16.mxu0 0
    %299 = vmatpush1.bf16.msra.mxu0 0
    %300 = vmatprep.subr.bf16.mxu0 0
    %301 = vmatpush1.bf16.msra.mxu0 0
    %302 = vmatprep.subr.bf16.mxu0 0
    %303 = vmatpush1.bf16.msra.mxu0 0
    %304 = vmatprep.subr.bf16.mxu0 0
    %305 = vmatpush1.bf16.msra.mxu0 0
    %306 = vmatprep.subr.bf16.mxu0 0
    %307 = vmatpush1.bf16.msra.mxu0 0
    %308 = vmatprep.subr.bf16.mxu0 0
    %309 = vmatpush1.bf16.msra.mxu0 0
    %310 = vmatprep.subr.bf16.mxu0 0
    %311 = vmatpush1.bf16.msra.mxu0 0
    %312 = vmatprep.subr.bf16.mxu0 0
    %313 = vmatpush1.bf16.msra.mxu0 0
    %314 = vmatprep.subr.bf16.mxu0 0
    %315 = vmatpush1.bf16.msra.mxu0 0
    %316 = vmatprep.subr.bf16.mxu0 0
    %317 = vmatpush1.bf16.msra.mxu0 0
    %318 = vmatprep.subr.bf16.mxu0 0
    %319 = vmatpush1.bf16.msra.mxu0 0
    %320 = vmatprep.mubr.bf16.mxu0 0
    %321 = vmatmul.mubr.bf16.gmra.mrb[0].mxu0 %v277
    %v322 = vpop.f32.mrb[0].mxu0
    %v323 = vadd.f32 %v251, %v322
    %v324 = vpop.f32.mrb[0].mxu0
    %v325 = vpop.f32.mrb[0].mxu0
    %v326 = vadd.f32 %v254, %v325
    %v327 = vpop.f32.mrb[0].mxu0
    %328 = vmatprep.mubr.bf16.mxu0 0
    %329 = vmatmul.mubr.bf16.gmra.mrb[0].mxu0 %v280
    %v330 = vpop.f32.mrb[0].mxu0
    %v331 = vadd.f32 %v259, %v330
    %v332 = vpop.f32.mrb[0].mxu0
    %v333 = vpop.f32.mrb[0].mxu0
    %v334 = vadd.f32 %v262, %v333
    %v335 = vpop.f32.mrb[0].mxu0
    %336 = vmatprep.mubr.bf16.mxu0 0
    %337 = vmatmul.mubr.bf16.gmra.mrb[0].mxu0 %v283
    %v338 = vpop.f32.mrb[0].mxu0
    %v339 = vadd.f32 %v267, %v338
    %v340 = vpop.f32.mrb[0].mxu0
    %v341 = vpop.f32.mrb[0].mxu0
    %v342 = vadd.f32 %v270, %v341
    %v343 = vpop.f32.mrb[0].mxu0
    %344 = vdwg.mxu0
    %vm345 = vcmask 1042432
    %vm346 = vcmask 1046532
    %vm347 = vmor %vm345, %vm346
    %v348 = vrot.slane %v112, 5
    %v349 = vrot.slane %v348, 4
    %v350 = vrot.slane %v113, 5
    %v351 = vsel %vm347, %v349, %v350
    %v352 = vrot.slane %v350, 4
    %v353 = vrot.slane %v114, 5
    %v354 = vsel %vm347, %v352, %v353
    %v355 = vrot.slane %v353, 4
    %v356 = vrot.slane %v115, 5
    %v357 = vsel %vm347, %v355, %v356
    %v358 = vrot.slane %v116, 5
    %v359 = vrot.slane %v358, 4
    %v360 = vrot.slane %v117, 5
    %v361 = vsel %vm347, %v359, %v360
    %v362 = vrot.slane %v360, 4
    %v363 = vrot.slane %v118, 5
    %v364 = vsel %vm347, %v362, %v363
    %v365 = vrot.slane %v363, 4
    %v366 = vrot.slane %v119, 5
    %v367 = vsel %vm347, %v365, %v366
    %s368 = scalar_lea.vmem %s1, 8
    %v369 = vld [vmem:[%s368] sm:$0xf]
    %v370 = vunpack.c.l.b16 %v351
    %v371 = vunpack.c.l.b16 %v354
    %v372 = vunpack.c.l.b16 %v357
    %v373 = vunpack.c.l.b16 %v361
    %v374 = vunpack.c.l.b16 %v364
    %v375 = vunpack.c.l.b16 %v367
    %v376 = vpack.c.b16 %v371, %v370
    %v377 = vpack.c.b16 %v373, %v372
    %v378 = vpack.c.b16 %v375, %v374
    %v380 = vsel %vm202, %v376, 0
    %v383 = vsel %vm202, %v377, 0
    %v386 = vsel %vm202, %v378, 0
    %v389 = vsel %vm212, %v369, 0
    %391 = vmatprep.subr.bf16.mxu0 0
    %392 = vmatpush1.bf16.msra.mxu0 %v389
    %393 = vmatprep.subr.bf16.mxu0 0
    %394 = vmatpush1.bf16.msra.mxu0 0
    %395 = vmatprep.subr.bf16.mxu0 0
    %396 = vmatpush1.bf16.msra.mxu0 0
    %397 = vmatprep.subr.bf16.mxu0 0
    %398 = vmatpush1.bf16.msra.mxu0 0
    %399 = vmatprep.subr.bf16.mxu0 0
    %400 = vmatpush1.bf16.msra.mxu0 0
    %401 = vmatprep.subr.bf16.mxu0 0
    %402 = vmatpush1.bf16.msra.mxu0 0
    %403 = vmatprep.subr.bf16.mxu0 0
    %404 = vmatpush1.bf16.msra.mxu0 0
    %405 = vmatprep.subr.bf16.mxu0 0
    %406 = vmatpush1.bf16.msra.mxu0 0
    %407 = vmatprep.subr.bf16.mxu0 0
    %408 = vmatpush1.bf16.msra.mxu0 0
    %409 = vmatprep.subr.bf16.mxu0 0
    %410 = vmatpush1.bf16.msra.mxu0 0
    %411 = vmatprep.subr.bf16.mxu0 0
    %412 = vmatpush1.bf16.msra.mxu0 0
    %413 = vmatprep.subr.bf16.mxu0 0
    %414 = vmatpush1.bf16.msra.mxu0 0
    %415 = vmatprep.subr.bf16.mxu0 0
    %416 = vmatpush1.bf16.msra.mxu0 0
    %417 = vmatprep.subr.bf16.mxu0 0
    %418 = vmatpush1.bf16.msra.mxu0 0
    %419 = vmatprep.subr.bf16.mxu0 0
    %420 = vmatpush1.bf16.msra.mxu0 0
    %421 = vmatprep.subr.bf16.mxu0 0
    %422 = vmatpush1.bf16.msra.mxu0 0
    %423 = vmatprep.mubr.bf16.mxu0 0
    %424 = vmatmul.mubr.bf16.gmra.mrb[0].mxu0 %v380
    %v425 = vpop.f32.mrb[0].mxu0
    %v426 = vadd.f32 0.0, %v425
    %v427 = vpop.f32.mrb[0].mxu0
    %v428 = vpop.f32.mrb[0].mxu0
    %v429 = vadd.f32 0.0, %v428
    %v430 = vpop.f32.mrb[0].mxu0
    %431 = vmatprep.mubr.bf16.mxu0 0
    %432 = vmatmul.mubr.bf16.gmra.mrb[0].mxu0 %v383
    %v433 = vpop.f32.mrb[0].mxu0
    %v434 = vadd.f32 0.0, %v433
    %v435 = vpop.f32.mrb[0].mxu0
    %v436 = vpop.f32.mrb[0].mxu0
    %v437 = vadd.f32 0.0, %v436
    %v438 = vpop.f32.mrb[0].mxu0
    %439 = vmatprep.mubr.bf16.mxu0 0
    %440 = vmatmul.mubr.bf16.gmra.mrb[0].mxu0 %v386
    %v441 = vpop.f32.mrb[0].mxu0
    %v442 = vadd.f32 0.0, %v441
    %v443 = vpop.f32.mrb[0].mxu0
    %v444 = vpop.f32.mrb[0].mxu0
    %v445 = vadd.f32 0.0, %v444
    %v446 = vpop.f32.mrb[0].mxu0
    %447 = vdwg.mxu0
    %v448 = vadd.f32 %v323, %v426
    %v449 = vadd.f32 %v326, %v429
    %v450 = vadd.f32 %v331, %v434
    %v451 = vadd.f32 %v334, %v437
    %v452 = vadd.f32 %v339, %v442
    %v453 = vadd.f32 %v342, %v445
    %vm454 = vsmask.f32 2304
    %vm455 = vsmask.f32 6416
    %vm456 = vmor %vm454, %vm455
    %v457 = vrot.slane %v124, 5
    %v458 = vrot.slane %v127, 6
    %v459 = vor.u32 %v457, %v458
    %v460 = vrot.slane %v459, 4
    %v461 = vrot.slane %v137, 5
    %v462 = vrot.slane %v133, 6
    %v463 = vor.u32 %v461, %v462
    %v464 = vsel %vm456, %v460, %v463
    %v465 = vrot.slane %v463, 4
    %v466 = vrot.slane %v147, 5
    %v467 = vrot.slane %v143, 6
    %v468 = vor.u32 %v466, %v467
    %v469 = vsel %vm456, %v465, %v468
    %v470 = vrot.slane %v468, 4
    %v471 = vshrl.u32 %v115, 16
    %v473 = vrot.slane %v471, 5
    %v474 = vrot.slane %v153, 6
    %v475 = vor.u32 %v473, %v474
    %v476 = vsel %vm456, %v470, %v475
    %v477 = vrot.slane %v158, 5
    %v478 = vrot.slane %v161, 6
    %v479 = vor.u32 %v477, %v478
    %v480 = vrot.slane %v479, 4
    %v481 = vrot.slane %v171, 5
    %v482 = vrot.slane %v167, 6
    %v483 = vor.u32 %v481, %v482
    %v484 = vsel %vm456, %v480, %v483
    %v485 = vrot.slane %v483, 4
    %v486 = vrot.slane %v181, 5
    %v487 = vrot.slane %v177, 6
    %v488 = vor.u32 %v486, %v487
    %v489 = vsel %vm456, %v485, %v488
    %v490 = vrot.slane %v488, 4
    %v491 = vshrl.u32 %v119, 16
    %v493 = vrot.slane %v491, 5
    %v494 = vrot.slane %v187, 6
    %v495 = vor.u32 %v493, %v494
    %v496 = vsel %vm456, %v490, %v495
    %s497 = scalar_lea.vmem %s1, 12
    %v498 = vld [vmem:[%s497] sm:$0xf]
    %v499 = vunpack.c.l.b16 %v464
    %v500 = vunpack.c.l.b16 %v469
    %v501 = vunpack.c.l.b16 %v476
    %v502 = vunpack.c.l.b16 %v484
    %v503 = vunpack.c.l.b16 %v489
    %v504 = vunpack.c.l.b16 %v496
    %v505 = vpack.c.b16 %v500, %v499
    %v506 = vpack.c.b16 %v502, %v501
    %v507 = vpack.c.b16 %v504, %v503
    %v509 = vsel %vm202, %v505, 0
    %v512 = vsel %vm202, %v506, 0
    %v515 = vsel %vm202, %v507, 0
    %v518 = vsel %vm212, %v498, 0
    %520 = vmatprep.subr.bf16.mxu0 0
    %521 = vmatpush1.bf16.msra.mxu0 %v518
    %522 = vmatprep.subr.bf16.mxu0 0
    %523 = vmatpush1.bf16.msra.mxu0 0
    %524 = vmatprep.subr.bf16.mxu0 0
    %525 = vmatpush1.bf16.msra.mxu0 0
    %526 = vmatprep.subr.bf16.mxu0 0
    %527 = vmatpush1.bf16.msra.mxu0 0
    %528 = vmatprep.subr.bf16.mxu0 0
    %529 = vmatpush1.bf16.msra.mxu0 0
    %530 = vmatprep.subr.bf16.mxu0 0
    %531 = vmatpush1.bf16.msra.mxu0 0
    %532 = vmatprep.subr.bf16.mxu0 0
    %533 = vmatpush1.bf16.msra.mxu0 0
    %534 = vmatprep.subr.bf16.mxu0 0
    %535 = vmatpush1.bf16.msra.mxu0 0
    %536 = vmatprep.subr.bf16.mxu0 0
    %537 = vmatpush1.bf16.msra.mxu0 0
    %538 = vmatprep.subr.bf16.mxu0 0
    %539 = vmatpush1.bf16.msra.mxu0 0
    %540 = vmatprep.subr.bf16.mxu0 0
    %541 = vmatpush1.bf16.msra.mxu0 0
    %542 = vmatprep.subr.bf16.mxu0 0
    %543 = vmatpush1.bf16.msra.mxu0 0
    %544 = vmatprep.subr.bf16.mxu0 0
    %545 = vmatpush1.bf16.msra.mxu0 0
    %546 = vmatprep.subr.bf16.mxu0 0
    %547 = vmatpush1.bf16.msra.mxu0 0
    %548 = vmatprep.subr.bf16.mxu0 0
    %549 = vmatpush1.bf16.msra.mxu0 0
    %550 = vmatprep.subr.bf16.mxu0 0
    %551 = vmatpush1.bf16.msra.mxu0 0
    %552 = vmatprep.mubr.bf16.mxu0 0
    %553 = vmatmul.mubr.bf16.gmra.mrb[0].mxu0 %v509
    %v554 = vpop.f32.mrb[0].mxu0
    %v555 = vadd.f32 0.0, %v554
    %v556 = vpop.f32.mrb[0].mxu0
    %v557 = vpop.f32.mrb[0].mxu0
    %v558 = vadd.f32 0.0, %v557
    %v559 = vpop.f32.mrb[0].mxu0
    %560 = vmatprep.mubr.bf16.mxu0 0
    %561 = vmatmul.mubr.bf16.gmra.mrb[0].mxu0 %v512
    %v562 = vpop.f32.mrb[0].mxu0
    %v563 = vadd.f32 0.0, %v562
    %v564 = vpop.f32.mrb[0].mxu0
    %v565 = vpop.f32.mrb[0].mxu0
    %v566 = vadd.f32 0.0, %v565
    %v567 = vpop.f32.mrb[0].mxu0
    %568 = vmatprep.mubr.bf16.mxu0 0
    %569 = vmatmul.mubr.bf16.gmra.mrb[0].mxu0 %v515
    %v570 = vpop.f32.mrb[0].mxu0
    %v571 = vadd.f32 0.0, %v570
    %v572 = vpop.f32.mrb[0].mxu0
    %v573 = vpop.f32.mrb[0].mxu0
    %v574 = vadd.f32 0.0, %v573
    %v575 = vpop.f32.mrb[0].mxu0
    %576 = vdwg.mxu0
    %v577 = vadd.f32 %v448, %v555
    %v578 = vadd.f32 %v449, %v558
    %v579 = vadd.f32 %v450, %v563
    %v580 = vadd.f32 %v451, %v566
    %v581 = vadd.f32 %v452, %v571
    %v582 = vadd.f32 %v453, %v574
    %vm583 = vcmask 1045508
    %vm584 = vmor %vm92, %vm583
    %v585 = vrot.slane %v112, 6
    %v586 = vrot.slane %v585, 4
    %v587 = vrot.slane %v113, 6
    %v588 = vsel %vm584, %v586, %v587
    %v589 = vrot.slane %v587, 4
    %v590 = vrot.slane %v114, 6
    %v591 = vsel %vm584, %v589, %v590
    %v592 = vrot.slane %v590, 4
    %v593 = vrot.slane %v115, 6
    %v594 = vsel %vm584, %v592, %v593
    %v595 = vrot.slane %v116, 6
    %v596 = vrot.slane %v595, 4
    %v597 = vrot.slane %v117, 6
    %v598 = vsel %vm584, %v596, %v597
    %v599 = vrot.slane %v597, 4
    %v600 = vrot.slane %v118, 6
    %v601 = vsel %vm584, %v599, %v600
    %v602 = vrot.slane %v600, 4
    %v603 = vrot.slane %v119, 6
    %v604 = vsel %vm584, %v602, %v603
    %s605 = scalar_lea.vmem %s1, 16
    %v606 = vld [vmem:[%s605] sm:$0xf]
    %v607 = vunpack.c.l.b16 %v588
    %v608 = vunpack.c.l.b16 %v591
    %v609 = vunpack.c.l.b16 %v594
    %v610 = vunpack.c.l.b16 %v598
    %v611 = vunpack.c.l.b16 %v601
    %v612 = vunpack.c.l.b16 %v604
    %v613 = vpack.c.b16 %v608, %v607
    %v614 = vpack.c.b16 %v610, %v609
    %v615 = vpack.c.b16 %v612, %v611
    %v617 = vsel %vm202, %v613, 0
    %v620 = vsel %vm202, %v614, 0
    %v623 = vsel %vm202, %v615, 0
    %v626 = vsel %vm212, %v606, 0
    %628 = vmatprep.subr.bf16.mxu0 0
    %629 = vmatpush1.bf16.msra.mxu0 %v626
    %630 = vmatprep.subr.bf16.mxu0 0
    %631 = vmatpush1.bf16.msra.mxu0 0
    %632 = vmatprep.subr.bf16.mxu0 0
    %633 = vmatpush1.bf16.msra.mxu0 0
    %634 = vmatprep.subr.bf16.mxu0 0
    %635 = vmatpush1.bf16.msra.mxu0 0
    %636 = vmatprep.subr.bf16.mxu0 0
    %637 = vmatpush1.bf16.msra.mxu0 0
    %638 = vmatprep.subr.bf16.mxu0 0
    %639 = vmatpush1.bf16.msra.mxu0 0
    %640 = vmatprep.subr.bf16.mxu0 0
    %641 = vmatpush1.bf16.msra.mxu0 0
    %642 = vmatprep.subr.bf16.mxu0 0
    %643 = vmatpush1.bf16.msra.mxu0 0
    %644 = vmatprep.subr.bf16.mxu0 0
    %645 = vmatpush1.bf16.msra.mxu0 0
    %646 = vmatprep.subr.bf16.mxu0 0
    %647 = vmatpush1.bf16.msra.mxu0 0
    %648 = vmatprep.subr.bf16.mxu0 0
    %649 = vmatpush1.bf16.msra.mxu0 0
    %650 = vmatprep.subr.bf16.mxu0 0
    %651 = vmatpush1.bf16.msra.mxu0 0
    %652 = vmatprep.subr.bf16.mxu0 0
    %653 = vmatpush1.bf16.msra.mxu0 0
    %654 = vmatprep.subr.bf16.mxu0 0
    %655 = vmatpush1.bf16.msra.mxu0 0
    %656 = vmatprep.subr.bf16.mxu0 0
    %657 = vmatpush1.bf16.msra.mxu0 0
    %658 = vmatprep.subr.bf16.mxu0 0
    %659 = vmatpush1.bf16.msra.mxu0 0
    %660 = vmatprep.mubr.bf16.mxu0 0
    %661 = vmatmul.mubr.bf16.gmra.mrb[0].mxu0 %v617
    %v662 = vpop.f32.mrb[0].mxu0
    %v663 = vadd.f32 0.0, %v662
    %v664 = vpop.f32.mrb[0].mxu0
    %v665 = vpop.f32.mrb[0].mxu0
    %v666 = vadd.f32 0.0, %v665
    %v667 = vpop.f32.mrb[0].mxu0
    %668 = vmatprep.mubr.bf16.mxu0 0
    %669 = vmatmul.mubr.bf16.gmra.mrb[0].mxu0 %v620
    %v670 = vpop.f32.mrb[0].mxu0
    %v671 = vadd.f32 0.0, %v670
    %v672 = vpop.f32.mrb[0].mxu0
    %v673 = vpop.f32.mrb[0].mxu0
    %v674 = vadd.f32 0.0, %v673
    %v675 = vpop.f32.mrb[0].mxu0
    %676 = vmatprep.mubr.bf16.mxu0 0
    %677 = vmatmul.mubr.bf16.gmra.mrb[0].mxu0 %v623
    %v678 = vpop.f32.mrb[0].mxu0
    %v679 = vadd.f32 0.0, %v678
    %v680 = vpop.f32.mrb[0].mxu0
    %v681 = vpop.f32.mrb[0].mxu0
    %v682 = vadd.f32 0.0, %v681
    %v683 = vpop.f32.mrb[0].mxu0
    %684 = vdwg.mxu0
    %v685 = vadd.f32 %v577, %v663
    %v686 = vadd.f32 %v578, %v666
    %v687 = vadd.f32 %v579, %v671
    %v688 = vadd.f32 %v580, %v674
    %v689 = vadd.f32 %v581, %v679
    %v690 = vadd.f32 %v582, %v682
    %v691 = vld [vmem:[%s2] sm:$0x1]
    %v693 = vlaneseq
    %v694 = vshrl.u32 %v693, 7
    %v695 = vsub.s32 0, %v694
    %v696 = vrot.slane %v691, %v695
    %v698 = vadd.f32 %v685, %v696
    %v699 = vadd.f32 %v686, %v696
    %v700 = vadd.f32 %v687, %v696
    %v701 = vadd.f32 %v688, %v696
    %v702 = vadd.f32 %v689, %v696
    %v703 = vadd.f32 %v690, %v696
    %vm704 = vcmp.ge.f32.partialorder %v698, 0.0
    %vm705 = vcmp.ge.f32.partialorder %v699, 0.0
    %vm706 = vcmp.ge.f32.partialorder %v700, 0.0
    %vm707 = vcmp.ge.f32.partialorder %v701, 0.0
    %vm708 = vcmp.ge.f32.partialorder %v702, 0.0
    %vm709 = vcmp.ge.f32.partialorder %v703, 0.0
    %v710 = vmul.f32 %v698, 0.01
    %v711 = vmul.f32 %v699, 0.01
    %v712 = vmul.f32 %v700, 0.01
    %v713 = vmul.f32 %v701, 0.01
    %v714 = vmul.f32 %v702, 0.01
    %v715 = vmul.f32 %v703, 0.01
    %v716 = vsel %vm704, %v698, %v710
    %v717 = vsel %vm705, %v699, %v711
    %v718 = vsel %vm706, %v700, %v712
    %v719 = vsel %vm707, %v701, %v713
    %v720 = vsel %vm708, %v702, %v714
    %v721 = vsel %vm709, %v703, %v715
    %v722 = vpack.c.bf16 %v717, %v716
    %v723 = vpack.c.bf16 %v719, %v718
    %v724 = vpack.c.bf16 %v721, %v720
    %v728 = vunpack.c.l.b16 %v722
    %v729 = vunpack.c.h.b16 %v722
    %v730 = vunpack.c.l.b16 %v723
    %v731 = vunpack.c.h.b16 %v723
    %v732 = vunpack.c.l.b16 %v724
    %v733 = vunpack.c.h.b16 %v724
    %v734 = vpack.c.b16 %v728, %v728
    %v735 = vpack.c.b16 %v729, %v729
    %v736 = vpack.c.b16 %v730, %v730
    %v737 = vpack.c.b16 %v731, %v731
    %v738 = vpack.c.b16 %v732, %v732
    %v739 = vpack.c.b16 %v733, %v733
    %v740 = vld [vmem:[%s3] sm:$0xf]
    %v741 = vld [vmem:[%s3 + $0x4] sm:$0xf]
    %v743 = vshrl.u32 %v734, 16
    %v745 = vrot.slane %v743, 4
    %v746 = vshll.u32 %v734, 16
    %v748 = vrot.slane %v746, 5
    %v749 = vor.u32 %v745, %v748
    %v750 = vrot.slane %v749, 4
    %v752 = vshll.u32 %v735, 16
    %v754 = vrot.slane %v752, 5
    %v755 = vsel %vm122, %v750, %v754
    %v756 = vshrl.u32 %v735, 16
    %v758 = vrot.slane %v756, 4
    %v759 = vor.u32 %v758, %v754
    %v760 = vrot.slane %v759, 4
    %v762 = vshll.u32 %v736, 16
    %v764 = vrot.slane %v762, 5
    %v765 = vsel %vm122, %v760, %v764
    %v767 = vshrl.u32 %v737, 16
    %v769 = vrot.slane %v767, 4
    %v770 = vshll.u32 %v737, 16
    %v772 = vrot.slane %v770, 5
    %v773 = vor.u32 %v769, %v772
    %v774 = vrot.slane %v773, 4
    %v776 = vshll.u32 %v738, 16
    %v778 = vrot.slane %v776, 5
    %v779 = vsel %vm122, %v774, %v778
    %v780 = vshrl.u32 %v738, 16
    %v782 = vrot.slane %v780, 4
    %v783 = vor.u32 %v782, %v778
    %v784 = vrot.slane %v783, 4
    %v786 = vshll.u32 %v739, 16
    %v788 = vrot.slane %v786, 5
    %v789 = vsel %vm122, %v784, %v788
    %s790 = scalar_lea.vmem %s3, 8
    %v791 = vld [vmem:[%s790] sm:$0xf]
    %v792 = vld [vmem:[%s790 + $0x4] sm:$0xf]
    %v793 = vunpack.c.l.b16 %v755
    %v794 = vunpack.c.l.b16 %v765
    %v795 = vunpack.c.l.b16 %v779
    %v796 = vunpack.c.l.b16 %v789
    %v797 = vpack.c.b16 %v794, %v793
    %v798 = vpack.c.b16 %v796, %v795
    %v801 = vunpack.c.l.b16 %v791
    %v802 = vunpack.c.l.b16 %v792
    %v803 = vpack.c.b16 %v802, %v801
    %vm805 = vcmask 130048
    %v807 = vsel %vm805, %v797, 0
    %v810 = vsel %vm805, %v798, 0
    %812 = vmatprep.subr.bf16.mxu0 0
    %813 = vmatpush1.bf16.msra.mxu0 %v803
    %814 = vmatprep.subr.bf16.mxu0 0
    %815 = vmatpush1.bf16.msra.mxu0 0
    %816 = vmatprep.subr.bf16.mxu0 0
    %817 = vmatpush1.bf16.msra.mxu0 0
    %818 = vmatprep.subr.bf16.mxu0 0
    %819 = vmatpush1.bf16.msra.mxu0 0
    %820 = vmatprep.subr.bf16.mxu0 0
    %821 = vmatpush1.bf16.msra.mxu0 0
    %822 = vmatprep.subr.bf16.mxu0 0
    %823 = vmatpush1.bf16.msra.mxu0 0
    %824 = vmatprep.subr.bf16.mxu0 0
    %825 = vmatpush1.bf16.msra.mxu0 0
    %826 = vmatprep.subr.bf16.mxu0 0
    %827 = vmatpush1.bf16.msra.mxu0 0
    %828 = vmatprep.subr.bf16.mxu0 0
    %829 = vmatpush1.bf16.msra.mxu0 0
    %830 = vmatprep.subr.bf16.mxu0 0
    %831 = vmatpush1.bf16.msra.mxu0 0
    %832 = vmatprep.subr.bf16.mxu0 0
    %833 = vmatpush1.bf16.msra.mxu0 0
    %834 = vmatprep.subr.bf16.mxu0 0
    %835 = vmatpush1.bf16.msra.mxu0 0
    %836 = vmatprep.subr.bf16.mxu0 0
    %837 = vmatpush1.bf16.msra.mxu0 0
    %838 = vmatprep.subr.bf16.mxu0 0
    %839 = vmatpush1.bf16.msra.mxu0 0
    %840 = vmatprep.subr.bf16.mxu0 0
    %841 = vmatpush1.bf16.msra.mxu0 0
    %842 = vmatprep.subr.bf16.mxu0 0
    %843 = vmatpush1.bf16.msra.mxu0 0
    %844 = vmatprep.mubr.bf16.mxu0 0
    %845 = vmatmul.mubr.bf16.gmra.mrb[0].mxu0 %v807
    %v846 = vpop.f32.mrb[0].mxu0
    %v847 = vadd.f32 0.0, %v846
    %v848 = vpop.f32.mrb[0].mxu0
    %v849 = vpop.f32.mrb[0].mxu0
    %v850 = vadd.f32 0.0, %v849
    %v851 = vpop.f32.mrb[0].mxu0
    %852 = vmatprep.mubr.bf16.mxu0 0
    %853 = vmatmul.mubr.bf16.gmra.mrb[0].mxu0 %v810
    %v854 = vpop.f32.mrb[0].mxu0
    %v855 = vadd.f32 0.0, %v854
    %v856 = vpop.f32.mrb[0].mxu0
    %v857 = vpop.f32.mrb[0].mxu0
    %v858 = vadd.f32 0.0, %v857
    %v859 = vpop.f32.mrb[0].mxu0
    %860 = vdwg.mxu0
    %v861 = vpack.c.b16 %v729, %v728
    %v862 = vpack.c.b16 %v732, %v731
    %v865 = vunpack.c.l.b16 %v740
    %v866 = vunpack.c.l.b16 %v741
    %v867 = vpack.c.b16 %v866, %v865
    %v870 = vsel %vm805, %v861, 0
    %v873 = vsel %vm805, %v862, 0
    %875 = vmatprep.subr.bf16.mxu0 0
    %876 = vmatpush1.bf16.msra.mxu0 %v867
    %877 = vmatprep.subr.bf16.mxu0 0
    %878 = vmatpush1.bf16.msra.mxu0 0
    %879 = vmatprep.subr.bf16.mxu0 0
    %880 = vmatpush1.bf16.msra.mxu0 0
    %881 = vmatprep.subr.bf16.mxu0 0
    %882 = vmatpush1.bf16.msra.mxu0 0
    %883 = vmatprep.subr.bf16.mxu0 0
    %884 = vmatpush1.bf16.msra.mxu0 0
    %885 = vmatprep.subr.bf16.mxu0 0
    %886 = vmatpush1.bf16.msra.mxu0 0
    %887 = vmatprep.subr.bf16.mxu0 0
    %888 = vmatpush1.bf16.msra.mxu0 0
    %889 = vmatprep.subr.bf16.mxu0 0
    %890 = vmatpush1.bf16.msra.mxu0 0
    %891 = vmatprep.subr.bf16.mxu0 0
    %892 = vmatpush1.bf16.msra.mxu0 0
    %893 = vmatprep.subr.bf16.mxu0 0
    %894 = vmatpush1.bf16.msra.mxu0 0
    %895 = vmatprep.subr.bf16.mxu0 0
    %896 = vmatpush1.bf16.msra.mxu0 0
    %897 = vmatprep.subr.bf16.mxu0 0
    %898 = vmatpush1.bf16.msra.mxu0 0
    %899 = vmatprep.subr.bf16.mxu0 0
    %900 = vmatpush1.bf16.msra.mxu0 0
    %901 = vmatprep.subr.bf16.mxu0 0
    %902 = vmatpush1.bf16.msra.mxu0 0
    %903 = vmatprep.subr.bf16.mxu0 0
    %904 = vmatpush1.bf16.msra.mxu0 0
    %905 = vmatprep.subr.bf16.mxu0 0
    %906 = vmatpush1.bf16.msra.mxu0 0
    %907 = vmatprep.mubr.bf16.mxu0 0
    %908 = vmatmul.mubr.bf16.gmra.mrb[0].mxu0 %v870
    %v909 = vpop.f32.mrb[0].mxu0
    %v910 = vadd.f32 %v847, %v909
    %v911 = vpop.f32.mrb[0].mxu0
    %v912 = vpop.f32.mrb[0].mxu0
    %v913 = vadd.f32 %v850, %v912
    %v914 = vpop.f32.mrb[0].mxu0
    %915 = vmatprep.mubr.bf16.mxu0 0
    %916 = vmatmul.mubr.bf16.gmra.mrb[0].mxu0 %v873
    %v917 = vpop.f32.mrb[0].mxu0
    %v918 = vadd.f32 %v855, %v917
    %v919 = vpop.f32.mrb[0].mxu0
    %v920 = vpop.f32.mrb[0].mxu0
    %v921 = vadd.f32 %v858, %v920
    %v922 = vpop.f32.mrb[0].mxu0
    %923 = vdwg.mxu0
    %v924 = vrot.slane %v734, 5
    %v925 = vrot.slane %v924, 4
    %v926 = vrot.slane %v735, 5
    %v927 = vsel %vm347, %v925, %v926
    %v928 = vrot.slane %v926, 4
    %v929 = vrot.slane %v736, 5
    %v930 = vsel %vm347, %v928, %v929
    %v931 = vrot.slane %v737, 5
    %v932 = vrot.slane %v931, 4
    %v933 = vrot.slane %v738, 5
    %v934 = vsel %vm347, %v932, %v933
    %v935 = vrot.slane %v933, 4
    %v936 = vrot.slane %v739, 5
    %v937 = vsel %vm347, %v935, %v936
    %s938 = scalar_lea.vmem %s3, 16
    %v939 = vld [vmem:[%s938] sm:$0xf]
    %v940 = vld [vmem:[%s938 + $0x4] sm:$0xf]
    %v941 = vunpack.c.l.b16 %v927
    %v942 = vunpack.c.l.b16 %v930
    %v943 = vunpack.c.l.b16 %v934
    %v944 = vunpack.c.l.b16 %v937
    %v945 = vpack.c.b16 %v942, %v941
    %v946 = vpack.c.b16 %v944, %v943
    %v949 = vunpack.c.l.b16 %v939
    %v950 = vunpack.c.l.b16 %v940
    %v951 = vpack.c.b16 %v950, %v949
    %v954 = vsel %vm805, %v945, 0
    %v957 = vsel %vm805, %v946, 0
    %959 = vmatprep.subr.bf16.mxu0 0
    %960 = vmatpush1.bf16.msra.mxu0 %v951
    %961 = vmatprep.subr.bf16.mxu0 0
    %962 = vmatpush1.bf16.msra.mxu0 0
    %963 = vmatprep.subr.bf16.mxu0 0
    %964 = vmatpush1.bf16.msra.mxu0 0
    %965 = vmatprep.subr.bf16.mxu0 0
    %966 = vmatpush1.bf16.msra.mxu0 0
    %967 = vmatprep.subr.bf16.mxu0 0
    %968 = vmatpush1.bf16.msra.mxu0 0
    %969 = vmatprep.subr.bf16.mxu0 0
    %970 = vmatpush1.bf16.msra.mxu0 0
    %971 = vmatprep.subr.bf16.mxu0 0
    %972 = vmatpush1.bf16.msra.mxu0 0
    %973 = vmatprep.subr.bf16.mxu0 0
    %974 = vmatpush1.bf16.msra.mxu0 0
    %975 = vmatprep.subr.bf16.mxu0 0
    %976 = vmatpush1.bf16.msra.mxu0 0
    %977 = vmatprep.subr.bf16.mxu0 0
    %978 = vmatpush1.bf16.msra.mxu0 0
    %979 = vmatprep.subr.bf16.mxu0 0
    %980 = vmatpush1.bf16.msra.mxu0 0
    %981 = vmatprep.subr.bf16.mxu0 0
    %982 = vmatpush1.bf16.msra.mxu0 0
    %983 = vmatprep.subr.bf16.mxu0 0
    %984 = vmatpush1.bf16.msra.mxu0 0
    %985 = vmatprep.subr.bf16.mxu0 0
    %986 = vmatpush1.bf16.msra.mxu0 0
    %987 = vmatprep.subr.bf16.mxu0 0
    %988 = vmatpush1.bf16.msra.mxu0 0
    %989 = vmatprep.subr.bf16.mxu0 0
    %990 = vmatpush1.bf16.msra.mxu0 0
    %991 = vmatprep.mubr.bf16.mxu0 0
    %992 = vmatmul.mubr.bf16.gmra.mrb[0].mxu0 %v954
    %v993 = vpop.f32.mrb[0].mxu0
    %v994 = vadd.f32 0.0, %v993
    %v995 = vpop.f32.mrb[0].mxu0
    %v996 = vpop.f32.mrb[0].mxu0
    %v997 = vadd.f32 0.0, %v996
    %v998 = vpop.f32.mrb[0].mxu0
    %999 = vmatprep.mubr.bf16.mxu0 0
    %1000 = vmatmul.mubr.bf16.gmra.mrb[0].mxu0 %v957
    %v1001 = vpop.f32.mrb[0].mxu0
    %v1002 = vadd.f32 0.0, %v1001
    %v1003 = vpop.f32.mrb[0].mxu0
    %v1004 = vpop.f32.mrb[0].mxu0
    %v1005 = vadd.f32 0.0, %v1004
    %v1006 = vpop.f32.mrb[0].mxu0
    %1007 = vdwg.mxu0
    %v1008 = vadd.f32 %v910, %v994
    %v1009 = vadd.f32 %v913, %v997
    %v1010 = vadd.f32 %v918, %v1002
    %v1011 = vadd.f32 %v921, %v1005
    %v1012 = vld [vmem:[%s4] sm:$0x1]
    %v1014 = vlaneseq
    %v1015 = vshrl.u32 %v1014, 7
    %v1016 = vsub.s32 0, %v1015
    %v1017 = vrot.slane %v1012, %v1016
    %v1019 = vadd.f32 %v1008, %v1017
    %v1020 = vadd.f32 %v1009, %v1017
    %v1021 = vadd.f32 %v1010, %v1017
    %v1022 = vadd.f32 %v1011, %v1017
    %v1023 = vtanh.pop %v1019
    %v1024 = vtanh.pop %v1020
    %v1025 = vtanh.pop %v1021
    %v1026 = vtanh.pop %v1022
    %v1027 = vmul.f32 %v1023, 1.442695
    %v1028 = vpow.pop %v1027
    %v1029 = vmul.f32 %v1024, 1.442695
    %v1030 = vpow.pop %v1029
    %v1031 = vmul.f32 %v1025, 1.442695
    %v1032 = vpow.pop %v1031
    %v1033 = vmul.f32 %v1026, 1.442695
    %v1034 = vpow.pop %v1033
    %v1035 = vmul.f32 %v41, %v1028
    %v1036 = vmul.f32 %v43, %v1030
    %v1037 = vmul.f32 %v45, %v1032
    %v1038 = vmul.f32 %v47, %v1034
    %v1039 = vpack.c.bf16 %v43, %v41
    %v1040 = vpack.c.bf16 %v47, %v45
    %v1042 = vpack.i.b16 %v1039, %v1039
    %v1044 = vlaneseq
    %v1045 = vshrl.u32 %v1044, 7
    %v1046 = vsub.s32 0, %v1045
    %v1047 = vrot.slane %v1042, %v1046
    %v1049 = vpack.i.b16 %v1040, %v1040
    %v1051 = vlaneseq
    %v1052 = vshrl.u32 %v1051, 7
    %v1053 = vsub.s32 0, %v1052
    %v1054 = vrot.slane %v1049, %v1053
    %v1055 = vshrl.u32 %v1039, 16
    %v1056 = vpack.i.b16 %v1055, %v1055
    %v1058 = vlaneseq
    %v1059 = vshrl.u32 %v1058, 7
    %v1060 = vsub.s32 7, %v1059
    %v1061 = vrot.slane %v1056, %v1060
    %v1062 = vshrl.u32 %v1040, 16
    %v1063 = vpack.i.b16 %v1062, %v1062
    %v1065 = vlaneseq
    %v1066 = vshrl.u32 %v1065, 7
    %v1067 = vsub.s32 7, %v1066
    %v1068 = vrot.slane %v1063, %v1067
    %v1070 = vrot.slane %v1055, 6
    %v1071 = vshll.u32 %v1039, 16
    %v1073 = vrot.slane %v1071, 7
    %v1074 = vor.u32 %v1070, %v1073
    %v1076 = vrot.slane %v1062, 6
    %v1077 = vshll.u32 %v1040, 16
    %v1079 = vrot.slane %v1077, 7
    %v1080 = vor.u32 %v1076, %v1079
    %v1083 = vsel %vm94, %v1047, %v1074
    %v1084 = vsel %vm94, %v1054, %v1080
    %v1085 = vsel %vm94, %v1074, %v1061
    %v1086 = vsel %vm94, %v1080, %v1068
    %v1091 = vunpack.c.l.b16 %v1083
    %v1092 = vunpack.c.h.b16 %v1083
    %v1093 = vunpack.c.l.b16 %v1085
    %v1094 = vunpack.c.l.b16 %v1084
    %v1095 = vunpack.c.h.b16 %v1084
    %v1096 = vunpack.c.l.b16 %v1086
    %s1097 = scalar_lea.vmem %s1, 20
    %v1098 = vld [vmem:[%s1097] sm:$0xf]
    %v1099 = vunpack.c.h.b16 %v1085
    %v1100 = vunpack.c.h.b16 %v1086
    %v1101 = vpack.c.b16 %v1091, %v1091
    %v1102 = vpack.c.b16 %v1092, %v1092
    %v1103 = vpack.c.b16 %v1093, %v1093
    %v1104 = vpack.c.b16 %v1099, %v1099
    %v1105 = vpack.c.b16 %v1094, %v1094
    %v1106 = vpack.c.b16 %v1095, %v1095
    %v1107 = vpack.c.b16 %v1096, %v1096
    %v1108 = vpack.c.b16 %v1100, %v1100
    %v1110 = vshrl.u32 %v1101, 16
    %v1112 = vrot.slane %v1110, 4
    %v1113 = vshll.u32 %v1101, 16
    %v1115 = vrot.slane %v1113, 5
    %v1116 = vor.u32 %v1112, %v1115
    %v1117 = vrot.slane %v1116, 4
    %v1119 = vshll.u32 %v1102, 16
    %v1121 = vrot.slane %v1119, 5
    %v1122 = vsel %vm122, %v1117, %v1121
    %v1123 = vshrl.u32 %v1102, 16
    %v1125 = vrot.slane %v1123, 4
    %v1126 = vor.u32 %v1125, %v1121
    %v1127 = vrot.slane %v1126, 4
    %v1129 = vshll.u32 %v1103, 16
    %v1131 = vrot.slane %v1129, 5
    %v1132 = vsel %vm122, %v1127, %v1131
    %v1133 = vshrl.u32 %v1103, 16
    %v1135 = vrot.slane %v1133, 4
    %v1136 = vor.u32 %v1135, %v1131
    %v1137 = vrot.slane %v1136, 4
    %v1139 = vshll.u32 %v1104, 16
    %v1141 = vrot.slane %v1139, 5
    %v1142 = vsel %vm122, %v1137, %v1141
    %v1144 = vshrl.u32 %v1105, 16
    %v1146 = vrot.slane %v1144, 4
    %v1147 = vshll.u32 %v1105, 16
    %v1149 = vrot.slane %v1147, 5
    %v1150 = vor.u32 %v1146, %v1149
    %v1151 = vrot.slane %v1150, 4
    %v1153 = vshll.u32 %v1106, 16
    %v1155 = vrot.slane %v1153, 5
    %v1156 = vsel %vm122, %v1151, %v1155
    %v1157 = vshrl.u32 %v1106, 16
    %v1159 = vrot.slane %v1157, 4
    %v1160 = vor.u32 %v1159, %v1155
    %v1161 = vrot.slane %v1160, 4
    %v1163 = vshll.u32 %v1107, 16
    %v1165 = vrot.slane %v1163, 5
    %v1166 = vsel %vm122, %v1161, %v1165
    %v1167 = vshrl.u32 %v1107, 16
    %v1169 = vrot.slane %v1167, 4
    %v1170 = vor.u32 %v1169, %v1165
    %v1171 = vrot.slane %v1170, 4
    %v1173 = vshll.u32 %v1108, 16
    %v1175 = vrot.slane %v1173, 5
    %v1176 = vsel %vm122, %v1171, %v1175
    %s1177 = scalar_lea.vmem %s1, 24
    %v1178 = vld [vmem:[%s1177] sm:$0xf]
    %v1179 = vunpack.c.l.b16 %v1122
    %v1180 = vunpack.c.l.b16 %v1132
    %v1181 = vunpack.c.l.b16 %v1142
    %v1182 = vunpack.c.l.b16 %v1156
    %v1183 = vunpack.c.l.b16 %v1166
    %v1184 = vunpack.c.l.b16 %v1176
    %v1185 = vpack.c.b16 %v1180, %v1179
    %v1186 = vpack.c.b16 %v1182, %v1181
    %v1187 = vpack.c.b16 %v1184, %v1183
    %v1189 = vsel %vm202, %v1185, 0
    %v1192 = vsel %vm202, %v1186, 0
    %v1195 = vsel %vm202, %v1187, 0
    %v1198 = vsel %vm212, %v1178, 0
    %1200 = vmatprep.subr.bf16.mxu0 0
    %1201 = vmatpush1.bf16.msra.mxu0 %v1198
    %1202 = vmatprep.subr.bf16.mxu0 0
    %1203 = vmatpush1.bf16.msra.mxu0 0
    %1204 = vmatprep.subr.bf16.mxu0 0
    %1205 = vmatpush1.bf16.msra.mxu0 0
    %1206 = vmatprep.subr.bf16.mxu0 0
    %1207 = vmatpush1.bf16.msra.mxu0 0
    %1208 = vmatprep.subr.bf16.mxu0 0
    %1209 = vmatpush1.bf16.msra.mxu0 0
    %1210 = vmatprep.subr.bf16.mxu0 0
    %1211 = vmatpush1.bf16.msra.mxu0 0
    %1212 = vmatprep.subr.bf16.mxu0 0
    %1213 = vmatpush1.bf16.msra.mxu0 0
    %1214 = vmatprep.subr.bf16.mxu0 0
    %1215 = vmatpush1.bf16.msra.mxu0 0
    %1216 = vmatprep.subr.bf16.mxu0 0
    %1217 = vmatpush1.bf16.msra.mxu0 0
    %1218 = vmatprep.subr.bf16.mxu0 0
    %1219 = vmatpush1.bf16.msra.mxu0 0
    %1220 = vmatprep.subr.bf16.mxu0 0
    %1221 = vmatpush1.bf16.msra.mxu0 0
    %1222 = vmatprep.subr.bf16.mxu0 0
    %1223 = vmatpush1.bf16.msra.mxu0 0
    %1224 = vmatprep.subr.bf16.mxu0 0
    %1225 = vmatpush1.bf16.msra.mxu0 0
    %1226 = vmatprep.subr.bf16.mxu0 0
    %1227 = vmatpush1.bf16.msra.mxu0 0
    %1228 = vmatprep.subr.bf16.mxu0 0
    %1229 = vmatpush1.bf16.msra.mxu0 0
    %1230 = vmatprep.subr.bf16.mxu0 0
    %1231 = vmatpush1.bf16.msra.mxu0 0
    %1232 = vmatprep.mubr.bf16.mxu0 0
    %1233 = vmatmul.mubr.bf16.gmra.mrb[0].mxu0 %v1189
    %v1234 = vpop.f32.mrb[0].mxu0
    %v1235 = vadd.f32 0.0, %v1234
    %v1236 = vpop.f32.mrb[0].mxu0
    %v1237 = vpop.f32.mrb[0].mxu0
    %v1238 = vadd.f32 0.0, %v1237
    %v1239 = vpop.f32.mrb[0].mxu0
    %1240 = vmatprep.mubr.bf16.mxu0 0
    %1241 = vmatmul.mubr.bf16.gmra.mrb[0].mxu0 %v1192
    %v1242 = vpop.f32.mrb[0].mxu0
    %v1243 = vadd.f32 0.0, %v1242
    %v1244 = vpop.f32.mrb[0].mxu0
    %v1245 = vpop.f32.mrb[0].mxu0
    %v1246 = vadd.f32 0.0, %v1245
    %v1247 = vpop.f32.mrb[0].mxu0
    %1248 = vmatprep.mubr.bf16.mxu0 0
    %1249 = vmatmul.mubr.bf16.gmra.mrb[0].mxu0 %v1195
    %v1250 = vpop.f32.mrb[0].mxu0
    %v1251 = vadd.f32 0.0, %v1250
    %v1252 = vpop.f32.mrb[0].mxu0
    %v1253 = vpop.f32.mrb[0].mxu0
    %v1254 = vadd.f32 0.0, %v1253
    %v1255 = vpop.f32.mrb[0].mxu0
    %1256 = vdwg.mxu0
    %v1257 = vpack.c.b16 %v1092, %v1091
    %v1258 = vpack.c.b16 %v1094, %v1093
    %v1259 = vpack.c.b16 %v1096, %v1095
    %v1261 = vsel %vm202, %v1257, 0
    %v1264 = vsel %vm202, %v1258, 0
    %v1267 = vsel %vm202, %v1259, 0
    %v1270 = vsel %vm212, %v1098, 0
    %1272 = vmatprep.subr.bf16.mxu0 0
    %1273 = vmatpush1.bf16.msra.mxu0 %v1270
    %1274 = vmatprep.subr.bf16.mxu0 0
    %1275 = vmatpush1.bf16.msra.mxu0 0
    %1276 = vmatprep.subr.bf16.mxu0 0
    %1277 = vmatpush1.bf16.msra.mxu0 0
    %1278 = vmatprep.subr.bf16.mxu0 0
    %1279 = vmatpush1.bf16.msra.mxu0 0
    %1280 = vmatprep.subr.bf16.mxu0 0
    %1281 = vmatpush1.bf16.msra.mxu0 0
    %1282 = vmatprep.subr.bf16.mxu0 0
    %1283 = vmatpush1.bf16.msra.mxu0 0
    %1284 = vmatprep.subr.bf16.mxu0 0
    %1285 = vmatpush1.bf16.msra.mxu0 0
    %1286 = vmatprep.subr.bf16.mxu0 0
    %1287 = vmatpush1.bf16.msra.mxu0 0
    %1288 = vmatprep.subr.bf16.mxu0 0
    %1289 = vmatpush1.bf16.msra.mxu0 0
    %1290 = vmatprep.subr.bf16.mxu0 0
    %1291 = vmatpush1.bf16.msra.mxu0 0
    %1292 = vmatprep.subr.bf16.mxu0 0
    %1293 = vmatpush1.bf16.msra.mxu0 0
    %1294 = vmatprep.subr.bf16.mxu0 0
    %1295 = vmatpush1.bf16.msra.mxu0 0
    %1296 = vmatprep.subr.bf16.mxu0 0
    %1297 = vmatpush1.bf16.msra.mxu0 0
    %1298 = vmatprep.subr.bf16.mxu0 0
    %1299 = vmatpush1.bf16.msra.mxu0 0
    %1300 = vmatprep.subr.bf16.mxu0 0
    %1301 = vmatpush1.bf16.msra.mxu0 0
    %1302 = vmatprep.subr.bf16.mxu0 0
    %1303 = vmatpush1.bf16.msra.mxu0 0
    %1304 = vmatprep.mubr.bf16.mxu0 0
    %1305 = vmatmul.mubr.bf16.gmra.mrb[0].mxu0 %v1261
    %v1306 = vpop.f32.mrb[0].mxu0
    %v1307 = vadd.f32 %v1235, %v1306
    %v1308 = vpop.f32.mrb[0].mxu0
    %v1309 = vpop.f32.mrb[0].mxu0
    %v1310 = vadd.f32 %v1238, %v1309
    %v1311 = vpop.f32.mrb[0].mxu0
    %1312 = vmatprep.mubr.bf16.mxu0 0
    %1313 = vmatmul.mubr.bf16.gmra.mrb[0].mxu0 %v1264
    %v1314 = vpop.f32.mrb[0].mxu0
    %v1315 = vadd.f32 %v1243, %v1314
    %v1316 = vpop.f32.mrb[0].mxu0
    %v1317 = vpop.f32.mrb[0].mxu0
    %v1318 = vadd.f32 %v1246, %v1317
    %v1319 = vpop.f32.mrb[0].mxu0
    %1320 = vmatprep.mubr.bf16.mxu0 0
    %1321 = vmatmul.mubr.bf16.gmra.mrb[0].mxu0 %v1267
    %v1322 = vpop.f32.mrb[0].mxu0
    %v1323 = vadd.f32 %v1251, %v1322
    %v1324 = vpop.f32.mrb[0].mxu0
    %v1325 = vpop.f32.mrb[0].mxu0
    %v1326 = vadd.f32 %v1254, %v1325
    %v1327 = vpop.f32.mrb[0].mxu0
    %1328 = vdwg.mxu0
    %v1329 = vrot.slane %v1101, 5
    %v1330 = vrot.slane %v1329, 4
    %v1331 = vrot.slane %v1102, 5
    %v1332 = vsel %vm347, %v1330, %v1331
    %v1333 = vrot.slane %v1331, 4
    %v1334 = vrot.slane %v1103, 5
    %v1335 = vsel %vm347, %v1333, %v1334
    %v1336 = vrot.slane %v1334, 4
    %v1337 = vrot.slane %v1104, 5
    %v1338 = vsel %vm347, %v1336, %v1337
    %v1339 = vrot.slane %v1105, 5
    %v1340 = vrot.slane %v1339, 4
    %v1341 = vrot.slane %v1106, 5
    %v1342 = vsel %vm347, %v1340, %v1341
    %v1343 = vrot.slane %v1341, 4
    %v1344 = vrot.slane %v1107, 5
    %v1345 = vsel %vm347, %v1343, %v1344
    %v1346 = vrot.slane %v1344, 4
    %v1347 = vrot.slane %v1108, 5
    %v1348 = vsel %vm347, %v1346, %v1347
    %s1349 = scalar_lea.vmem %s1, 28
    %v1350 = vld [vmem:[%s1349] sm:$0xf]
    %v1351 = vunpack.c.l.b16 %v1332
    %v1352 = vunpack.c.l.b16 %v1335
    %v1353 = vunpack.c.l.b16 %v1338
    %v1354 = vunpack.c.l.b16 %v1342
    %v1355 = vunpack.c.l.b16 %v1345
    %v1356 = vunpack.c.l.b16 %v1348
    %v1357 = vpack.c.b16 %v1352, %v1351
    %v1358 = vpack.c.b16 %v1354, %v1353
    %v1359 = vpack.c.b16 %v1356, %v1355
    %v1361 = vsel %vm202, %v1357, 0
    %v1364 = vsel %vm202, %v1358, 0
    %v1367 = vsel %vm202, %v1359, 0
    %v1370 = vsel %vm212, %v1350, 0
    %1372 = vmatprep.subr.bf16.mxu0 0
    %1373 = vmatpush1.bf16.msra.mxu0 %v1370
    %1374 = vmatprep.subr.bf16.mxu0 0
    %1375 = vmatpush1.bf16.msra.mxu0 0
    %1376 = vmatprep.subr.bf16.mxu0 0
    %1377 = vmatpush1.bf16.msra.mxu0 0
    %1378 = vmatprep.subr.bf16.mxu0 0
    %1379 = vmatpush1.bf16.msra.mxu0 0
    %1380 = vmatprep.subr.bf16.mxu0 0
    %1381 = vmatpush1.bf16.msra.mxu0 0
    %1382 = vmatprep.subr.bf16.mxu0 0
    %1383 = vmatpush1.bf16.msra.mxu0 0
    %1384 = vmatprep.subr.bf16.mxu0 0
    %1385 = vmatpush1.bf16.msra.mxu0 0
    %1386 = vmatprep.subr.bf16.mxu0 0
    %1387 = vmatpush1.bf16.msra.mxu0 0
    %1388 = vmatprep.subr.bf16.mxu0 0
    %1389 = vmatpush1.bf16.msra.mxu0 0
    %1390 = vmatprep.subr.bf16.mxu0 0
    %1391 = vmatpush1.bf16.msra.mxu0 0
    %1392 = vmatprep.subr.bf16.mxu0 0
    %1393 = vmatpush1.bf16.msra.mxu0 0
    %1394 = vmatprep.subr.bf16.mxu0 0
    %1395 = vmatpush1.bf16.msra.mxu0 0
    %1396 = vmatprep.subr.bf16.mxu0 0
    %1397 = vmatpush1.bf16.msra.mxu0 0
    %1398 = vmatprep.subr.bf16.mxu0 0
    %1399 = vmatpush1.bf16.msra.mxu0 0
    %1400 = vmatprep.subr.bf16.mxu0 0
    %1401 = vmatpush1.bf16.msra.mxu0 0
    %1402 = vmatprep.subr.bf16.mxu0 0
    %1403 = vmatpush1.bf16.msra.mxu0 0
    %1404 = vmatprep.mubr.bf16.mxu0 0
    %1405 = vmatmul.mubr.bf16.gmra.mrb[0].mxu0 %v1361
    %v1406 = vpop.f32.mrb[0].mxu0
    %v1407 = vadd.f32 0.0, %v1406
    %v1408 = vpop.f32.mrb[0].mxu0
    %v1409 = vpop.f32.mrb[0].mxu0
    %v1410 = vadd.f32 0.0, %v1409
    %v1411 = vpop.f32.mrb[0].mxu0
    %1412 = vmatprep.mubr.bf16.mxu0 0
    %1413 = vmatmul.mubr.bf16.gmra.mrb[0].mxu0 %v1364
    %v1414 = vpop.f32.mrb[0].mxu0
    %v1415 = vadd.f32 0.0, %v1414
    %v1416 = vpop.f32.mrb[0].mxu0
    %v1417 = vpop.f32.mrb[0].mxu0
    %v1418 = vadd.f32 0.0, %v1417
    %v1419 = vpop.f32.mrb[0].mxu0
    %1420 = vmatprep.mubr.bf16.mxu0 0
    %1421 = vmatmul.mubr.bf16.gmra.mrb[0].mxu0 %v1367
    %v1422 = vpop.f32.mrb[0].mxu0
    %v1423 = vadd.f32 0.0, %v1422
    %v1424 = vpop.f32.mrb[0].mxu0
    %v1425 = vpop.f32.mrb[0].mxu0
    %v1426 = vadd.f32 0.0, %v1425
    %v1427 = vpop.f32.mrb[0].mxu0
    %1428 = vdwg.mxu0
    %v1429 = vadd.f32 %v1307, %v1407
    %v1430 = vadd.f32 %v1310, %v1410
    %v1431 = vadd.f32 %v1315, %v1415
    %v1432 = vadd.f32 %v1318, %v1418
    %v1433 = vadd.f32 %v1323, %v1423
    %v1434 = vadd.f32 %v1326, %v1426
    %v1435 = vrot.slane %v1110, 5
    %v1436 = vrot.slane %v1113, 6
    %v1437 = vor.u32 %v1435, %v1436
    %v1438 = vrot.slane %v1437, 4
    %v1439 = vrot.slane %v1123, 5
    %v1440 = vrot.slane %v1119, 6
    %v1441 = vor.u32 %v1439, %v1440
    %v1442 = vsel %vm456, %v1438, %v1441
    %v1443 = vrot.slane %v1441, 4
    %v1444 = vrot.slane %v1133, 5
    %v1445 = vrot.slane %v1129, 6
    %v1446 = vor.u32 %v1444, %v1445
    %v1447 = vsel %vm456, %v1443, %v1446
    %v1448 = vrot.slane %v1446, 4
    %v1449 = vshrl.u32 %v1104, 16
    %v1451 = vrot.slane %v1449, 5
    %v1452 = vrot.slane %v1139, 6
    %v1453 = vor.u32 %v1451, %v1452
    %v1454 = vsel %vm456, %v1448, %v1453
    %v1455 = vrot.slane %v1144, 5
    %v1456 = vrot.slane %v1147, 6
    %v1457 = vor.u32 %v1455, %v1456
    %v1458 = vrot.slane %v1457, 4
    %v1459 = vrot.slane %v1157, 5
    %v1460 = vrot.slane %v1153, 6
    %v1461 = vor.u32 %v1459, %v1460
    %v1462 = vsel %vm456, %v1458, %v1461
    %v1463 = vrot.slane %v1461, 4
    %v1464 = vrot.slane %v1167, 5
    %v1465 = vrot.slane %v1163, 6
    %v1466 = vor.u32 %v1464, %v1465
    %v1467 = vsel %vm456, %v1463, %v1466
    %v1468 = vrot.slane %v1466, 4
    %v1469 = vshrl.u32 %v1108, 16
    %v1471 = vrot.slane %v1469, 5
    %v1472 = vrot.slane %v1173, 6
    %v1473 = vor.u32 %v1471, %v1472
    %v1474 = vsel %vm456, %v1468, %v1473
    %s1475 = scalar_lea.vmem %s1, 32
    %v1476 = vld [vmem:[%s1475] sm:$0xf]
    %v1477 = vunpack.c.l.b16 %v1442
    %v1478 = vunpack.c.l.b16 %v1447
    %v1479 = vunpack.c.l.b16 %v1454
    %v1480 = vunpack.c.l.b16 %v1462
    %v1481 = vunpack.c.l.b16 %v1467
    %v1482 = vunpack.c.l.b16 %v1474
    %v1483 = vpack.c.b16 %v1478, %v1477
    %v1484 = vpack.c.b16 %v1480, %v1479
    %v1485 = vpack.c.b16 %v1482, %v1481
    %v1487 = vsel %vm202, %v1483, 0
    %v1490 = vsel %vm202, %v1484, 0
    %v1493 = vsel %vm202, %v1485, 0
    %v1496 = vsel %vm212, %v1476, 0
    %1498 = vmatprep.subr.bf16.mxu0 0
    %1499 = vmatpush1.bf16.msra.mxu0 %v1496
    %1500 = vmatprep.subr.bf16.mxu0 0
    %1501 = vmatpush1.bf16.msra.mxu0 0
    %1502 = vmatprep.subr.bf16.mxu0 0
    %1503 = vmatpush1.bf16.msra.mxu0 0
    %1504 = vmatprep.subr.bf16.mxu0 0
    %1505 = vmatpush1.bf16.msra.mxu0 0
    %1506 = vmatprep.subr.bf16.mxu0 0
    %1507 = vmatpush1.bf16.msra.mxu0 0
    %1508 = vmatprep.subr.bf16.mxu0 0
    %1509 = vmatpush1.bf16.msra.mxu0 0
    %1510 = vmatprep.subr.bf16.mxu0 0
    %1511 = vmatpush1.bf16.msra.mxu0 0
    %1512 = vmatprep.subr.bf16.mxu0 0
    %1513 = vmatpush1.bf16.msra.mxu0 0
    %1514 = vmatprep.subr.bf16.mxu0 0
    %1515 = vmatpush1.bf16.msra.mxu0 0
    %1516 = vmatprep.subr.bf16.mxu0 0
    %1517 = vmatpush1.bf16.msra.mxu0 0
    %1518 = vmatprep.subr.bf16.mxu0 0
    %1519 = vmatpush1.bf16.msra.mxu0 0
    %1520 = vmatprep.subr.bf16.mxu0 0
    %1521 = vmatpush1.bf16.msra.mxu0 0
    %1522 = vmatprep.subr.bf16.mxu0 0
    %1523 = vmatpush1.bf16.msra.mxu0 0
    %1524 = vmatprep.subr.bf16.mxu0 0
    %1525 = vmatpush1.bf16.msra.mxu0 0
    %1526 = vmatprep.subr.bf16.mxu0 0
    %1527 = vmatpush1.bf16.msra.mxu0 0
    %1528 = vmatprep.subr.bf16.mxu0 0
    %1529 = vmatpush1.bf16.msra.mxu0 0
    %1530 = vmatprep.mubr.bf16.mxu0 0
    %1531 = vmatmul.mubr.bf16.gmra.mrb[0].mxu0 %v1487
    %v1532 = vpop.f32.mrb[0].mxu0
    %v1533 = vadd.f32 0.0, %v1532
    %v1534 = vpop.f32.mrb[0].mxu0
    %v1535 = vpop.f32.mrb[0].mxu0
    %v1536 = vadd.f32 0.0, %v1535
    %v1537 = vpop.f32.mrb[0].mxu0
    %1538 = vmatprep.mubr.bf16.mxu0 0
    %1539 = vmatmul.mubr.bf16.gmra.mrb[0].mxu0 %v1490
    %v1540 = vpop.f32.mrb[0].mxu0
    %v1541 = vadd.f32 0.0, %v1540
    %v1542 = vpop.f32.mrb[0].mxu0
    %v1543 = vpop.f32.mrb[0].mxu0
    %v1544 = vadd.f32 0.0, %v1543
    %v1545 = vpop.f32.mrb[0].mxu0
    %1546 = vmatprep.mubr.bf16.mxu0 0
    %1547 = vmatmul.mubr.bf16.gmra.mrb[0].mxu0 %v1493
    %v1548 = vpop.f32.mrb[0].mxu0
    %v1549 = vadd.f32 0.0, %v1548
    %v1550 = vpop.f32.mrb[0].mxu0
    %v1551 = vpop.f32.mrb[0].mxu0
    %v1552 = vadd.f32 0.0, %v1551
    %v1553 = vpop.f32.mrb[0].mxu0
    %1554 = vdwg.mxu0
    %v1555 = vadd.f32 %v1429, %v1533
    %v1556 = vadd.f32 %v1430, %v1536
    %v1557 = vadd.f32 %v1431, %v1541
    %v1558 = vadd.f32 %v1432, %v1544
    %v1559 = vadd.f32 %v1433, %v1549
    %v1560 = vadd.f32 %v1434, %v1552
    %v1561 = vrot.slane %v1101, 6
    %v1562 = vrot.slane %v1561, 4
    %v1563 = vrot.slane %v1102, 6
    %v1564 = vsel %vm584, %v1562, %v1563
    %v1565 = vrot.slane %v1563, 4
    %v1566 = vrot.slane %v1103, 6
    %v1567 = vsel %vm584, %v1565, %v1566
    %v1568 = vrot.slane %v1566, 4
    %v1569 = vrot.slane %v1104, 6
    %v1570 = vsel %vm584, %v1568, %v1569
    %v1571 = vrot.slane %v1105, 6
    %v1572 = vrot.slane %v1571, 4
    %v1573 = vrot.slane %v1106, 6
    %v1574 = vsel %vm584, %v1572, %v1573
    %v1575 = vrot.slane %v1573, 4
    %v1576 = vrot.slane %v1107, 6
    %v1577 = vsel %vm584, %v1575, %v1576
    %v1578 = vrot.slane %v1576, 4
    %v1579 = vrot.slane %v1108, 6
    %v1580 = vsel %vm584, %v1578, %v1579
    %s1581 = scalar_lea.vmem %s1, 36
    %v1582 = vld [vmem:[%s1581] sm:$0xf]
    %v1583 = vunpack.c.l.b16 %v1564
    %v1584 = vunpack.c.l.b16 %v1567
    %v1585 = vunpack.c.l.b16 %v1570
    %v1586 = vunpack.c.l.b16 %v1574
    %v1587 = vunpack.c.l.b16 %v1577
    %v1588 = vunpack.c.l.b16 %v1580
    %v1589 = vpack.c.b16 %v1584, %v1583
    %v1590 = vpack.c.b16 %v1586, %v1585
    %v1591 = vpack.c.b16 %v1588, %v1587
    %v1593 = vsel %vm202, %v1589, 0
    %v1596 = vsel %vm202, %v1590, 0
    %v1599 = vsel %vm202, %v1591, 0
    %v1602 = vsel %vm212, %v1582, 0
    %1604 = vmatprep.subr.bf16.mxu0 0
    %1605 = vmatpush1.bf16.msra.mxu0 %v1602
    %1606 = vmatprep.subr.bf16.mxu0 0
    %1607 = vmatpush1.bf16.msra.mxu0 0
    %1608 = vmatprep.subr.bf16.mxu0 0
    %1609 = vmatpush1.bf16.msra.mxu0 0
    %1610 = vmatprep.subr.bf16.mxu0 0
    %1611 = vmatpush1.bf16.msra.mxu0 0
    %1612 = vmatprep.subr.bf16.mxu0 0
    %1613 = vmatpush1.bf16.msra.mxu0 0
    %1614 = vmatprep.subr.bf16.mxu0 0
    %1615 = vmatpush1.bf16.msra.mxu0 0
    %1616 = vmatprep.subr.bf16.mxu0 0
    %1617 = vmatpush1.bf16.msra.mxu0 0
    %1618 = vmatprep.subr.bf16.mxu0 0
    %1619 = vmatpush1.bf16.msra.mxu0 0
    %1620 = vmatprep.subr.bf16.mxu0 0
    %1621 = vmatpush1.bf16.msra.mxu0 0
    %1622 = vmatprep.subr.bf16.mxu0 0
    %1623 = vmatpush1.bf16.msra.mxu0 0
    %1624 = vmatprep.subr.bf16.mxu0 0
    %1625 = vmatpush1.bf16.msra.mxu0 0
    %1626 = vmatprep.subr.bf16.mxu0 0
    %1627 = vmatpush1.bf16.msra.mxu0 0
    %1628 = vmatprep.subr.bf16.mxu0 0
    %1629 = vmatpush1.bf16.msra.mxu0 0
    %1630 = vmatprep.subr.bf16.mxu0 0
    %1631 = vmatpush1.bf16.msra.mxu0 0
    %1632 = vmatprep.subr.bf16.mxu0 0
    %1633 = vmatpush1.bf16.msra.mxu0 0
    %1634 = vmatprep.subr.bf16.mxu0 0
    %1635 = vmatpush1.bf16.msra.mxu0 0
    %1636 = vmatprep.mubr.bf16.mxu0 0
    %1637 = vmatmul.mubr.bf16.gmra.mrb[0].mxu0 %v1593
    %v1638 = vpop.f32.mrb[0].mxu0
    %v1639 = vadd.f32 0.0, %v1638
    %v1640 = vpop.f32.mrb[0].mxu0
    %v1641 = vpop.f32.mrb[0].mxu0
    %v1642 = vadd.f32 0.0, %v1641
    %v1643 = vpop.f32.mrb[0].mxu0
    %1644 = vmatprep.mubr.bf16.mxu0 0
    %1645 = vmatmul.mubr.bf16.gmra.mrb[0].mxu0 %v1596
    %v1646 = vpop.f32.mrb[0].mxu0
    %v1647 = vadd.f32 0.0, %v1646
    %v1648 = vpop.f32.mrb[0].mxu0
    %v1649 = vpop.f32.mrb[0].mxu0
    %v1650 = vadd.f32 0.0, %v1649
    %v1651 = vpop.f32.mrb[0].mxu0
    %1652 = vmatprep.mubr.bf16.mxu0 0
    %1653 = vmatmul.mubr.bf16.gmra.mrb[0].mxu0 %v1599
    %v1654 = vpop.f32.mrb[0].mxu0
    %v1655 = vadd.f32 0.0, %v1654
    %v1656 = vpop.f32.mrb[0].mxu0
    %v1657 = vpop.f32.mrb[0].mxu0
    %v1658 = vadd.f32 0.0, %v1657
    %v1659 = vpop.f32.mrb[0].mxu0
    %1660 = vdwg.mxu0
    %v1661 = vadd.f32 %v1555, %v1639
    %v1662 = vadd.f32 %v1556, %v1642
    %v1663 = vadd.f32 %v1557, %v1647
    %v1664 = vadd.f32 %v1558, %v1650
    %v1665 = vadd.f32 %v1559, %v1655
    %v1666 = vadd.f32 %v1560, %v1658
    %s1667 = scalar_lea.vmem %s2, 1
    %v1668 = vld [vmem:[%s1667] sm:$0x1]
    %v1670 = vlaneseq
    %v1671 = vshrl.u32 %v1670, 7
    %v1672 = vsub.s32 0, %v1671
    %v1673 = vrot.slane %v1668, %v1672
    %v1675 = vadd.f32 %v1661, %v1673
    %v1676 = vadd.f32 %v1662, %v1673
    %v1677 = vadd.f32 %v1663, %v1673
    %v1678 = vadd.f32 %v1664, %v1673
    %v1679 = vadd.f32 %v1665, %v1673
    %v1680 = vadd.f32 %v1666, %v1673
    %vm1681 = vcmp.ge.f32.partialorder %v1675, 0.0
    %vm1682 = vcmp.ge.f32.partialorder %v1676, 0.0
    %vm1683 = vcmp.ge.f32.partialorder %v1677, 0.0
    %vm1684 = vcmp.ge.f32.partialorder %v1678, 0.0
    %vm1685 = vcmp.ge.f32.partialorder %v1679, 0.0
    %vm1686 = vcmp.ge.f32.partialorder %v1680, 0.0
    %v1687 = vmul.f32 %v1675, 0.01
    %v1688 = vmul.f32 %v1676, 0.01
    %v1689 = vmul.f32 %v1677, 0.01
    %v1690 = vmul.f32 %v1678, 0.01
    %v1691 = vmul.f32 %v1679, 0.01
    %v1692 = vmul.f32 %v1680, 0.01
    %v1693 = vsel %vm1681, %v1675, %v1687
    %v1694 = vsel %vm1682, %v1676, %v1688
    %v1695 = vsel %vm1683, %v1677, %v1689
    %v1696 = vsel %vm1684, %v1678, %v1690
    %v1697 = vsel %vm1685, %v1679, %v1691
    %v1698 = vsel %vm1686, %v1680, %v1692
    %v1699 = vpack.c.bf16 %v1694, %v1693
    %v1700 = vpack.c.bf16 %v1696, %v1695
    %v1701 = vpack.c.bf16 %v1698, %v1697
    %v1705 = vunpack.c.l.b16 %v1699
    %v1706 = vunpack.c.h.b16 %v1699
    %v1707 = vunpack.c.l.b16 %v1700
    %v1708 = vunpack.c.h.b16 %v1700
    %v1709 = vunpack.c.l.b16 %v1701
    %v1710 = vunpack.c.h.b16 %v1701
    %v1711 = vpack.c.b16 %v1705, %v1705
    %v1712 = vpack.c.b16 %v1706, %v1706
    %v1713 = vpack.c.b16 %v1707, %v1707
    %v1714 = vpack.c.b16 %v1708, %v1708
    %v1715 = vpack.c.b16 %v1709, %v1709
    %v1716 = vpack.c.b16 %v1710, %v1710
    %s1717 = scalar_lea.vmem %s3, 24
    %v1718 = vld [vmem:[%s1717] sm:$0xf]
    %v1719 = vld [vmem:[%s1717 + $0x4] sm:$0xf]
    %v1721 = vshrl.u32 %v1711, 16
    %v1723 = vrot.slane %v1721, 4
    %v1724 = vshll.u32 %v1711, 16
    %v1726 = vrot.slane %v1724, 5
    %v1727 = vor.u32 %v1723, %v1726
    %v1728 = vrot.slane %v1727, 4
    %v1730 = vshll.u32 %v1712, 16
    %v1732 = vrot.slane %v1730, 5
    %v1733 = vsel %vm122, %v1728, %v1732
    %v1734 = vshrl.u32 %v1712, 16
    %v1736 = vrot.slane %v1734, 4
    %v1737 = vor.u32 %v1736, %v1732
    %v1738 = vrot.slane %v1737, 4
    %v1740 = vshll.u32 %v1713, 16
    %v1742 = vrot.slane %v1740, 5
    %v1743 = vsel %vm122, %v1738, %v1742
    %v1745 = vshrl.u32 %v1714, 16
    %v1747 = vrot.slane %v1745, 4
    %v1748 = vshll.u32 %v1714, 16
    %v1750 = vrot.slane %v1748, 5
    %v1751 = vor.u32 %v1747, %v1750
    %v1752 = vrot.slane %v1751, 4
    %v1754 = vshll.u32 %v1715, 16
    %v1756 = vrot.slane %v1754, 5
    %v1757 = vsel %vm122, %v1752, %v1756
    %v1758 = vshrl.u32 %v1715, 16
    %v1760 = vrot.slane %v1758, 4
    %v1761 = vor.u32 %v1760, %v1756
    %v1762 = vrot.slane %v1761, 4
    %v1764 = vshll.u32 %v1716, 16
    %v1766 = vrot.slane %v1764, 5
    %v1767 = vsel %vm122, %v1762, %v1766
    %s1768 = scalar_lea.vmem %s3, 32
    %v1769 = vld [vmem:[%s1768] sm:$0xf]
    %v1770 = vld [vmem:[%s1768 + $0x4] sm:$0xf]
    %v1771 = vunpack.c.l.b16 %v1733
    %v1772 = vunpack.c.l.b16 %v1743
    %v1773 = vunpack.c.l.b16 %v1757
    %v1774 = vunpack.c.l.b16 %v1767
    %v1775 = vpack.c.b16 %v1772, %v1771
    %v1776 = vpack.c.b16 %v1774, %v1773
    %v1779 = vunpack.c.l.b16 %v1769
    %v1780 = vunpack.c.l.b16 %v1770
    %v1781 = vpack.c.b16 %v1780, %v1779
    %v1784 = vsel %vm805, %v1775, 0
    %v1787 = vsel %vm805, %v1776, 0
    %1789 = vmatprep.subr.bf16.mxu0 0
    %1790 = vmatpush1.bf16.msra.mxu0 %v1781
    %1791 = vmatprep.subr.bf16.mxu0 0
    %1792 = vmatpush1.bf16.msra.mxu0 0
    %1793 = vmatprep.subr.bf16.mxu0 0
    %1794 = vmatpush1.bf16.msra.mxu0 0
    %1795 = vmatprep.subr.bf16.mxu0 0
    %1796 = vmatpush1.bf16.msra.mxu0 0
    %1797 = vmatprep.subr.bf16.mxu0 0
    %1798 = vmatpush1.bf16.msra.mxu0 0
    %1799 = vmatprep.subr.bf16.mxu0 0
    %1800 = vmatpush1.bf16.msra.mxu0 0
    %1801 = vmatprep.subr.bf16.mxu0 0
    %1802 = vmatpush1.bf16.msra.mxu0 0
    %1803 = vmatprep.subr.bf16.mxu0 0
    %1804 = vmatpush1.bf16.msra.mxu0 0
    %1805 = vmatprep.subr.bf16.mxu0 0
    %1806 = vmatpush1.bf16.msra.mxu0 0
    %1807 = vmatprep.subr.bf16.mxu0 0
    %1808 = vmatpush1.bf16.msra.mxu0 0
    %1809 = vmatprep.subr.bf16.mxu0 0
    %1810 = vmatpush1.bf16.msra.mxu0 0
    %1811 = vmatprep.subr.bf16.mxu0 0
    %1812 = vmatpush1.bf16.msra.mxu0 0
    %1813 = vmatprep.subr.bf16.mxu0 0
    %1814 = vmatpush1.bf16.msra.mxu0 0
    %1815 = vmatprep.subr.bf16.mxu0 0
    %1816 = vmatpush1.bf16.msra.mxu0 0
    %1817 = vmatprep.subr.bf16.mxu0 0
    %1818 = vmatpush1.bf16.msra.mxu0 0
    %1819 = vmatprep.subr.bf16.mxu0 0
    %1820 = vmatpush1.bf16.msra.mxu0 0
    %1821 = vmatprep.mubr.bf16.mxu0 0
    %1822 = vmatmul.mubr.bf16.gmra.mrb[0].mxu0 %v1784
    %v1823 = vpop.f32.mrb[0].mxu0
    %v1824 = vadd.f32 0.0, %v1823
    %v1825 = vpop.f32.mrb[0].mxu0
    %v1826 = vpop.f32.mrb[0].mxu0
    %v1827 = vadd.f32 0.0, %v1826
    %v1828 = vpop.f32.mrb[0].mxu0
    %1829 = vmatprep.mubr.bf16.mxu0 0
    %1830 = vmatmul.mubr.bf16.gmra.mrb[0].mxu0 %v1787
    %v1831 = vpop.f32.mrb[0].mxu0
    %v1832 = vadd.f32 0.0, %v1831
    %v1833 = vpop.f32.mrb[0].mxu0
    %v1834 = vpop.f32.mrb[0].mxu0
    %v1835 = vadd.f32 0.0, %v1834
    %v1836 = vpop.f32.mrb[0].mxu0
    %1837 = vdwg.mxu0
    %v1838 = vpack.c.b16 %v1706, %v1705
    %v1839 = vpack.c.b16 %v1709, %v1708
    %v1842 = vunpack.c.l.b16 %v1718
    %v1843 = vunpack.c.l.b16 %v1719
    %v1844 = vpack.c.b16 %v1843, %v1842
    %v1847 = vsel %vm805, %v1838, 0
    %v1850 = vsel %vm805, %v1839, 0
    %1852 = vmatprep.subr.bf16.mxu0 0
    %1853 = vmatpush1.bf16.msra.mxu0 %v1844
    %1854 = vmatprep.subr.bf16.mxu0 0
    %1855 = vmatpush1.bf16.msra.mxu0 0
    %1856 = vmatprep.subr.bf16.mxu0 0
    %1857 = vmatpush1.bf16.msra.mxu0 0
    %1858 = vmatprep.subr.bf16.mxu0 0
    %1859 = vmatpush1.bf16.msra.mxu0 0
    %1860 = vmatprep.subr.bf16.mxu0 0
    %1861 = vmatpush1.bf16.msra.mxu0 0
    %1862 = vmatprep.subr.bf16.mxu0 0
    %1863 = vmatpush1.bf16.msra.mxu0 0
    %1864 = vmatprep.subr.bf16.mxu0 0
    %1865 = vmatpush1.bf16.msra.mxu0 0
    %1866 = vmatprep.subr.bf16.mxu0 0
    %1867 = vmatpush1.bf16.msra.mxu0 0
    %1868 = vmatprep.subr.bf16.mxu0 0
    %1869 = vmatpush1.bf16.msra.mxu0 0
    %1870 = vmatprep.subr.bf16.mxu0 0
    %1871 = vmatpush1.bf16.msra.mxu0 0
    %1872 = vmatprep.subr.bf16.mxu0 0
    %1873 = vmatpush1.bf16.msra.mxu0 0
    %1874 = vmatprep.subr.bf16.mxu0 0
    %1875 = vmatpush1.bf16.msra.mxu0 0
    %1876 = vmatprep.subr.bf16.mxu0 0
    %1877 = vmatpush1.bf16.msra.mxu0 0
    %1878 = vmatprep.subr.bf16.mxu0 0
    %1879 = vmatpush1.bf16.msra.mxu0 0
    %1880 = vmatprep.subr.bf16.mxu0 0
    %1881 = vmatpush1.bf16.msra.mxu0 0
    %1882 = vmatprep.subr.bf16.mxu0 0
    %1883 = vmatpush1.bf16.msra.mxu0 0
    %1884 = vmatprep.mubr.bf16.mxu0 0
    %1885 = vmatmul.mubr.bf16.gmra.mrb[0].mxu0 %v1847
    %v1886 = vpop.f32.mrb[0].mxu0
    %v1887 = vadd.f32 %v1824, %v1886
    %v1888 = vpop.f32.mrb[0].mxu0
    %v1889 = vpop.f32.mrb[0].mxu0
    %v1890 = vadd.f32 %v1827, %v1889
    %v1891 = vpop.f32.mrb[0].mxu0
    %1892 = vmatprep.mubr.bf16.mxu0 0
    %1893 = vmatmul.mubr.bf16.gmra.mrb[0].mxu0 %v1850
    %v1894 = vpop.f32.mrb[0].mxu0
    %v1895 = vadd.f32 %v1832, %v1894
    %v1896 = vpop.f32.mrb[0].mxu0
    %v1897 = vpop.f32.mrb[0].mxu0
    %v1898 = vadd.f32 %v1835, %v1897
    %v1899 = vpop.f32.mrb[0].mxu0
    %1900 = vdwg.mxu0
    %v1901 = vrot.slane %v1711, 5
    %v1902 = vrot.slane %v1901, 4
    %v1903 = vrot.slane %v1712, 5
    %v1904 = vsel %vm347, %v1902, %v1903
    %v1905 = vrot.slane %v1903, 4
    %v1906 = vrot.slane %v1713, 5
    %v1907 = vsel %vm347, %v1905, %v1906
    %v1908 = vrot.slane %v1714, 5
    %v1909 = vrot.slane %v1908, 4
    %v1910 = vrot.slane %v1715, 5
    %v1911 = vsel %vm347, %v1909, %v1910
    %v1912 = vrot.slane %v1910, 4
    %v1913 = vrot.slane %v1716, 5
    %v1914 = vsel %vm347, %v1912, %v1913
    %s1915 = scalar_lea.vmem %s3, 40
    %v1916 = vld [vmem:[%s1915] sm:$0xf]
    %v1917 = vld [vmem:[%s1915 + $0x4] sm:$0xf]
    %v1918 = vunpack.c.l.b16 %v1904
    %v1919 = vunpack.c.l.b16 %v1907
    %v1920 = vunpack.c.l.b16 %v1911
    %v1921 = vunpack.c.l.b16 %v1914
    %v1922 = vpack.c.b16 %v1919, %v1918
    %v1923 = vpack.c.b16 %v1921, %v1920
    %v1926 = vunpack.c.l.b16 %v1916
    %v1927 = vunpack.c.l.b16 %v1917
    %v1928 = vpack.c.b16 %v1927, %v1926
    %v1931 = vsel %vm805, %v1922, 0
    %v1934 = vsel %vm805, %v1923, 0
    %1936 = vmatprep.subr.bf16.mxu0 0
    %1937 = vmatpush1.bf16.msra.mxu0 %v1928
    %1938 = vmatprep.subr.bf16.mxu0 0
    %1939 = vmatpush1.bf16.msra.mxu0 0
    %1940 = vmatprep.subr.bf16.mxu0 0
    %1941 = vmatpush1.bf16.msra.mxu0 0
    %1942 = vmatprep.subr.bf16.mxu0 0
    %1943 = vmatpush1.bf16.msra.mxu0 0
    %1944 = vmatprep.subr.bf16.mxu0 0
    %1945 = vmatpush1.bf16.msra.mxu0 0
    %1946 = vmatprep.subr.bf16.mxu0 0
    %1947 = vmatpush1.bf16.msra.mxu0 0
    %1948 = vmatprep.subr.bf16.mxu0 0
    %1949 = vmatpush1.bf16.msra.mxu0 0
    %1950 = vmatprep.subr.bf16.mxu0 0
    %1951 = vmatpush1.bf16.msra.mxu0 0
    %1952 = vmatprep.subr.bf16.mxu0 0
    %1953 = vmatpush1.bf16.msra.mxu0 0
    %1954 = vmatprep.subr.bf16.mxu0 0
    %1955 = vmatpush1.bf16.msra.mxu0 0
    %1956 = vmatprep.subr.bf16.mxu0 0
    %1957 = vmatpush1.bf16.msra.mxu0 0
    %1958 = vmatprep.subr.bf16.mxu0 0
    %1959 = vmatpush1.bf16.msra.mxu0 0
    %1960 = vmatprep.subr.bf16.mxu0 0
    %1961 = vmatpush1.bf16.msra.mxu0 0
    %1962 = vmatprep.subr.bf16.mxu0 0
    %1963 = vmatpush1.bf16.msra.mxu0 0
    %1964 = vmatprep.subr.bf16.mxu0 0
    %1965 = vmatpush1.bf16.msra.mxu0 0
    %1966 = vmatprep.subr.bf16.mxu0 0
    %1967 = vmatpush1.bf16.msra.mxu0 0
    %1968 = vmatprep.mubr.bf16.mxu0 0
    %1969 = vmatmul.mubr.bf16.gmra.mrb[0].mxu0 %v1931
    %v1970 = vpop.f32.mrb[0].mxu0
    %v1971 = vadd.f32 0.0, %v1970
    %v1972 = vpop.f32.mrb[0].mxu0
    %v1973 = vpop.f32.mrb[0].mxu0
    %v1974 = vadd.f32 0.0, %v1973
    %v1975 = vpop.f32.mrb[0].mxu0
    %1976 = vmatprep.mubr.bf16.mxu0 0
    %1977 = vmatmul.mubr.bf16.gmra.mrb[0].mxu0 %v1934
    %v1978 = vpop.f32.mrb[0].mxu0
    %v1979 = vadd.f32 0.0, %v1978
    %v1980 = vpop.f32.mrb[0].mxu0
    %v1981 = vpop.f32.mrb[0].mxu0
    %v1982 = vadd.f32 0.0, %v1981
    %v1983 = vpop.f32.mrb[0].mxu0
    %1984 = vdwg.mxu0
    %v1985 = vadd.f32 %v1887, %v1971
    %v1986 = vadd.f32 %v1890, %v1974
    %v1987 = vadd.f32 %v1895, %v1979
    %v1988 = vadd.f32 %v1898, %v1982
    %s1989 = scalar_lea.vmem %s4, 1
    %v1990 = vld [vmem:[%s1989] sm:$0x1]
    %v1992 = vlaneseq
    %v1993 = vshrl.u32 %v1992, 7
    %v1994 = vsub.s32 0, %v1993
    %v1995 = vrot.slane %v1990, %v1994
    %v1997 = vadd.f32 %v1985, %v1995
    %v1998 = vadd.f32 %v1986, %v1995
    %v1999 = vadd.f32 %v1987, %v1995
    %v2000 = vadd.f32 %v1988, %v1995
    %v2001 = vtanh.pop %v1997
    %v2002 = vtanh.pop %v1998
    %v2003 = vtanh.pop %v1999
    %v2004 = vtanh.pop %v2000
    %v2005 = vmul.f32 %v2001, 1.442695
    %v2006 = vpow.pop %v2005
    %v2007 = vmul.f32 %v2002, 1.442695
    %v2008 = vpow.pop %v2007
    %v2009 = vmul.f32 %v2003, 1.442695
    %v2010 = vpow.pop %v2009
    %v2011 = vmul.f32 %v2004, 1.442695
    %v2012 = vpow.pop %v2011
    %v2013 = vmul.f32 %v33, %v2006
    %v2014 = vmul.f32 %v35, %v2008
    %v2015 = vmul.f32 %v37, %v2010
    %v2016 = vmul.f32 %v39, %v2012
    %v2017 = vpack.c.bf16 %v1036, %v1035
    %v2018 = vpack.c.bf16 %v1038, %v1037
    %v2020 = vpack.i.b16 %v2017, %v2017
    %v2022 = vlaneseq
    %v2023 = vshrl.u32 %v2022, 7
    %v2024 = vsub.s32 0, %v2023
    %v2025 = vrot.slane %v2020, %v2024
    %v2027 = vpack.i.b16 %v2018, %v2018
    %v2029 = vlaneseq
    %v2030 = vshrl.u32 %v2029, 7
    %v2031 = vsub.s32 0, %v2030
    %v2032 = vrot.slane %v2027, %v2031
    %v2033 = vshrl.u32 %v2017, 16
    %v2034 = vpack.i.b16 %v2033, %v2033
    %v2036 = vlaneseq
    %v2037 = vshrl.u32 %v2036, 7
    %v2038 = vsub.s32 7, %v2037
    %v2039 = vrot.slane %v2034, %v2038
    %v2040 = vshrl.u32 %v2018, 16
    %v2041 = vpack.i.b16 %v2040, %v2040
    %v2043 = vlaneseq
    %v2044 = vshrl.u32 %v2043, 7
    %v2045 = vsub.s32 7, %v2044
    %v2046 = vrot.slane %v2041, %v2045
    %v2048 = vrot.slane %v2033, 6
    %v2049 = vshll.u32 %v2017, 16
    %v2051 = vrot.slane %v2049, 7
    %v2052 = vor.u32 %v2048, %v2051
    %v2054 = vrot.slane %v2040, 6
    %v2055 = vshll.u32 %v2018, 16
    %v2057 = vrot.slane %v2055, 7
    %v2058 = vor.u32 %v2054, %v2057
    %v2061 = vsel %vm94, %v2025, %v2052
    %v2062 = vsel %vm94, %v2032, %v2058
    %v2063 = vsel %vm94, %v2052, %v2039
    %v2064 = vsel %vm94, %v2058, %v2046
    %v2069 = vunpack.c.l.b16 %v2061
    %v2070 = vunpack.c.h.b16 %v2061
    %v2071 = vunpack.c.l.b16 %v2063
    %v2072 = vunpack.c.l.b16 %v2062
    %v2073 = vunpack.c.h.b16 %v2062
    %v2074 = vunpack.c.l.b16 %v2064
    %s2075 = scalar_lea.vmem %s1, 40
    %v2076 = vld [vmem:[%s2075] sm:$0xf]
    %v2077 = vunpack.c.h.b16 %v2063
    %v2078 = vunpack.c.h.b16 %v2064
    %v2079 = vpack.c.b16 %v2069, %v2069
    %v2080 = vpack.c.b16 %v2070, %v2070
    %v2081 = vpack.c.b16 %v2071, %v2071
    %v2082 = vpack.c.b16 %v2077, %v2077
    %v2083 = vpack.c.b16 %v2072, %v2072
    %v2084 = vpack.c.b16 %v2073, %v2073
    %v2085 = vpack.c.b16 %v2074, %v2074
    %v2086 = vpack.c.b16 %v2078, %v2078
    %v2088 = vshrl.u32 %v2079, 16
    %v2090 = vrot.slane %v2088, 4
    %v2091 = vshll.u32 %v2079, 16
    %v2093 = vrot.slane %v2091, 5
    %v2094 = vor.u32 %v2090, %v2093
    %v2095 = vrot.slane %v2094, 4
    %v2097 = vshll.u32 %v2080, 16
    %v2099 = vrot.slane %v2097, 5
    %v2100 = vsel %vm122, %v2095, %v2099
    %v2101 = vshrl.u32 %v2080, 16
    %v2103 = vrot.slane %v2101, 4
    %v2104 = vor.u32 %v2103, %v2099
    %v2105 = vrot.slane %v2104, 4
    %v2107 = vshll.u32 %v2081, 16
    %v2109 = vrot.slane %v2107, 5
    %v2110 = vsel %vm122, %v2105, %v2109
    %v2111 = vshrl.u32 %v2081, 16
    %v2113 = vrot.slane %v2111, 4
    %v2114 = vor.u32 %v2113, %v2109
    %v2115 = vrot.slane %v2114, 4
    %v2117 = vshll.u32 %v2082, 16
    %v2119 = vrot.slane %v2117, 5
    %v2120 = vsel %vm122, %v2115, %v2119
    %v2122 = vshrl.u32 %v2083, 16
    %v2124 = vrot.slane %v2122, 4
    %v2125 = vshll.u32 %v2083, 16
    %v2127 = vrot.slane %v2125, 5
    %v2128 = vor.u32 %v2124, %v2127
    %v2129 = vrot.slane %v2128, 4
    %v2131 = vshll.u32 %v2084, 16
    %v2133 = vrot.slane %v2131, 5
    %v2134 = vsel %vm122, %v2129, %v2133
    %v2135 = vshrl.u32 %v2084, 16
    %v2137 = vrot.slane %v2135, 4
    %v2138 = vor.u32 %v2137, %v2133
    %v2139 = vrot.slane %v2138, 4
    %v2141 = vshll.u32 %v2085, 16
    %v2143 = vrot.slane %v2141, 5
    %v2144 = vsel %vm122, %v2139, %v2143
    %v2145 = vshrl.u32 %v2085, 16
    %v2147 = vrot.slane %v2145, 4
    %v2148 = vor.u32 %v2147, %v2143
    %v2149 = vrot.slane %v2148, 4
    %v2151 = vshll.u32 %v2086, 16
    %v2153 = vrot.slane %v2151, 5
    %v2154 = vsel %vm122, %v2149, %v2153
    %s2155 = scalar_lea.vmem %s1, 44
    %v2156 = vld [vmem:[%s2155] sm:$0xf]
    %v2157 = vunpack.c.l.b16 %v2100
    %v2158 = vunpack.c.l.b16 %v2110
    %v2159 = vunpack.c.l.b16 %v2120
    %v2160 = vunpack.c.l.b16 %v2134
    %v2161 = vunpack.c.l.b16 %v2144
    %v2162 = vunpack.c.l.b16 %v2154
    %v2163 = vpack.c.b16 %v2158, %v2157
    %v2164 = vpack.c.b16 %v2160, %v2159
    %v2165 = vpack.c.b16 %v2162, %v2161
    %v2167 = vsel %vm202, %v2163, 0
    %v2170 = vsel %vm202, %v2164, 0
    %v2173 = vsel %vm202, %v2165, 0
    %v2176 = vsel %vm212, %v2156, 0
    %2178 = vmatprep.subr.bf16.mxu0 0
    %2179 = vmatpush1.bf16.msra.mxu0 %v2176
    %2180 = vmatprep.subr.bf16.mxu0 0
    %2181 = vmatpush1.bf16.msra.mxu0 0
    %2182 = vmatprep.subr.bf16.mxu0 0
    %2183 = vmatpush1.bf16.msra.mxu0 0
    %2184 = vmatprep.subr.bf16.mxu0 0
    %2185 = vmatpush1.bf16.msra.mxu0 0
    %2186 = vmatprep.subr.bf16.mxu0 0
    %2187 = vmatpush1.bf16.msra.mxu0 0
    %2188 = vmatprep.subr.bf16.mxu0 0
    %2189 = vmatpush1.bf16.msra.mxu0 0
    %2190 = vmatprep.subr.bf16.mxu0 0
    %2191 = vmatpush1.bf16.msra.mxu0 0
    %2192 = vmatprep.subr.bf16.mxu0 0
    %2193 = vmatpush1.bf16.msra.mxu0 0
    %2194 = vmatprep.subr.bf16.mxu0 0
    %2195 = vmatpush1.bf16.msra.mxu0 0
    %2196 = vmatprep.subr.bf16.mxu0 0
    %2197 = vmatpush1.bf16.msra.mxu0 0
    %2198 = vmatprep.subr.bf16.mxu0 0
    %2199 = vmatpush1.bf16.msra.mxu0 0
    %2200 = vmatprep.subr.bf16.mxu0 0
    %2201 = vmatpush1.bf16.msra.mxu0 0
    %2202 = vmatprep.subr.bf16.mxu0 0
    %2203 = vmatpush1.bf16.msra.mxu0 0
    %2204 = vmatprep.subr.bf16.mxu0 0
    %2205 = vmatpush1.bf16.msra.mxu0 0
    %2206 = vmatprep.subr.bf16.mxu0 0
    %2207 = vmatpush1.bf16.msra.mxu0 0
    %2208 = vmatprep.subr.bf16.mxu0 0
    %2209 = vmatpush1.bf16.msra.mxu0 0
    %2210 = vmatprep.mubr.bf16.mxu0 0
    %2211 = vmatmul.mubr.bf16.gmra.mrb[0].mxu0 %v2167
    %v2212 = vpop.f32.mrb[0].mxu0
    %v2213 = vadd.f32 0.0, %v2212
    %v2214 = vpop.f32.mrb[0].mxu0
    %v2215 = vpop.f32.mrb[0].mxu0
    %v2216 = vadd.f32 0.0, %v2215
    %v2217 = vpop.f32.mrb[0].mxu0
    %2218 = vmatprep.mubr.bf16.mxu0 0
    %2219 = vmatmul.mubr.bf16.gmra.mrb[0].mxu0 %v2170
    %v2220 = vpop.f32.mrb[0].mxu0
    %v2221 = vadd.f32 0.0, %v2220
    %v2222 = vpop.f32.mrb[0].mxu0
    %v2223 = vpop.f32.mrb[0].mxu0
    %v2224 = vadd.f32 0.0, %v2223
    %v2225 = vpop.f32.mrb[0].mxu0
    %2226 = vmatprep.mubr.bf16.mxu0 0
    %2227 = vmatmul.mubr.bf16.gmra.mrb[0].mxu0 %v2173
    %v2228 = vpop.f32.mrb[0].mxu0
    %v2229 = vadd.f32 0.0, %v2228
    %v2230 = vpop.f32.mrb[0].mxu0
    %v2231 = vpop.f32.mrb[0].mxu0
    %v2232 = vadd.f32 0.0, %v2231
    %v2233 = vpop.f32.mrb[0].mxu0
    %2234 = vdwg.mxu0
    %v2235 = vpack.c.b16 %v2070, %v2069
    %v2236 = vpack.c.b16 %v2072, %v2071
    %v2237 = vpack.c.b16 %v2074, %v2073
    %v2239 = vsel %vm202, %v2235, 0
    %v2242 = vsel %vm202, %v2236, 0
    %v2245 = vsel %vm202, %v2237, 0
    %v2248 = vsel %vm212, %v2076, 0
    %2250 = vmatprep.subr.bf16.mxu0 0
    %2251 = vmatpush1.bf16.msra.mxu0 %v2248
    %2252 = vmatprep.subr.bf16.mxu0 0
    %2253 = vmatpush1.bf16.msra.mxu0 0
    %2254 = vmatprep.subr.bf16.mxu0 0
    %2255 = vmatpush1.bf16.msra.mxu0 0
    %2256 = vmatprep.subr.bf16.mxu0 0
    %2257 = vmatpush1.bf16.msra.mxu0 0
    %2258 = vmatprep.subr.bf16.mxu0 0
    %2259 = vmatpush1.bf16.msra.mxu0 0
    %2260 = vmatprep.subr.bf16.mxu0 0
    %2261 = vmatpush1.bf16.msra.mxu0 0
    %2262 = vmatprep.subr.bf16.mxu0 0
    %2263 = vmatpush1.bf16.msra.mxu0 0
    %2264 = vmatprep.subr.bf16.mxu0 0
    %2265 = vmatpush1.bf16.msra.mxu0 0
    %2266 = vmatprep.subr.bf16.mxu0 0
    %2267 = vmatpush1.bf16.msra.mxu0 0
    %2268 = vmatprep.subr.bf16.mxu0 0
    %2269 = vmatpush1.bf16.msra.mxu0 0
    %2270 = vmatprep.subr.bf16.mxu0 0
    %2271 = vmatpush1.bf16.msra.mxu0 0
    %2272 = vmatprep.subr.bf16.mxu0 0
    %2273 = vmatpush1.bf16.msra.mxu0 0
    %2274 = vmatprep.subr.bf16.mxu0 0
    %2275 = vmatpush1.bf16.msra.mxu0 0
    %2276 = vmatprep.subr.bf16.mxu0 0
    %2277 = vmatpush1.bf16.msra.mxu0 0
    %2278 = vmatprep.subr.bf16.mxu0 0
    %2279 = vmatpush1.bf16.msra.mxu0 0
    %2280 = vmatprep.subr.bf16.mxu0 0
    %2281 = vmatpush1.bf16.msra.mxu0 0
    %2282 = vmatprep.mubr.bf16.mxu0 0
    %2283 = vmatmul.mubr.bf16.gmra.mrb[0].mxu0 %v2239
    %v2284 = vpop.f32.mrb[0].mxu0
    %v2285 = vadd.f32 %v2213, %v2284
    %v2286 = vpop.f32.mrb[0].mxu0
    %v2287 = vpop.f32.mrb[0].mxu0
    %v2288 = vadd.f32 %v2216, %v2287
    %v2289 = vpop.f32.mrb[0].mxu0
    %2290 = vmatprep.mubr.bf16.mxu0 0
    %2291 = vmatmul.mubr.bf16.gmra.mrb[0].mxu0 %v2242
    %v2292 = vpop.f32.mrb[0].mxu0
    %v2293 = vadd.f32 %v2221, %v2292
    %v2294 = vpop.f32.mrb[0].mxu0
    %v2295 = vpop.f32.mrb[0].mxu0
    %v2296 = vadd.f32 %v2224, %v2295
    %v2297 = vpop.f32.mrb[0].mxu0
    %2298 = vmatprep.mubr.bf16.mxu0 0
    %2299 = vmatmul.mubr.bf16.gmra.mrb[0].mxu0 %v2245
    %v2300 = vpop.f32.mrb[0].mxu0
    %v2301 = vadd.f32 %v2229, %v2300
    %v2302 = vpop.f32.mrb[0].mxu0
    %v2303 = vpop.f32.mrb[0].mxu0
    %v2304 = vadd.f32 %v2232, %v2303
    %v2305 = vpop.f32.mrb[0].mxu0
    %2306 = vdwg.mxu0
    %v2307 = vrot.slane %v2079, 5
    %v2308 = vrot.slane %v2307, 4
    %v2309 = vrot.slane %v2080, 5
    %v2310 = vsel %vm347, %v2308, %v2309
    %v2311 = vrot.slane %v2309, 4
    %v2312 = vrot.slane %v2081, 5
    %v2313 = vsel %vm347, %v2311, %v2312
    %v2314 = vrot.slane %v2312, 4
    %v2315 = vrot.slane %v2082, 5
    %v2316 = vsel %vm347, %v2314, %v2315
    %v2317 = vrot.slane %v2083, 5
    %v2318 = vrot.slane %v2317, 4
    %v2319 = vrot.slane %v2084, 5
    %v2320 = vsel %vm347, %v2318, %v2319
    %v2321 = vrot.slane %v2319, 4
    %v2322 = vrot.slane %v2085, 5
    %v2323 = vsel %vm347, %v2321, %v2322
    %v2324 = vrot.slane %v2322, 4
    %v2325 = vrot.slane %v2086, 5
    %v2326 = vsel %vm347, %v2324, %v2325
    %s2327 = scalar_lea.vmem %s1, 48
    %v2328 = vld [vmem:[%s2327] sm:$0xf]
    %v2329 = vunpack.c.l.b16 %v2310
    %v2330 = vunpack.c.l.b16 %v2313
    %v2331 = vunpack.c.l.b16 %v2316
    %v2332 = vunpack.c.l.b16 %v2320
    %v2333 = vunpack.c.l.b16 %v2323
    %v2334 = vunpack.c.l.b16 %v2326
    %v2335 = vpack.c.b16 %v2330, %v2329
    %v2336 = vpack.c.b16 %v2332, %v2331
    %v2337 = vpack.c.b16 %v2334, %v2333
    %v2339 = vsel %vm202, %v2335, 0
    %v2342 = vsel %vm202, %v2336, 0
    %v2345 = vsel %vm202, %v2337, 0
    %v2348 = vsel %vm212, %v2328, 0
    %2350 = vmatprep.subr.bf16.mxu0 0
    %2351 = vmatpush1.bf16.msra.mxu0 %v2348
    %2352 = vmatprep.subr.bf16.mxu0 0
    %2353 = vmatpush1.bf16.msra.mxu0 0
    %2354 = vmatprep.subr.bf16.mxu0 0
    %2355 = vmatpush1.bf16.msra.mxu0 0
    %2356 = vmatprep.subr.bf16.mxu0 0
    %2357 = vmatpush1.bf16.msra.mxu0 0
    %2358 = vmatprep.subr.bf16.mxu0 0
    %2359 = vmatpush1.bf16.msra.mxu0 0
    %2360 = vmatprep.subr.bf16.mxu0 0
    %2361 = vmatpush1.bf16.msra.mxu0 0
    %2362 = vmatprep.subr.bf16.mxu0 0
    %2363 = vmatpush1.bf16.msra.mxu0 0
    %2364 = vmatprep.subr.bf16.mxu0 0
    %2365 = vmatpush1.bf16.msra.mxu0 0
    %2366 = vmatprep.subr.bf16.mxu0 0
    %2367 = vmatpush1.bf16.msra.mxu0 0
    %2368 = vmatprep.subr.bf16.mxu0 0
    %2369 = vmatpush1.bf16.msra.mxu0 0
    %2370 = vmatprep.subr.bf16.mxu0 0
    %2371 = vmatpush1.bf16.msra.mxu0 0
    %2372 = vmatprep.subr.bf16.mxu0 0
    %2373 = vmatpush1.bf16.msra.mxu0 0
    %2374 = vmatprep.subr.bf16.mxu0 0
    %2375 = vmatpush1.bf16.msra.mxu0 0
    %2376 = vmatprep.subr.bf16.mxu0 0
    %2377 = vmatpush1.bf16.msra.mxu0 0
    %2378 = vmatprep.subr.bf16.mxu0 0
    %2379 = vmatpush1.bf16.msra.mxu0 0
    %2380 = vmatprep.subr.bf16.mxu0 0
    %2381 = vmatpush1.bf16.msra.mxu0 0
    %2382 = vmatprep.mubr.bf16.mxu0 0
    %2383 = vmatmul.mubr.bf16.gmra.mrb[0].mxu0 %v2339
    %v2384 = vpop.f32.mrb[0].mxu0
    %v2385 = vadd.f32 0.0, %v2384
    %v2386 = vpop.f32.mrb[0].mxu0
    %v2387 = vpop.f32.mrb[0].mxu0
    %v2388 = vadd.f32 0.0, %v2387
    %v2389 = vpop.f32.mrb[0].mxu0
    %2390 = vmatprep.mubr.bf16.mxu0 0
    %2391 = vmatmul.mubr.bf16.gmra.mrb[0].mxu0 %v2342
    %v2392 = vpop.f32.mrb[0].mxu0
    %v2393 = vadd.f32 0.0, %v2392
    %v2394 = vpop.f32.mrb[0].mxu0
    %v2395 = vpop.f32.mrb[0].mxu0
    %v2396 = vadd.f32 0.0, %v2395
    %v2397 = vpop.f32.mrb[0].mxu0
    %2398 = vmatprep.mubr.bf16.mxu0 0
    %2399 = vmatmul.mubr.bf16.gmra.mrb[0].mxu0 %v2345
    %v2400 = vpop.f32.mrb[0].mxu0
    %v2401 = vadd.f32 0.0, %v2400
    %v2402 = vpop.f32.mrb[0].mxu0
    %v2403 = vpop.f32.mrb[0].mxu0
    %v2404 = vadd.f32 0.0, %v2403
    %v2405 = vpop.f32.mrb[0].mxu0
    %2406 = vdwg.mxu0
    %v2407 = vadd.f32 %v2285, %v2385
    %v2408 = vadd.f32 %v2288, %v2388
    %v2409 = vadd.f32 %v2293, %v2393
    %v2410 = vadd.f32 %v2296, %v2396
    %v2411 = vadd.f32 %v2301, %v2401
    %v2412 = vadd.f32 %v2304, %v2404
    %v2413 = vrot.slane %v2088, 5
    %v2414 = vrot.slane %v2091, 6
    %v2415 = vor.u32 %v2413, %v2414
    %v2416 = vrot.slane %v2415, 4
    %v2417 = vrot.slane %v2101, 5
    %v2418 = vrot.slane %v2097, 6
    %v2419 = vor.u32 %v2417, %v2418
    %v2420 = vsel %vm456, %v2416, %v2419
    %v2421 = vrot.slane %v2419, 4
    %v2422 = vrot.slane %v2111, 5
    %v2423 = vrot.slane %v2107, 6
    %v2424 = vor.u32 %v2422, %v2423
    %v2425 = vsel %vm456, %v2421, %v2424
    %v2426 = vrot.slane %v2424, 4
    %v2427 = vshrl.u32 %v2082, 16
    %v2429 = vrot.slane %v2427, 5
    %v2430 = vrot.slane %v2117, 6
    %v2431 = vor.u32 %v2429, %v2430
    %v2432 = vsel %vm456, %v2426, %v2431
    %v2433 = vrot.slane %v2122, 5
    %v2434 = vrot.slane %v2125, 6
    %v2435 = vor.u32 %v2433, %v2434
    %v2436 = vrot.slane %v2435, 4
    %v2437 = vrot.slane %v2135, 5
    %v2438 = vrot.slane %v2131, 6
    %v2439 = vor.u32 %v2437, %v2438
    %v2440 = vsel %vm456, %v2436, %v2439
    %v2441 = vrot.slane %v2439, 4
    %v2442 = vrot.slane %v2145, 5
    %v2443 = vrot.slane %v2141, 6
    %v2444 = vor.u32 %v2442, %v2443
    %v2445 = vsel %vm456, %v2441, %v2444
    %v2446 = vrot.slane %v2444, 4
    %v2447 = vshrl.u32 %v2086, 16
    %v2449 = vrot.slane %v2447, 5
    %v2450 = vrot.slane %v2151, 6
    %v2451 = vor.u32 %v2449, %v2450
    %v2452 = vsel %vm456, %v2446, %v2451
    %s2453 = scalar_lea.vmem %s1, 52
    %v2454 = vld [vmem:[%s2453] sm:$0xf]
    %v2455 = vunpack.c.l.b16 %v2420
    %v2456 = vunpack.c.l.b16 %v2425
    %v2457 = vunpack.c.l.b16 %v2432
    %v2458 = vunpack.c.l.b16 %v2440
    %v2459 = vunpack.c.l.b16 %v2445
    %v2460 = vunpack.c.l.b16 %v2452
    %v2461 = vpack.c.b16 %v2456, %v2455
    %v2462 = vpack.c.b16 %v2458, %v2457
    %v2463 = vpack.c.b16 %v2460, %v2459
    %v2465 = vsel %vm202, %v2461, 0
    %v2468 = vsel %vm202, %v2462, 0
    %v2471 = vsel %vm202, %v2463, 0
    %v2474 = vsel %vm212, %v2454, 0
    %2476 = vmatprep.subr.bf16.mxu0 0
    %2477 = vmatpush1.bf16.msra.mxu0 %v2474
    %2478 = vmatprep.subr.bf16.mxu0 0
    %2479 = vmatpush1.bf16.msra.mxu0 0
    %2480 = vmatprep.subr.bf16.mxu0 0
    %2481 = vmatpush1.bf16.msra.mxu0 0
    %2482 = vmatprep.subr.bf16.mxu0 0
    %2483 = vmatpush1.bf16.msra.mxu0 0
    %2484 = vmatprep.subr.bf16.mxu0 0
    %2485 = vmatpush1.bf16.msra.mxu0 0
    %2486 = vmatprep.subr.bf16.mxu0 0
    %2487 = vmatpush1.bf16.msra.mxu0 0
    %2488 = vmatprep.subr.bf16.mxu0 0
    %2489 = vmatpush1.bf16.msra.mxu0 0
    %2490 = vmatprep.subr.bf16.mxu0 0
    %2491 = vmatpush1.bf16.msra.mxu0 0
    %2492 = vmatprep.subr.bf16.mxu0 0
    %2493 = vmatpush1.bf16.msra.mxu0 0
    %2494 = vmatprep.subr.bf16.mxu0 0
    %2495 = vmatpush1.bf16.msra.mxu0 0
    %2496 = vmatprep.subr.bf16.mxu0 0
    %2497 = vmatpush1.bf16.msra.mxu0 0
    %2498 = vmatprep.subr.bf16.mxu0 0
    %2499 = vmatpush1.bf16.msra.mxu0 0
    %2500 = vmatprep.subr.bf16.mxu0 0
    %2501 = vmatpush1.bf16.msra.mxu0 0
    %2502 = vmatprep.subr.bf16.mxu0 0
    %2503 = vmatpush1.bf16.msra.mxu0 0
    %2504 = vmatprep.subr.bf16.mxu0 0
    %2505 = vmatpush1.bf16.msra.mxu0 0
    %2506 = vmatprep.subr.bf16.mxu0 0
    %2507 = vmatpush1.bf16.msra.mxu0 0
    %2508 = vmatprep.mubr.bf16.mxu0 0
    %2509 = vmatmul.mubr.bf16.gmra.mrb[0].mxu0 %v2465
    %v2510 = vpop.f32.mrb[0].mxu0
    %v2511 = vadd.f32 0.0, %v2510
    %v2512 = vpop.f32.mrb[0].mxu0
    %v2513 = vpop.f32.mrb[0].mxu0
    %v2514 = vadd.f32 0.0, %v2513
    %v2515 = vpop.f32.mrb[0].mxu0
    %2516 = vmatprep.mubr.bf16.mxu0 0
    %2517 = vmatmul.mubr.bf16.gmra.mrb[0].mxu0 %v2468
    %v2518 = vpop.f32.mrb[0].mxu0
    %v2519 = vadd.f32 0.0, %v2518
    %v2520 = vpop.f32.mrb[0].mxu0
    %v2521 = vpop.f32.mrb[0].mxu0
    %v2522 = vadd.f32 0.0, %v2521
    %v2523 = vpop.f32.mrb[0].mxu0
    %2524 = vmatprep.mubr.bf16.mxu0 0
    %2525 = vmatmul.mubr.bf16.gmra.mrb[0].mxu0 %v2471
    %v2526 = vpop.f32.mrb[0].mxu0
    %v2527 = vadd.f32 0.0, %v2526
    %v2528 = vpop.f32.mrb[0].mxu0
    %v2529 = vpop.f32.mrb[0].mxu0
    %v2530 = vadd.f32 0.0, %v2529
    %v2531 = vpop.f32.mrb[0].mxu0
    %2532 = vdwg.mxu0
    %v2533 = vadd.f32 %v2407, %v2511
    %v2534 = vadd.f32 %v2408, %v2514
    %v2535 = vadd.f32 %v2409, %v2519
    %v2536 = vadd.f32 %v2410, %v2522
    %v2537 = vadd.f32 %v2411, %v2527
    %v2538 = vadd.f32 %v2412, %v2530
    %v2539 = vrot.slane %v2079, 6
    %v2540 = vrot.slane %v2539, 4
    %v2541 = vrot.slane %v2080, 6
    %v2542 = vsel %vm584, %v2540, %v2541
    %v2543 = vrot.slane %v2541, 4
    %v2544 = vrot.slane %v2081, 6
    %v2545 = vsel %vm584, %v2543, %v2544
    %v2546 = vrot.slane %v2544, 4
    %v2547 = vrot.slane %v2082, 6
    %v2548 = vsel %vm584, %v2546, %v2547
    %v2549 = vrot.slane %v2083, 6
    %v2550 = vrot.slane %v2549, 4
    %v2551 = vrot.slane %v2084, 6
    %v2552 = vsel %vm584, %v2550, %v2551
    %v2553 = vrot.slane %v2551, 4
    %v2554 = vrot.slane %v2085, 6
    %v2555 = vsel %vm584, %v2553, %v2554
    %v2556 = vrot.slane %v2554, 4
    %v2557 = vrot.slane %v2086, 6
    %v2558 = vsel %vm584, %v2556, %v2557
    %s2559 = scalar_lea.vmem %s1, 56
    %v2560 = vld [vmem:[%s2559] sm:$0xf]
    %v2561 = vunpack.c.l.b16 %v2542
    %v2562 = vunpack.c.l.b16 %v2545
    %v2563 = vunpack.c.l.b16 %v2548
    %v2564 = vunpack.c.l.b16 %v2552
    %v2565 = vunpack.c.l.b16 %v2555
    %v2566 = vunpack.c.l.b16 %v2558
    %v2567 = vpack.c.b16 %v2562, %v2561
    %v2568 = vpack.c.b16 %v2564, %v2563
    %v2569 = vpack.c.b16 %v2566, %v2565
    %v2571 = vsel %vm202, %v2567, 0
    %v2574 = vsel %vm202, %v2568, 0
    %v2577 = vsel %vm202, %v2569, 0
    %v2580 = vsel %vm212, %v2560, 0
    %2582 = vmatprep.subr.bf16.mxu0 0
    %2583 = vmatpush1.bf16.msra.mxu0 %v2580
    %2584 = vmatprep.subr.bf16.mxu0 0
    %2585 = vmatpush1.bf16.msra.mxu0 0
    %2586 = vmatprep.subr.bf16.mxu0 0
    %2587 = vmatpush1.bf16.msra.mxu0 0
    %2588 = vmatprep.subr.bf16.mxu0 0
    %2589 = vmatpush1.bf16.msra.mxu0 0
    %2590 = vmatprep.subr.bf16.mxu0 0
    %2591 = vmatpush1.bf16.msra.mxu0 0
    %2592 = vmatprep.subr.bf16.mxu0 0
    %2593 = vmatpush1.bf16.msra.mxu0 0
    %2594 = vmatprep.subr.bf16.mxu0 0
    %2595 = vmatpush1.bf16.msra.mxu0 0
    %2596 = vmatprep.subr.bf16.mxu0 0
    %2597 = vmatpush1.bf16.msra.mxu0 0
    %2598 = vmatprep.subr.bf16.mxu0 0
    %2599 = vmatpush1.bf16.msra.mxu0 0
    %2600 = vmatprep.subr.bf16.mxu0 0
    %2601 = vmatpush1.bf16.msra.mxu0 0
    %2602 = vmatprep.subr.bf16.mxu0 0
    %2603 = vmatpush1.bf16.msra.mxu0 0
    %2604 = vmatprep.subr.bf16.mxu0 0
    %2605 = vmatpush1.bf16.msra.mxu0 0
    %2606 = vmatprep.subr.bf16.mxu0 0
    %2607 = vmatpush1.bf16.msra.mxu0 0
    %2608 = vmatprep.subr.bf16.mxu0 0
    %2609 = vmatpush1.bf16.msra.mxu0 0
    %2610 = vmatprep.subr.bf16.mxu0 0
    %2611 = vmatpush1.bf16.msra.mxu0 0
    %2612 = vmatprep.subr.bf16.mxu0 0
    %2613 = vmatpush1.bf16.msra.mxu0 0
    %2614 = vmatprep.mubr.bf16.mxu0 0
    %2615 = vmatmul.mubr.bf16.gmra.mrb[0].mxu0 %v2571
    %v2616 = vpop.f32.mrb[0].mxu0
    %v2617 = vadd.f32 0.0, %v2616
    %v2618 = vpop.f32.mrb[0].mxu0
    %v2619 = vpop.f32.mrb[0].mxu0
    %v2620 = vadd.f32 0.0, %v2619
    %v2621 = vpop.f32.mrb[0].mxu0
    %2622 = vmatprep.mubr.bf16.mxu0 0
    %2623 = vmatmul.mubr.bf16.gmra.mrb[0].mxu0 %v2574
    %v2624 = vpop.f32.mrb[0].mxu0
    %v2625 = vadd.f32 0.0, %v2624
    %v2626 = vpop.f32.mrb[0].mxu0
    %v2627 = vpop.f32.mrb[0].mxu0
    %v2628 = vadd.f32 0.0, %v2627
    %v2629 = vpop.f32.mrb[0].mxu0
    %2630 = vmatprep.mubr.bf16.mxu0 0
    %2631 = vmatmul.mubr.bf16.gmra.mrb[0].mxu0 %v2577
    %v2632 = vpop.f32.mrb[0].mxu0
    %v2633 = vadd.f32 0.0, %v2632
    %v2634 = vpop.f32.mrb[0].mxu0
    %v2635 = vpop.f32.mrb[0].mxu0
    %v2636 = vadd.f32 0.0, %v2635
    %v2637 = vpop.f32.mrb[0].mxu0
    %2638 = vdwg.mxu0
    %v2639 = vadd.f32 %v2533, %v2617
    %v2640 = vadd.f32 %v2534, %v2620
    %v2641 = vadd.f32 %v2535, %v2625
    %v2642 = vadd.f32 %v2536, %v2628
    %v2643 = vadd.f32 %v2537, %v2633
    %v2644 = vadd.f32 %v2538, %v2636
    %s2645 = scalar_lea.vmem %s2, 2
    %v2646 = vld [vmem:[%s2645] sm:$0x1]
    %v2648 = vlaneseq
    %v2649 = vshrl.u32 %v2648, 7
    %v2650 = vsub.s32 0, %v2649
    %v2651 = vrot.slane %v2646, %v2650
    %v2653 = vadd.f32 %v2639, %v2651
    %v2654 = vadd.f32 %v2640, %v2651
    %v2655 = vadd.f32 %v2641, %v2651
    %v2656 = vadd.f32 %v2642, %v2651
    %v2657 = vadd.f32 %v2643, %v2651
    %v2658 = vadd.f32 %v2644, %v2651
    %vm2659 = vcmp.ge.f32.partialorder %v2653, 0.0
    %vm2660 = vcmp.ge.f32.partialorder %v2654, 0.0
    %vm2661 = vcmp.ge.f32.partialorder %v2655, 0.0
    %vm2662 = vcmp.ge.f32.partialorder %v2656, 0.0
    %vm2663 = vcmp.ge.f32.partialorder %v2657, 0.0
    %vm2664 = vcmp.ge.f32.partialorder %v2658, 0.0
    %v2665 = vmul.f32 %v2653, 0.01
    %v2666 = vmul.f32 %v2654, 0.01
    %v2667 = vmul.f32 %v2655, 0.01
    %v2668 = vmul.f32 %v2656, 0.01
    %v2669 = vmul.f32 %v2657, 0.01
    %v2670 = vmul.f32 %v2658, 0.01
    %v2671 = vsel %vm2659, %v2653, %v2665
    %v2672 = vsel %vm2660, %v2654, %v2666
    %v2673 = vsel %vm2661, %v2655, %v2667
    %v2674 = vsel %vm2662, %v2656, %v2668
    %v2675 = vsel %vm2663, %v2657, %v2669
    %v2676 = vsel %vm2664, %v2658, %v2670
    %v2677 = vpack.c.bf16 %v2672, %v2671
    %v2678 = vpack.c.bf16 %v2674, %v2673
    %v2679 = vpack.c.bf16 %v2676, %v2675
    %v2683 = vunpack.c.l.b16 %v2677
    %v2684 = vunpack.c.h.b16 %v2677
    %v2685 = vunpack.c.l.b16 %v2678
    %v2686 = vunpack.c.h.b16 %v2678
    %v2687 = vunpack.c.l.b16 %v2679
    %v2688 = vunpack.c.h.b16 %v2679
    %v2689 = vpack.c.b16 %v2683, %v2683
    %v2690 = vpack.c.b16 %v2684, %v2684
    %v2691 = vpack.c.b16 %v2685, %v2685
    %v2692 = vpack.c.b16 %v2686, %v2686
    %v2693 = vpack.c.b16 %v2687, %v2687
    %v2694 = vpack.c.b16 %v2688, %v2688
    %s2695 = scalar_lea.vmem %s3, 48
    %v2696 = vld [vmem:[%s2695] sm:$0xf]
    %v2697 = vld [vmem:[%s2695 + $0x4] sm:$0xf]
    %v2699 = vshrl.u32 %v2689, 16
    %v2701 = vrot.slane %v2699, 4
    %v2702 = vshll.u32 %v2689, 16
    %v2704 = vrot.slane %v2702, 5
    %v2705 = vor.u32 %v2701, %v2704
    %v2706 = vrot.slane %v2705, 4
    %v2708 = vshll.u32 %v2690, 16
    %v2710 = vrot.slane %v2708, 5
    %v2711 = vsel %vm122, %v2706, %v2710
    %v2712 = vshrl.u32 %v2690, 16
    %v2714 = vrot.slane %v2712, 4
    %v2715 = vor.u32 %v2714, %v2710
    %v2716 = vrot.slane %v2715, 4
    %v2718 = vshll.u32 %v2691, 16
    %v2720 = vrot.slane %v2718, 5
    %v2721 = vsel %vm122, %v2716, %v2720
    %v2723 = vshrl.u32 %v2692, 16
    %v2725 = vrot.slane %v2723, 4
    %v2726 = vshll.u32 %v2692, 16
    %v2728 = vrot.slane %v2726, 5
    %v2729 = vor.u32 %v2725, %v2728
    %v2730 = vrot.slane %v2729, 4
    %v2732 = vshll.u32 %v2693, 16
    %v2734 = vrot.slane %v2732, 5
    %v2735 = vsel %vm122, %v2730, %v2734
    %v2736 = vshrl.u32 %v2693, 16
    %v2738 = vrot.slane %v2736, 4
    %v2739 = vor.u32 %v2738, %v2734
    %v2740 = vrot.slane %v2739, 4
    %v2742 = vshll.u32 %v2694, 16
    %v2744 = vrot.slane %v2742, 5
    %v2745 = vsel %vm122, %v2740, %v2744
    %s2746 = scalar_lea.vmem %s3, 56
    %v2747 = vld [vmem:[%s2746] sm:$0xf]
    %v2748 = vld [vmem:[%s2746 + $0x4] sm:$0xf]
    %v2749 = vunpack.c.l.b16 %v2711
    %v2750 = vunpack.c.l.b16 %v2721
    %v2751 = vunpack.c.l.b16 %v2735
    %v2752 = vunpack.c.l.b16 %v2745
    %v2753 = vpack.c.b16 %v2750, %v2749
    %v2754 = vpack.c.b16 %v2752, %v2751
    %v2757 = vunpack.c.l.b16 %v2747
    %v2758 = vunpack.c.l.b16 %v2748
    %v2759 = vpack.c.b16 %v2758, %v2757
    %v2762 = vsel %vm805, %v2753, 0
    %v2765 = vsel %vm805, %v2754, 0
    %2767 = vmatprep.subr.bf16.mxu0 0
    %2768 = vmatpush1.bf16.msra.mxu0 %v2759
    %2769 = vmatprep.subr.bf16.mxu0 0
    %2770 = vmatpush1.bf16.msra.mxu0 0
    %2771 = vmatprep.subr.bf16.mxu0 0
    %2772 = vmatpush1.bf16.msra.mxu0 0
    %2773 = vmatprep.subr.bf16.mxu0 0
    %2774 = vmatpush1.bf16.msra.mxu0 0
    %2775 = vmatprep.subr.bf16.mxu0 0
    %2776 = vmatpush1.bf16.msra.mxu0 0
    %2777 = vmatprep.subr.bf16.mxu0 0
    %2778 = vmatpush1.bf16.msra.mxu0 0
    %2779 = vmatprep.subr.bf16.mxu0 0
    %2780 = vmatpush1.bf16.msra.mxu0 0
    %2781 = vmatprep.subr.bf16.mxu0 0
    %2782 = vmatpush1.bf16.msra.mxu0 0
    %2783 = vmatprep.subr.bf16.mxu0 0
    %2784 = vmatpush1.bf16.msra.mxu0 0
    %2785 = vmatprep.subr.bf16.mxu0 0
    %2786 = vmatpush1.bf16.msra.mxu0 0
    %2787 = vmatprep.subr.bf16.mxu0 0
    %2788 = vmatpush1.bf16.msra.mxu0 0
    %2789 = vmatprep.subr.bf16.mxu0 0
    %2790 = vmatpush1.bf16.msra.mxu0 0
    %2791 = vmatprep.subr.bf16.mxu0 0
    %2792 = vmatpush1.bf16.msra.mxu0 0
    %2793 = vmatprep.subr.bf16.mxu0 0
    %2794 = vmatpush1.bf16.msra.mxu0 0
    %2795 = vmatprep.subr.bf16.mxu0 0
    %2796 = vmatpush1.bf16.msra.mxu0 0
    %2797 = vmatprep.subr.bf16.mxu0 0
    %2798 = vmatpush1.bf16.msra.mxu0 0
    %2799 = vmatprep.mubr.bf16.mxu0 0
    %2800 = vmatmul.mubr.bf16.gmra.mrb[0].mxu0 %v2762
    %v2801 = vpop.f32.mrb[0].mxu0
    %v2802 = vadd.f32 0.0, %v2801
    %v2803 = vpop.f32.mrb[0].mxu0
    %v2804 = vpop.f32.mrb[0].mxu0
    %v2805 = vadd.f32 0.0, %v2804
    %v2806 = vpop.f32.mrb[0].mxu0
    %2807 = vmatprep.mubr.bf16.mxu0 0
    %2808 = vmatmul.mubr.bf16.gmra.mrb[0].mxu0 %v2765
    %v2809 = vpop.f32.mrb[0].mxu0
    %v2810 = vadd.f32 0.0, %v2809
    %v2811 = vpop.f32.mrb[0].mxu0
    %v2812 = vpop.f32.mrb[0].mxu0
    %v2813 = vadd.f32 0.0, %v2812
    %v2814 = vpop.f32.mrb[0].mxu0
    %2815 = vdwg.mxu0
    %v2816 = vpack.c.b16 %v2684, %v2683
    %v2817 = vpack.c.b16 %v2687, %v2686
    %v2820 = vunpack.c.l.b16 %v2696
    %v2821 = vunpack.c.l.b16 %v2697
    %v2822 = vpack.c.b16 %v2821, %v2820
    %v2825 = vsel %vm805, %v2816, 0
    %v2828 = vsel %vm805, %v2817, 0
    %2830 = vmatprep.subr.bf16.mxu0 0
    %2831 = vmatpush1.bf16.msra.mxu0 %v2822
    %2832 = vmatprep.subr.bf16.mxu0 0
    %2833 = vmatpush1.bf16.msra.mxu0 0
    %2834 = vmatprep.subr.bf16.mxu0 0
    %2835 = vmatpush1.bf16.msra.mxu0 0
    %2836 = vmatprep.subr.bf16.mxu0 0
    %2837 = vmatpush1.bf16.msra.mxu0 0
    %2838 = vmatprep.subr.bf16.mxu0 0
    %2839 = vmatpush1.bf16.msra.mxu0 0
    %2840 = vmatprep.subr.bf16.mxu0 0
    %2841 = vmatpush1.bf16.msra.mxu0 0
    %2842 = vmatprep.subr.bf16.mxu0 0
    %2843 = vmatpush1.bf16.msra.mxu0 0
    %2844 = vmatprep.subr.bf16.mxu0 0
    %2845 = vmatpush1.bf16.msra.mxu0 0
    %2846 = vmatprep.subr.bf16.mxu0 0
    %2847 = vmatpush1.bf16.msra.mxu0 0
    %2848 = vmatprep.subr.bf16.mxu0 0
    %2849 = vmatpush1.bf16.msra.mxu0 0
    %2850 = vmatprep.subr.bf16.mxu0 0
    %2851 = vmatpush1.bf16.msra.mxu0 0
    %2852 = vmatprep.subr.bf16.mxu0 0
    %2853 = vmatpush1.bf16.msra.mxu0 0
    %2854 = vmatprep.subr.bf16.mxu0 0
    %2855 = vmatpush1.bf16.msra.mxu0 0
    %2856 = vmatprep.subr.bf16.mxu0 0
    %2857 = vmatpush1.bf16.msra.mxu0 0
    %2858 = vmatprep.subr.bf16.mxu0 0
    %2859 = vmatpush1.bf16.msra.mxu0 0
    %2860 = vmatprep.subr.bf16.mxu0 0
    %2861 = vmatpush1.bf16.msra.mxu0 0
    %2862 = vmatprep.mubr.bf16.mxu0 0
    %2863 = vmatmul.mubr.bf16.gmra.mrb[0].mxu0 %v2825
    %v2864 = vpop.f32.mrb[0].mxu0
    %v2865 = vadd.f32 %v2802, %v2864
    %v2866 = vpop.f32.mrb[0].mxu0
    %v2867 = vpop.f32.mrb[0].mxu0
    %v2868 = vadd.f32 %v2805, %v2867
    %v2869 = vpop.f32.mrb[0].mxu0
    %2870 = vmatprep.mubr.bf16.mxu0 0
    %2871 = vmatmul.mubr.bf16.gmra.mrb[0].mxu0 %v2828
    %v2872 = vpop.f32.mrb[0].mxu0
    %v2873 = vadd.f32 %v2810, %v2872
    %v2874 = vpop.f32.mrb[0].mxu0
    %v2875 = vpop.f32.mrb[0].mxu0
    %v2876 = vadd.f32 %v2813, %v2875
    %v2877 = vpop.f32.mrb[0].mxu0
    %2878 = vdwg.mxu0
    %v2879 = vrot.slane %v2689, 5
    %v2880 = vrot.slane %v2879, 4
    %v2881 = vrot.slane %v2690, 5
    %v2882 = vsel %vm347, %v2880, %v2881
    %v2883 = vrot.slane %v2881, 4
    %v2884 = vrot.slane %v2691, 5
    %v2885 = vsel %vm347, %v2883, %v2884
    %v2886 = vrot.slane %v2692, 5
    %v2887 = vrot.slane %v2886, 4
    %v2888 = vrot.slane %v2693, 5
    %v2889 = vsel %vm347, %v2887, %v2888
    %v2890 = vrot.slane %v2888, 4
    %v2891 = vrot.slane %v2694, 5
    %v2892 = vsel %vm347, %v2890, %v2891
    %s2893 = scalar_lea.vmem %s3, 64
    %v2894 = vld [vmem:[%s2893] sm:$0xf]
    %v2895 = vld [vmem:[%s2893 + $0x4] sm:$0xf]
    %v2896 = vunpack.c.l.b16 %v2882
    %v2897 = vunpack.c.l.b16 %v2885
    %v2898 = vunpack.c.l.b16 %v2889
    %v2899 = vunpack.c.l.b16 %v2892
    %v2900 = vpack.c.b16 %v2897, %v2896
    %v2901 = vpack.c.b16 %v2899, %v2898
    %v2904 = vunpack.c.l.b16 %v2894
    %v2905 = vunpack.c.l.b16 %v2895
    %v2906 = vpack.c.b16 %v2905, %v2904
    %v2909 = vsel %vm805, %v2900, 0
    %v2912 = vsel %vm805, %v2901, 0
    %2914 = vmatprep.subr.bf16.mxu0 0
    %2915 = vmatpush1.bf16.msra.mxu0 %v2906
    %2916 = vmatprep.subr.bf16.mxu0 0
    %2917 = vmatpush1.bf16.msra.mxu0 0
    %2918 = vmatprep.subr.bf16.mxu0 0
    %2919 = vmatpush1.bf16.msra.mxu0 0
    %2920 = vmatprep.subr.bf16.mxu0 0
    %2921 = vmatpush1.bf16.msra.mxu0 0
    %2922 = vmatprep.subr.bf16.mxu0 0
    %2923 = vmatpush1.bf16.msra.mxu0 0
    %2924 = vmatprep.subr.bf16.mxu0 0
    %2925 = vmatpush1.bf16.msra.mxu0 0
    %2926 = vmatprep.subr.bf16.mxu0 0
    %2927 = vmatpush1.bf16.msra.mxu0 0
    %2928 = vmatprep.subr.bf16.mxu0 0
    %2929 = vmatpush1.bf16.msra.mxu0 0
    %2930 = vmatprep.subr.bf16.mxu0 0
    %2931 = vmatpush1.bf16.msra.mxu0 0
    %2932 = vmatprep.subr.bf16.mxu0 0
    %2933 = vmatpush1.bf16.msra.mxu0 0
    %2934 = vmatprep.subr.bf16.mxu0 0
    %2935 = vmatpush1.bf16.msra.mxu0 0
    %2936 = vmatprep.subr.bf16.mxu0 0
    %2937 = vmatpush1.bf16.msra.mxu0 0
    %2938 = vmatprep.subr.bf16.mxu0 0
    %2939 = vmatpush1.bf16.msra.mxu0 0
    %2940 = vmatprep.subr.bf16.mxu0 0
    %2941 = vmatpush1.bf16.msra.mxu0 0
    %2942 = vmatprep.subr.bf16.mxu0 0
    %2943 = vmatpush1.bf16.msra.mxu0 0
    %2944 = vmatprep.subr.bf16.mxu0 0
    %2945 = vmatpush1.bf16.msra.mxu0 0
    %2946 = vmatprep.mubr.bf16.mxu0 0
    %2947 = vmatmul.mubr.bf16.gmra.mrb[0].mxu0 %v2909
    %v2948 = vpop.f32.mrb[0].mxu0
    %v2949 = vadd.f32 0.0, %v2948
    %v2950 = vpop.f32.mrb[0].mxu0
    %v2951 = vpop.f32.mrb[0].mxu0
    %v2952 = vadd.f32 0.0, %v2951
    %v2953 = vpop.f32.mrb[0].mxu0
    %2954 = vmatprep.mubr.bf16.mxu0 0
    %2955 = vmatmul.mubr.bf16.gmra.mrb[0].mxu0 %v2912
    %v2956 = vpop.f32.mrb[0].mxu0
    %v2957 = vadd.f32 0.0, %v2956
    %v2958 = vpop.f32.mrb[0].mxu0
    %v2959 = vpop.f32.mrb[0].mxu0
    %v2960 = vadd.f32 0.0, %v2959
    %v2961 = vpop.f32.mrb[0].mxu0
    %2962 = vdwg.mxu0
    %v2963 = vadd.f32 %v2865, %v2949
    %v2964 = vadd.f32 %v2868, %v2952
    %v2965 = vadd.f32 %v2873, %v2957
    %v2966 = vadd.f32 %v2876, %v2960
    %s2967 = scalar_lea.vmem %s4, 2
    %v2968 = vld [vmem:[%s2967] sm:$0x1]
    %v2970 = vlaneseq
    %v2971 = vshrl.u32 %v2970, 7
    %v2972 = vsub.s32 0, %v2971
    %v2973 = vrot.slane %v2968, %v2972
    %v2975 = vadd.f32 %v2963, %v2973
    %v2976 = vadd.f32 %v2964, %v2973
    %v2977 = vadd.f32 %v2965, %v2973
    %v2978 = vadd.f32 %v2966, %v2973
    %v2979 = vtanh.pop %v2975
    %v2980 = vtanh.pop %v2976
    %v2981 = vtanh.pop %v2977
    %v2982 = vtanh.pop %v2978
    %v2983 = vadd.f32 %v2013, %v2979
    %v2984 = vadd.f32 %v2014, %v2980
    %v2985 = vadd.f32 %v2015, %v2981
    %v2986 = vadd.f32 %v2016, %v2982
    %v2987 = vpack.c.bf16 %v2014, %v2013
    %v2988 = vpack.c.bf16 %v2016, %v2015
    %v2990 = vpack.i.b16 %v2987, %v2987
    %v2992 = vlaneseq
    %v2993 = vshrl.u32 %v2992, 7
    %v2994 = vsub.s32 0, %v2993
    %v2995 = vrot.slane %v2990, %v2994
    %v2997 = vpack.i.b16 %v2988, %v2988
    %v2999 = vlaneseq
    %v3000 = vshrl.u32 %v2999, 7
    %v3001 = vsub.s32 0, %v3000
    %v3002 = vrot.slane %v2997, %v3001
    %v3003 = vshrl.u32 %v2987, 16
    %v3004 = vpack.i.b16 %v3003, %v3003
    %v3006 = vlaneseq
    %v3007 = vshrl.u32 %v3006, 7
    %v3008 = vsub.s32 7, %v3007
    %v3009 = vrot.slane %v3004, %v3008
    %v3010 = vshrl.u32 %v2988, 16
    %v3011 = vpack.i.b16 %v3010, %v3010
    %v3013 = vlaneseq
    %v3014 = vshrl.u32 %v3013, 7
    %v3015 = vsub.s32 7, %v3014
    %v3016 = vrot.slane %v3011, %v3015
    %v3018 = vrot.slane %v3003, 6
    %v3019 = vshll.u32 %v2987, 16
    %v3021 = vrot.slane %v3019, 7
    %v3022 = vor.u32 %v3018, %v3021
    %v3024 = vrot.slane %v3010, 6
    %v3025 = vshll.u32 %v2988, 16
    %v3027 = vrot.slane %v3025, 7
    %v3028 = vor.u32 %v3024, %v3027
    %v3031 = vsel %vm94, %v2995, %v3022
    %v3032 = vsel %vm94, %v3002, %v3028
    %v3033 = vsel %vm94, %v3022, %v3009
    %v3034 = vsel %vm94, %v3028, %v3016
    %v3039 = vunpack.c.l.b16 %v3031
    %v3040 = vunpack.c.h.b16 %v3031
    %v3041 = vunpack.c.l.b16 %v3033
    %v3042 = vunpack.c.l.b16 %v3032
    %v3043 = vunpack.c.h.b16 %v3032
    %v3044 = vunpack.c.l.b16 %v3034
    %s3045 = scalar_lea.vmem %s1, 60
    %v3046 = vld [vmem:[%s3045] sm:$0xf]
    %v3047 = vunpack.c.h.b16 %v3033
    %v3048 = vunpack.c.h.b16 %v3034
    %v3049 = vpack.c.b16 %v3039, %v3039
    %v3050 = vpack.c.b16 %v3040, %v3040
    %v3051 = vpack.c.b16 %v3041, %v3041
    %v3052 = vpack.c.b16 %v3047, %v3047
    %v3053 = vpack.c.b16 %v3042, %v3042
    %v3054 = vpack.c.b16 %v3043, %v3043
    %v3055 = vpack.c.b16 %v3044, %v3044
    %v3056 = vpack.c.b16 %v3048, %v3048
    %v3058 = vshrl.u32 %v3049, 16
    %v3060 = vrot.slane %v3058, 4
    %v3061 = vshll.u32 %v3049, 16
    %v3063 = vrot.slane %v3061, 5
    %v3064 = vor.u32 %v3060, %v3063
    %v3065 = vrot.slane %v3064, 4
    %v3067 = vshll.u32 %v3050, 16
    %v3069 = vrot.slane %v3067, 5
    %v3070 = vsel %vm122, %v3065, %v3069
    %v3071 = vshrl.u32 %v3050, 16
    %v3073 = vrot.slane %v3071, 4
    %v3074 = vor.u32 %v3073, %v3069
    %v3075 = vrot.slane %v3074, 4
    %v3077 = vshll.u32 %v3051, 16
    %v3079 = vrot.slane %v3077, 5
    %v3080 = vsel %vm122, %v3075, %v3079
    %v3081 = vshrl.u32 %v3051, 16
    %v3083 = vrot.slane %v3081, 4
    %v3084 = vor.u32 %v3083, %v3079
    %v3085 = vrot.slane %v3084, 4
    %v3087 = vshll.u32 %v3052, 16
    %v3089 = vrot.slane %v3087, 5
    %v3090 = vsel %vm122, %v3085, %v3089
    %v3092 = vshrl.u32 %v3053, 16
    %v3094 = vrot.slane %v3092, 4
    %v3095 = vshll.u32 %v3053, 16
    %v3097 = vrot.slane %v3095, 5
    %v3098 = vor.u32 %v3094, %v3097
    %v3099 = vrot.slane %v3098, 4
    %v3101 = vshll.u32 %v3054, 16
    %v3103 = vrot.slane %v3101, 5
    %v3104 = vsel %vm122, %v3099, %v3103
    %v3105 = vshrl.u32 %v3054, 16
    %v3107 = vrot.slane %v3105, 4
    %v3108 = vor.u32 %v3107, %v3103
    %v3109 = vrot.slane %v3108, 4
    %v3111 = vshll.u32 %v3055, 16
    %v3113 = vrot.slane %v3111, 5
    %v3114 = vsel %vm122, %v3109, %v3113
    %v3115 = vshrl.u32 %v3055, 16
    %v3117 = vrot.slane %v3115, 4
    %v3118 = vor.u32 %v3117, %v3113
    %v3119 = vrot.slane %v3118, 4
    %v3121 = vshll.u32 %v3056, 16
    %v3123 = vrot.slane %v3121, 5
    %v3124 = vsel %vm122, %v3119, %v3123
    %s3125 = scalar_lea.vmem %s1, 64
    %v3126 = vld [vmem:[%s3125] sm:$0xf]
    %v3127 = vunpack.c.l.b16 %v3070
    %v3128 = vunpack.c.l.b16 %v3080
    %v3129 = vunpack.c.l.b16 %v3090
    %v3130 = vunpack.c.l.b16 %v3104
    %v3131 = vunpack.c.l.b16 %v3114
    %v3132 = vunpack.c.l.b16 %v3124
    %v3133 = vpack.c.b16 %v3128, %v3127
    %v3134 = vpack.c.b16 %v3130, %v3129
    %v3135 = vpack.c.b16 %v3132, %v3131
    %v3137 = vsel %vm202, %v3133, 0
    %v3140 = vsel %vm202, %v3134, 0
    %v3143 = vsel %vm202, %v3135, 0
    %v3146 = vsel %vm212, %v3126, 0
    %3148 = vmatprep.subr.bf16.mxu0 0
    %3149 = vmatpush1.bf16.msra.mxu0 %v3146
    %3150 = vmatprep.subr.bf16.mxu0 0
    %3151 = vmatpush1.bf16.msra.mxu0 0
    %3152 = vmatprep.subr.bf16.mxu0 0
    %3153 = vmatpush1.bf16.msra.mxu0 0
    %3154 = vmatprep.subr.bf16.mxu0 0
    %3155 = vmatpush1.bf16.msra.mxu0 0
    %3156 = vmatprep.subr.bf16.mxu0 0
    %3157 = vmatpush1.bf16.msra.mxu0 0
    %3158 = vmatprep.subr.bf16.mxu0 0
    %3159 = vmatpush1.bf16.msra.mxu0 0
    %3160 = vmatprep.subr.bf16.mxu0 0
    %3161 = vmatpush1.bf16.msra.mxu0 0
    %3162 = vmatprep.subr.bf16.mxu0 0
    %3163 = vmatpush1.bf16.msra.mxu0 0
    %3164 = vmatprep.subr.bf16.mxu0 0
    %3165 = vmatpush1.bf16.msra.mxu0 0
    %3166 = vmatprep.subr.bf16.mxu0 0
    %3167 = vmatpush1.bf16.msra.mxu0 0
    %3168 = vmatprep.subr.bf16.mxu0 0
    %3169 = vmatpush1.bf16.msra.mxu0 0
    %3170 = vmatprep.subr.bf16.mxu0 0
    %3171 = vmatpush1.bf16.msra.mxu0 0
    %3172 = vmatprep.subr.bf16.mxu0 0
    %3173 = vmatpush1.bf16.msra.mxu0 0
    %3174 = vmatprep.subr.bf16.mxu0 0
    %3175 = vmatpush1.bf16.msra.mxu0 0
    %3176 = vmatprep.subr.bf16.mxu0 0
    %3177 = vmatpush1.bf16.msra.mxu0 0
    %3178 = vmatprep.subr.bf16.mxu0 0
    %3179 = vmatpush1.bf16.msra.mxu0 0
    %3180 = vmatprep.mubr.bf16.mxu0 0
    %3181 = vmatmul.mubr.bf16.gmra.mrb[0].mxu0 %v3137
    %v3182 = vpop.f32.mrb[0].mxu0
    %v3183 = vadd.f32 0.0, %v3182
    %v3184 = vpop.f32.mrb[0].mxu0
    %v3185 = vpop.f32.mrb[0].mxu0
    %v3186 = vadd.f32 0.0, %v3185
    %v3187 = vpop.f32.mrb[0].mxu0
    %3188 = vmatprep.mubr.bf16.mxu0 0
    %3189 = vmatmul.mubr.bf16.gmra.mrb[0].mxu0 %v3140
    %v3190 = vpop.f32.mrb[0].mxu0
    %v3191 = vadd.f32 0.0, %v3190
    %v3192 = vpop.f32.mrb[0].mxu0
    %v3193 = vpop.f32.mrb[0].mxu0
    %v3194 = vadd.f32 0.0, %v3193
    %v3195 = vpop.f32.mrb[0].mxu0
    %3196 = vmatprep.mubr.bf16.mxu0 0
    %3197 = vmatmul.mubr.bf16.gmra.mrb[0].mxu0 %v3143
    %v3198 = vpop.f32.mrb[0].mxu0
    %v3199 = vadd.f32 0.0, %v3198
    %v3200 = vpop.f32.mrb[0].mxu0
    %v3201 = vpop.f32.mrb[0].mxu0
    %v3202 = vadd.f32 0.0, %v3201
    %v3203 = vpop.f32.mrb[0].mxu0
    %3204 = vdwg.mxu0
    %v3205 = vpack.c.b16 %v3040, %v3039
    %v3206 = vpack.c.b16 %v3042, %v3041
    %v3207 = vpack.c.b16 %v3044, %v3043
    %v3209 = vsel %vm202, %v3205, 0
    %v3212 = vsel %vm202, %v3206, 0
    %v3215 = vsel %vm202, %v3207, 0
    %v3218 = vsel %vm212, %v3046, 0
    %3220 = vmatprep.subr.bf16.mxu0 0
    %3221 = vmatpush1.bf16.msra.mxu0 %v3218
    %3222 = vmatprep.subr.bf16.mxu0 0
    %3223 = vmatpush1.bf16.msra.mxu0 0
    %3224 = vmatprep.subr.bf16.mxu0 0
    %3225 = vmatpush1.bf16.msra.mxu0 0
    %3226 = vmatprep.subr.bf16.mxu0 0
    %3227 = vmatpush1.bf16.msra.mxu0 0
    %3228 = vmatprep.subr.bf16.mxu0 0
    %3229 = vmatpush1.bf16.msra.mxu0 0
    %3230 = vmatprep.subr.bf16.mxu0 0
    %3231 = vmatpush1.bf16.msra.mxu0 0
    %3232 = vmatprep.subr.bf16.mxu0 0
    %3233 = vmatpush1.bf16.msra.mxu0 0
    %3234 = vmatprep.subr.bf16.mxu0 0
    %3235 = vmatpush1.bf16.msra.mxu0 0
    %3236 = vmatprep.subr.bf16.mxu0 0
    %3237 = vmatpush1.bf16.msra.mxu0 0
    %3238 = vmatprep.subr.bf16.mxu0 0
    %3239 = vmatpush1.bf16.msra.mxu0 0
    %3240 = vmatprep.subr.bf16.mxu0 0
    %3241 = vmatpush1.bf16.msra.mxu0 0
    %3242 = vmatprep.subr.bf16.mxu0 0
    %3243 = vmatpush1.bf16.msra.mxu0 0
    %3244 = vmatprep.subr.bf16.mxu0 0
    %3245 = vmatpush1.bf16.msra.mxu0 0
    %3246 = vmatprep.subr.bf16.mxu0 0
    %3247 = vmatpush1.bf16.msra.mxu0 0
    %3248 = vmatprep.subr.bf16.mxu0 0
    %3249 = vmatpush1.bf16.msra.mxu0 0
    %3250 = vmatprep.subr.bf16.mxu0 0
    %3251 = vmatpush1.bf16.msra.mxu0 0
    %3252 = vmatprep.mubr.bf16.mxu0 0
    %3253 = vmatmul.mubr.bf16.gmra.mrb[0].mxu0 %v3209
    %v3254 = vpop.f32.mrb[0].mxu0
    %v3255 = vadd.f32 %v3183, %v3254
    %v3256 = vpop.f32.mrb[0].mxu0
    %v3257 = vpop.f32.mrb[0].mxu0
    %v3258 = vadd.f32 %v3186, %v3257
    %v3259 = vpop.f32.mrb[0].mxu0
    %3260 = vmatprep.mubr.bf16.mxu0 0
    %3261 = vmatmul.mubr.bf16.gmra.mrb[0].mxu0 %v3212
    %v3262 = vpop.f32.mrb[0].mxu0
    %v3263 = vadd.f32 %v3191, %v3262
    %v3264 = vpop.f32.mrb[0].mxu0
    %v3265 = vpop.f32.mrb[0].mxu0
    %v3266 = vadd.f32 %v3194, %v3265
    %v3267 = vpop.f32.mrb[0].mxu0
    %3268 = vmatprep.mubr.bf16.mxu0 0
    %3269 = vmatmul.mubr.bf16.gmra.mrb[0].mxu0 %v3215
    %v3270 = vpop.f32.mrb[0].mxu0
    %v3271 = vadd.f32 %v3199, %v3270
    %v3272 = vpop.f32.mrb[0].mxu0
    %v3273 = vpop.f32.mrb[0].mxu0
    %v3274 = vadd.f32 %v3202, %v3273
    %v3275 = vpop.f32.mrb[0].mxu0
    %3276 = vdwg.mxu0
    %v3277 = vrot.slane %v3049, 5
    %v3278 = vrot.slane %v3277, 4
    %v3279 = vrot.slane %v3050, 5
    %v3280 = vsel %vm347, %v3278, %v3279
    %v3281 = vrot.slane %v3279, 4
    %v3282 = vrot.slane %v3051, 5
    %v3283 = vsel %vm347, %v3281, %v3282
    %v3284 = vrot.slane %v3282, 4
    %v3285 = vrot.slane %v3052, 5
    %v3286 = vsel %vm347, %v3284, %v3285
    %v3287 = vrot.slane %v3053, 5
    %v3288 = vrot.slane %v3287, 4
    %v3289 = vrot.slane %v3054, 5
    %v3290 = vsel %vm347, %v3288, %v3289
    %v3291 = vrot.slane %v3289, 4
    %v3292 = vrot.slane %v3055, 5
    %v3293 = vsel %vm347, %v3291, %v3292
    %v3294 = vrot.slane %v3292, 4
    %v3295 = vrot.slane %v3056, 5
    %v3296 = vsel %vm347, %v3294, %v3295
    %s3297 = scalar_lea.vmem %s1, 68
    %v3298 = vld [vmem:[%s3297] sm:$0xf]
    %v3299 = vunpack.c.l.b16 %v3280
    %v3300 = vunpack.c.l.b16 %v3283
    %v3301 = vunpack.c.l.b16 %v3286
    %v3302 = vunpack.c.l.b16 %v3290
    %v3303 = vunpack.c.l.b16 %v3293
    %v3304 = vunpack.c.l.b16 %v3296
    %v3305 = vpack.c.b16 %v3300, %v3299
    %v3306 = vpack.c.b16 %v3302, %v3301
    %v3307 = vpack.c.b16 %v3304, %v3303
    %v3309 = vsel %vm202, %v3305, 0
    %v3312 = vsel %vm202, %v3306, 0
    %v3315 = vsel %vm202, %v3307, 0
    %v3318 = vsel %vm212, %v3298, 0
    %3320 = vmatprep.subr.bf16.mxu0 0
    %3321 = vmatpush1.bf16.msra.mxu0 %v3318
    %3322 = vmatprep.subr.bf16.mxu0 0
    %3323 = vmatpush1.bf16.msra.mxu0 0
    %3324 = vmatprep.subr.bf16.mxu0 0
    %3325 = vmatpush1.bf16.msra.mxu0 0
    %3326 = vmatprep.subr.bf16.mxu0 0
    %3327 = vmatpush1.bf16.msra.mxu0 0
    %3328 = vmatprep.subr.bf16.mxu0 0
    %3329 = vmatpush1.bf16.msra.mxu0 0
    %3330 = vmatprep.subr.bf16.mxu0 0
    %3331 = vmatpush1.bf16.msra.mxu0 0
    %3332 = vmatprep.subr.bf16.mxu0 0
    %3333 = vmatpush1.bf16.msra.mxu0 0
    %3334 = vmatprep.subr.bf16.mxu0 0
    %3335 = vmatpush1.bf16.msra.mxu0 0
    %3336 = vmatprep.subr.bf16.mxu0 0
    %3337 = vmatpush1.bf16.msra.mxu0 0
    %3338 = vmatprep.subr.bf16.mxu0 0
    %3339 = vmatpush1.bf16.msra.mxu0 0
    %3340 = vmatprep.subr.bf16.mxu0 0
    %3341 = vmatpush1.bf16.msra.mxu0 0
    %3342 = vmatprep.subr.bf16.mxu0 0
    %3343 = vmatpush1.bf16.msra.mxu0 0
    %3344 = vmatprep.subr.bf16.mxu0 0
    %3345 = vmatpush1.bf16.msra.mxu0 0
    %3346 = vmatprep.subr.bf16.mxu0 0
    %3347 = vmatpush1.bf16.msra.mxu0 0
    %3348 = vmatprep.subr.bf16.mxu0 0
    %3349 = vmatpush1.bf16.msra.mxu0 0
    %3350 = vmatprep.subr.bf16.mxu0 0
    %3351 = vmatpush1.bf16.msra.mxu0 0
    %3352 = vmatprep.mubr.bf16.mxu0 0
    %3353 = vmatmul.mubr.bf16.gmra.mrb[0].mxu0 %v3309
    %v3354 = vpop.f32.mrb[0].mxu0
    %v3355 = vadd.f32 0.0, %v3354
    %v3356 = vpop.f32.mrb[0].mxu0
    %v3357 = vpop.f32.mrb[0].mxu0
    %v3358 = vadd.f32 0.0, %v3357
    %v3359 = vpop.f32.mrb[0].mxu0
    %3360 = vmatprep.mubr.bf16.mxu0 0
    %3361 = vmatmul.mubr.bf16.gmra.mrb[0].mxu0 %v3312
    %v3362 = vpop.f32.mrb[0].mxu0
    %v3363 = vadd.f32 0.0, %v3362
    %v3364 = vpop.f32.mrb[0].mxu0
    %v3365 = vpop.f32.mrb[0].mxu0
    %v3366 = vadd.f32 0.0, %v3365
    %v3367 = vpop.f32.mrb[0].mxu0
    %3368 = vmatprep.mubr.bf16.mxu0 0
    %3369 = vmatmul.mubr.bf16.gmra.mrb[0].mxu0 %v3315
    %v3370 = vpop.f32.mrb[0].mxu0
    %v3371 = vadd.f32 0.0, %v3370
    %v3372 = vpop.f32.mrb[0].mxu0
    %v3373 = vpop.f32.mrb[0].mxu0
    %v3374 = vadd.f32 0.0, %v3373
    %v3375 = vpop.f32.mrb[0].mxu0
    %3376 = vdwg.mxu0
    %v3377 = vadd.f32 %v3255, %v3355
    %v3378 = vadd.f32 %v3258, %v3358
    %v3379 = vadd.f32 %v3263, %v3363
    %v3380 = vadd.f32 %v3266, %v3366
    %v3381 = vadd.f32 %v3271, %v3371
    %v3382 = vadd.f32 %v3274, %v3374
    %v3383 = vrot.slane %v3058, 5
    %v3384 = vrot.slane %v3061, 6
    %v3385 = vor.u32 %v3383, %v3384
    %v3386 = vrot.slane %v3385, 4
    %v3387 = vrot.slane %v3071, 5
    %v3388 = vrot.slane %v3067, 6
    %v3389 = vor.u32 %v3387, %v3388
    %v3390 = vsel %vm456, %v3386, %v3389
    %v3391 = vrot.slane %v3389, 4
    %v3392 = vrot.slane %v3081, 5
    %v3393 = vrot.slane %v3077, 6
    %v3394 = vor.u32 %v3392, %v3393
    %v3395 = vsel %vm456, %v3391, %v3394
    %v3396 = vrot.slane %v3394, 4
    %v3397 = vshrl.u32 %v3052, 16
    %v3399 = vrot.slane %v3397, 5
    %v3400 = vrot.slane %v3087, 6
    %v3401 = vor.u32 %v3399, %v3400
    %v3402 = vsel %vm456, %v3396, %v3401
    %v3403 = vrot.slane %v3092, 5
    %v3404 = vrot.slane %v3095, 6
    %v3405 = vor.u32 %v3403, %v3404
    %v3406 = vrot.slane %v3405, 4
    %v3407 = vrot.slane %v3105, 5
    %v3408 = vrot.slane %v3101, 6
    %v3409 = vor.u32 %v3407, %v3408
    %v3410 = vsel %vm456, %v3406, %v3409
    %v3411 = vrot.slane %v3409, 4
    %v3412 = vrot.slane %v3115, 5
    %v3413 = vrot.slane %v3111, 6
    %v3414 = vor.u32 %v3412, %v3413
    %v3415 = vsel %vm456, %v3411, %v3414
    %v3416 = vrot.slane %v3414, 4
    %v3417 = vshrl.u32 %v3056, 16
    %v3419 = vrot.slane %v3417, 5
    %v3420 = vrot.slane %v3121, 6
    %v3421 = vor.u32 %v3419, %v3420
    %v3422 = vsel %vm456, %v3416, %v3421
    %s3423 = scalar_lea.vmem %s1, 72
    %v3424 = vld [vmem:[%s3423] sm:$0xf]
    %v3425 = vunpack.c.l.b16 %v3390
    %v3426 = vunpack.c.l.b16 %v3395
    %v3427 = vunpack.c.l.b16 %v3402
    %v3428 = vunpack.c.l.b16 %v3410
    %v3429 = vunpack.c.l.b16 %v3415
    %v3430 = vunpack.c.l.b16 %v3422
    %v3431 = vpack.c.b16 %v3426, %v3425
    %v3432 = vpack.c.b16 %v3428, %v3427
    %v3433 = vpack.c.b16 %v3430, %v3429
    %v3435 = vsel %vm202, %v3431, 0
    %v3438 = vsel %vm202, %v3432, 0
    %v3441 = vsel %vm202, %v3433, 0
    %v3444 = vsel %vm212, %v3424, 0
    %3446 = vmatprep.subr.bf16.mxu0 0
    %3447 = vmatpush1.bf16.msra.mxu0 %v3444
    %3448 = vmatprep.subr.bf16.mxu0 0
    %3449 = vmatpush1.bf16.msra.mxu0 0
    %3450 = vmatprep.subr.bf16.mxu0 0
    %3451 = vmatpush1.bf16.msra.mxu0 0
    %3452 = vmatprep.subr.bf16.mxu0 0
    %3453 = vmatpush1.bf16.msra.mxu0 0
    %3454 = vmatprep.subr.bf16.mxu0 0
    %3455 = vmatpush1.bf16.msra.mxu0 0
    %3456 = vmatprep.subr.bf16.mxu0 0
    %3457 = vmatpush1.bf16.msra.mxu0 0
    %3458 = vmatprep.subr.bf16.mxu0 0
    %3459 = vmatpush1.bf16.msra.mxu0 0
    %3460 = vmatprep.subr.bf16.mxu0 0
    %3461 = vmatpush1.bf16.msra.mxu0 0
    %3462 = vmatprep.subr.bf16.mxu0 0
    %3463 = vmatpush1.bf16.msra.mxu0 0
    %3464 = vmatprep.subr.bf16.mxu0 0
    %3465 = vmatpush1.bf16.msra.mxu0 0
    %3466 = vmatprep.subr.bf16.mxu0 0
    %3467 = vmatpush1.bf16.msra.mxu0 0
    %3468 = vmatprep.subr.bf16.mxu0 0
    %3469 = vmatpush1.bf16.msra.mxu0 0
    %3470 = vmatprep.subr.bf16.mxu0 0
    %3471 = vmatpush1.bf16.msra.mxu0 0
    %3472 = vmatprep.subr.bf16.mxu0 0
    %3473 = vmatpush1.bf16.msra.mxu0 0
    %3474 = vmatprep.subr.bf16.mxu0 0
    %3475 = vmatpush1.bf16.msra.mxu0 0
    %3476 = vmatprep.subr.bf16.mxu0 0
    %3477 = vmatpush1.bf16.msra.mxu0 0
    %3478 = vmatprep.mubr.bf16.mxu0 0
    %3479 = vmatmul.mubr.bf16.gmra.mrb[0].mxu0 %v3435
    %v3480 = vpop.f32.mrb[0].mxu0
    %v3481 = vadd.f32 0.0, %v3480
    %v3482 = vpop.f32.mrb[0].mxu0
    %v3483 = vpop.f32.mrb[0].mxu0
    %v3484 = vadd.f32 0.0, %v3483
    %v3485 = vpop.f32.mrb[0].mxu0
    %3486 = vmatprep.mubr.bf16.mxu0 0
    %3487 = vmatmul.mubr.bf16.gmra.mrb[0].mxu0 %v3438
    %v3488 = vpop.f32.mrb[0].mxu0
    %v3489 = vadd.f32 0.0, %v3488
    %v3490 = vpop.f32.mrb[0].mxu0
    %v3491 = vpop.f32.mrb[0].mxu0
    %v3492 = vadd.f32 0.0, %v3491
    %v3493 = vpop.f32.mrb[0].mxu0
    %3494 = vmatprep.mubr.bf16.mxu0 0
    %3495 = vmatmul.mubr.bf16.gmra.mrb[0].mxu0 %v3441
    %v3496 = vpop.f32.mrb[0].mxu0
    %v3497 = vadd.f32 0.0, %v3496
    %v3498 = vpop.f32.mrb[0].mxu0
    %v3499 = vpop.f32.mrb[0].mxu0
    %v3500 = vadd.f32 0.0, %v3499
    %v3501 = vpop.f32.mrb[0].mxu0
    %3502 = vdwg.mxu0
    %v3503 = vadd.f32 %v3377, %v3481
    %v3504 = vadd.f32 %v3378, %v3484
    %v3505 = vadd.f32 %v3379, %v3489
    %v3506 = vadd.f32 %v3380, %v3492
    %v3507 = vadd.f32 %v3381, %v3497
    %v3508 = vadd.f32 %v3382, %v3500
    %v3509 = vrot.slane %v3049, 6
    %v3510 = vrot.slane %v3509, 4
    %v3511 = vrot.slane %v3050, 6
    %v3512 = vsel %vm584, %v3510, %v3511
    %v3513 = vrot.slane %v3511, 4
    %v3514 = vrot.slane %v3051, 6
    %v3515 = vsel %vm584, %v3513, %v3514
    %v3516 = vrot.slane %v3514, 4
    %v3517 = vrot.slane %v3052, 6
    %v3518 = vsel %vm584, %v3516, %v3517
    %v3519 = vrot.slane %v3053, 6
    %v3520 = vrot.slane %v3519, 4
    %v3521 = vrot.slane %v3054, 6
    %v3522 = vsel %vm584, %v3520, %v3521
    %v3523 = vrot.slane %v3521, 4
    %v3524 = vrot.slane %v3055, 6
    %v3525 = vsel %vm584, %v3523, %v3524
    %v3526 = vrot.slane %v3524, 4
    %v3527 = vrot.slane %v3056, 6
    %v3528 = vsel %vm584, %v3526, %v3527
    %s3529 = scalar_lea.vmem %s1, 76
    %v3530 = vld [vmem:[%s3529] sm:$0xf]
    %v3531 = vunpack.c.l.b16 %v3512
    %v3532 = vunpack.c.l.b16 %v3515
    %v3533 = vunpack.c.l.b16 %v3518
    %v3534 = vunpack.c.l.b16 %v3522
    %v3535 = vunpack.c.l.b16 %v3525
    %v3536 = vunpack.c.l.b16 %v3528
    %v3537 = vpack.c.b16 %v3532, %v3531
    %v3538 = vpack.c.b16 %v3534, %v3533
    %v3539 = vpack.c.b16 %v3536, %v3535
    %v3541 = vsel %vm202, %v3537, 0
    %v3544 = vsel %vm202, %v3538, 0
    %v3547 = vsel %vm202, %v3539, 0
    %v3550 = vsel %vm212, %v3530, 0
    %3552 = vmatprep.subr.bf16.mxu0 0
    %3553 = vmatpush1.bf16.msra.mxu0 %v3550
    %3554 = vmatprep.subr.bf16.mxu0 0
    %3555 = vmatpush1.bf16.msra.mxu0 0
    %3556 = vmatprep.subr.bf16.mxu0 0
    %3557 = vmatpush1.bf16.msra.mxu0 0
    %3558 = vmatprep.subr.bf16.mxu0 0
    %3559 = vmatpush1.bf16.msra.mxu0 0
    %3560 = vmatprep.subr.bf16.mxu0 0
    %3561 = vmatpush1.bf16.msra.mxu0 0
    %3562 = vmatprep.subr.bf16.mxu0 0
    %3563 = vmatpush1.bf16.msra.mxu0 0
    %3564 = vmatprep.subr.bf16.mxu0 0
    %3565 = vmatpush1.bf16.msra.mxu0 0
    %3566 = vmatprep.subr.bf16.mxu0 0
    %3567 = vmatpush1.bf16.msra.mxu0 0
    %3568 = vmatprep.subr.bf16.mxu0 0
    %3569 = vmatpush1.bf16.msra.mxu0 0
    %3570 = vmatprep.subr.bf16.mxu0 0
    %3571 = vmatpush1.bf16.msra.mxu0 0
    %3572 = vmatprep.subr.bf16.mxu0 0
    %3573 = vmatpush1.bf16.msra.mxu0 0
    %3574 = vmatprep.subr.bf16.mxu0 0
    %3575 = vmatpush1.bf16.msra.mxu0 0
    %3576 = vmatprep.subr.bf16.mxu0 0
    %3577 = vmatpush1.bf16.msra.mxu0 0
    %3578 = vmatprep.subr.bf16.mxu0 0
    %3579 = vmatpush1.bf16.msra.mxu0 0
    %3580 = vmatprep.subr.bf16.mxu0 0
    %3581 = vmatpush1.bf16.msra.mxu0 0
    %3582 = vmatprep.subr.bf16.mxu0 0
    %3583 = vmatpush1.bf16.msra.mxu0 0
    %3584 = vmatprep.mubr.bf16.mxu0 0
    %3585 = vmatmul.mubr.bf16.gmra.mrb[0].mxu0 %v3541
    %v3586 = vpop.f32.mrb[0].mxu0
    %v3587 = vadd.f32 0.0, %v3586
    %v3588 = vpop.f32.mrb[0].mxu0
    %v3589 = vpop.f32.mrb[0].mxu0
    %v3590 = vadd.f32 0.0, %v3589
    %v3591 = vpop.f32.mrb[0].mxu0
    %3592 = vmatprep.mubr.bf16.mxu0 0
    %3593 = vmatmul.mubr.bf16.gmra.mrb[0].mxu0 %v3544
    %v3594 = vpop.f32.mrb[0].mxu0
    %v3595 = vadd.f32 0.0, %v3594
    %v3596 = vpop.f32.mrb[0].mxu0
    %v3597 = vpop.f32.mrb[0].mxu0
    %v3598 = vadd.f32 0.0, %v3597
    %v3599 = vpop.f32.mrb[0].mxu0
    %3600 = vmatprep.mubr.bf16.mxu0 0
    %3601 = vmatmul.mubr.bf16.gmra.mrb[0].mxu0 %v3547
    %v3602 = vpop.f32.mrb[0].mxu0
    %v3603 = vadd.f32 0.0, %v3602
    %v3604 = vpop.f32.mrb[0].mxu0
    %v3605 = vpop.f32.mrb[0].mxu0
    %v3606 = vadd.f32 0.0, %v3605
    %v3607 = vpop.f32.mrb[0].mxu0
    %3608 = vdwg.mxu0
    %v3609 = vadd.f32 %v3503, %v3587
    %v3610 = vadd.f32 %v3504, %v3590
    %v3611 = vadd.f32 %v3505, %v3595
    %v3612 = vadd.f32 %v3506, %v3598
    %v3613 = vadd.f32 %v3507, %v3603
    %v3614 = vadd.f32 %v3508, %v3606
    %s3615 = scalar_lea.vmem %s2, 3
    %v3616 = vld [vmem:[%s3615] sm:$0x1]
    %v3618 = vlaneseq
    %v3619 = vshrl.u32 %v3618, 7
    %v3620 = vsub.s32 0, %v3619
    %v3621 = vrot.slane %v3616, %v3620
    %v3623 = vadd.f32 %v3609, %v3621
    %v3624 = vadd.f32 %v3610, %v3621
    %v3625 = vadd.f32 %v3611, %v3621
    %v3626 = vadd.f32 %v3612, %v3621
    %v3627 = vadd.f32 %v3613, %v3621
    %v3628 = vadd.f32 %v3614, %v3621
    %vm3629 = vcmp.ge.f32.partialorder %v3623, 0.0
    %vm3630 = vcmp.ge.f32.partialorder %v3624, 0.0
    %vm3631 = vcmp.ge.f32.partialorder %v3625, 0.0
    %vm3632 = vcmp.ge.f32.partialorder %v3626, 0.0
    %vm3633 = vcmp.ge.f32.partialorder %v3627, 0.0
    %vm3634 = vcmp.ge.f32.partialorder %v3628, 0.0
    %v3635 = vmul.f32 %v3623, 0.01
    %v3636 = vmul.f32 %v3624, 0.01
    %v3637 = vmul.f32 %v3625, 0.01
    %v3638 = vmul.f32 %v3626, 0.01
    %v3639 = vmul.f32 %v3627, 0.01
    %v3640 = vmul.f32 %v3628, 0.01
    %v3641 = vsel %vm3629, %v3623, %v3635
    %v3642 = vsel %vm3630, %v3624, %v3636
    %v3643 = vsel %vm3631, %v3625, %v3637
    %v3644 = vsel %vm3632, %v3626, %v3638
    %v3645 = vsel %vm3633, %v3627, %v3639
    %v3646 = vsel %vm3634, %v3628, %v3640
    %v3647 = vpack.c.bf16 %v3642, %v3641
    %v3648 = vpack.c.bf16 %v3644, %v3643
    %v3649 = vpack.c.bf16 %v3646, %v3645
    %v3653 = vunpack.c.l.b16 %v3647
    %v3654 = vunpack.c.h.b16 %v3647
    %v3655 = vunpack.c.l.b16 %v3648
    %v3656 = vunpack.c.h.b16 %v3648
    %v3657 = vunpack.c.l.b16 %v3649
    %v3658 = vunpack.c.h.b16 %v3649
    %v3659 = vpack.c.b16 %v3653, %v3653
    %v3660 = vpack.c.b16 %v3654, %v3654
    %v3661 = vpack.c.b16 %v3655, %v3655
    %v3662 = vpack.c.b16 %v3656, %v3656
    %v3663 = vpack.c.b16 %v3657, %v3657
    %v3664 = vpack.c.b16 %v3658, %v3658
    %s3665 = scalar_lea.vmem %s3, 72
    %v3666 = vld [vmem:[%s3665] sm:$0xf]
    %v3667 = vld [vmem:[%s3665 + $0x4] sm:$0xf]
    %v3669 = vshrl.u32 %v3659, 16
    %v3671 = vrot.slane %v3669, 4
    %v3672 = vshll.u32 %v3659, 16
    %v3674 = vrot.slane %v3672, 5
    %v3675 = vor.u32 %v3671, %v3674
    %v3676 = vrot.slane %v3675, 4
    %v3678 = vshll.u32 %v3660, 16
    %v3680 = vrot.slane %v3678, 5
    %v3681 = vsel %vm122, %v3676, %v3680
    %v3682 = vshrl.u32 %v3660, 16
    %v3684 = vrot.slane %v3682, 4
    %v3685 = vor.u32 %v3684, %v3680
    %v3686 = vrot.slane %v3685, 4
    %v3688 = vshll.u32 %v3661, 16
    %v3690 = vrot.slane %v3688, 5
    %v3691 = vsel %vm122, %v3686, %v3690
    %v3693 = vshrl.u32 %v3662, 16
    %v3695 = vrot.slane %v3693, 4
    %v3696 = vshll.u32 %v3662, 16
    %v3698 = vrot.slane %v3696, 5
    %v3699 = vor.u32 %v3695, %v3698
    %v3700 = vrot.slane %v3699, 4
    %v3702 = vshll.u32 %v3663, 16
    %v3704 = vrot.slane %v3702, 5
    %v3705 = vsel %vm122, %v3700, %v3704
    %v3706 = vshrl.u32 %v3663, 16
    %v3708 = vrot.slane %v3706, 4
    %v3709 = vor.u32 %v3708, %v3704
    %v3710 = vrot.slane %v3709, 4
    %v3712 = vshll.u32 %v3664, 16
    %v3714 = vrot.slane %v3712, 5
    %v3715 = vsel %vm122, %v3710, %v3714
    %s3716 = scalar_lea.vmem %s3, 80
    %v3717 = vld [vmem:[%s3716] sm:$0xf]
    %v3718 = vld [vmem:[%s3716 + $0x4] sm:$0xf]
    %v3719 = vunpack.c.l.b16 %v3681
    %v3720 = vunpack.c.l.b16 %v3691
    %v3721 = vunpack.c.l.b16 %v3705
    %v3722 = vunpack.c.l.b16 %v3715
    %v3723 = vpack.c.b16 %v3720, %v3719
    %v3724 = vpack.c.b16 %v3722, %v3721
    %v3727 = vunpack.c.l.b16 %v3717
    %v3728 = vunpack.c.l.b16 %v3718
    %v3729 = vpack.c.b16 %v3728, %v3727
    %v3732 = vsel %vm805, %v3723, 0
    %v3735 = vsel %vm805, %v3724, 0
    %3737 = vmatprep.subr.bf16.mxu0 0
    %3738 = vmatpush1.bf16.msra.mxu0 %v3729
    %3739 = vmatprep.subr.bf16.mxu0 0
    %3740 = vmatpush1.bf16.msra.mxu0 0
    %3741 = vmatprep.subr.bf16.mxu0 0
    %3742 = vmatpush1.bf16.msra.mxu0 0
    %3743 = vmatprep.subr.bf16.mxu0 0
    %3744 = vmatpush1.bf16.msra.mxu0 0
    %3745 = vmatprep.subr.bf16.mxu0 0
    %3746 = vmatpush1.bf16.msra.mxu0 0
    %3747 = vmatprep.subr.bf16.mxu0 0
    %3748 = vmatpush1.bf16.msra.mxu0 0
    %3749 = vmatprep.subr.bf16.mxu0 0
    %3750 = vmatpush1.bf16.msra.mxu0 0
    %3751 = vmatprep.subr.bf16.mxu0 0
    %3752 = vmatpush1.bf16.msra.mxu0 0
    %3753 = vmatprep.subr.bf16.mxu0 0
    %3754 = vmatpush1.bf16.msra.mxu0 0
    %3755 = vmatprep.subr.bf16.mxu0 0
    %3756 = vmatpush1.bf16.msra.mxu0 0
    %3757 = vmatprep.subr.bf16.mxu0 0
    %3758 = vmatpush1.bf16.msra.mxu0 0
    %3759 = vmatprep.subr.bf16.mxu0 0
    %3760 = vmatpush1.bf16.msra.mxu0 0
    %3761 = vmatprep.subr.bf16.mxu0 0
    %3762 = vmatpush1.bf16.msra.mxu0 0
    %3763 = vmatprep.subr.bf16.mxu0 0
    %3764 = vmatpush1.bf16.msra.mxu0 0
    %3765 = vmatprep.subr.bf16.mxu0 0
    %3766 = vmatpush1.bf16.msra.mxu0 0
    %3767 = vmatprep.subr.bf16.mxu0 0
    %3768 = vmatpush1.bf16.msra.mxu0 0
    %3769 = vmatprep.mubr.bf16.mxu0 0
    %3770 = vmatmul.mubr.bf16.gmra.mrb[0].mxu0 %v3732
    %v3771 = vpop.f32.mrb[0].mxu0
    %v3772 = vadd.f32 0.0, %v3771
    %v3773 = vpop.f32.mrb[0].mxu0
    %v3774 = vpop.f32.mrb[0].mxu0
    %v3775 = vadd.f32 0.0, %v3774
    %v3776 = vpop.f32.mrb[0].mxu0
    %3777 = vmatprep.mubr.bf16.mxu0 0
    %3778 = vmatmul.mubr.bf16.gmra.mrb[0].mxu0 %v3735
    %v3779 = vpop.f32.mrb[0].mxu0
    %v3780 = vadd.f32 0.0, %v3779
    %v3781 = vpop.f32.mrb[0].mxu0
    %v3782 = vpop.f32.mrb[0].mxu0
    %v3783 = vadd.f32 0.0, %v3782
    %v3784 = vpop.f32.mrb[0].mxu0
    %3785 = vdwg.mxu0
    %v3786 = vpack.c.b16 %v3654, %v3653
    %v3787 = vpack.c.b16 %v3657, %v3656
    %v3790 = vunpack.c.l.b16 %v3666
    %v3791 = vunpack.c.l.b16 %v3667
    %v3792 = vpack.c.b16 %v3791, %v3790
    %v3795 = vsel %vm805, %v3786, 0
    %v3798 = vsel %vm805, %v3787, 0
    %3800 = vmatprep.subr.bf16.mxu0 0
    %3801 = vmatpush1.bf16.msra.mxu0 %v3792
    %3802 = vmatprep.subr.bf16.mxu0 0
    %3803 = vmatpush1.bf16.msra.mxu0 0
    %3804 = vmatprep.subr.bf16.mxu0 0
    %3805 = vmatpush1.bf16.msra.mxu0 0
    %3806 = vmatprep.subr.bf16.mxu0 0
    %3807 = vmatpush1.bf16.msra.mxu0 0
    %3808 = vmatprep.subr.bf16.mxu0 0
    %3809 = vmatpush1.bf16.msra.mxu0 0
    %3810 = vmatprep.subr.bf16.mxu0 0
    %3811 = vmatpush1.bf16.msra.mxu0 0
    %3812 = vmatprep.subr.bf16.mxu0 0
    %3813 = vmatpush1.bf16.msra.mxu0 0
    %3814 = vmatprep.subr.bf16.mxu0 0
    %3815 = vmatpush1.bf16.msra.mxu0 0
    %3816 = vmatprep.subr.bf16.mxu0 0
    %3817 = vmatpush1.bf16.msra.mxu0 0
    %3818 = vmatprep.subr.bf16.mxu0 0
    %3819 = vmatpush1.bf16.msra.mxu0 0
    %3820 = vmatprep.subr.bf16.mxu0 0
    %3821 = vmatpush1.bf16.msra.mxu0 0
    %3822 = vmatprep.subr.bf16.mxu0 0
    %3823 = vmatpush1.bf16.msra.mxu0 0
    %3824 = vmatprep.subr.bf16.mxu0 0
    %3825 = vmatpush1.bf16.msra.mxu0 0
    %3826 = vmatprep.subr.bf16.mxu0 0
    %3827 = vmatpush1.bf16.msra.mxu0 0
    %3828 = vmatprep.subr.bf16.mxu0 0
    %3829 = vmatpush1.bf16.msra.mxu0 0
    %3830 = vmatprep.subr.bf16.mxu0 0
    %3831 = vmatpush1.bf16.msra.mxu0 0
    %3832 = vmatprep.mubr.bf16.mxu0 0
    %3833 = vmatmul.mubr.bf16.gmra.mrb[0].mxu0 %v3795
    %v3834 = vpop.f32.mrb[0].mxu0
    %v3835 = vadd.f32 %v3772, %v3834
    %v3836 = vpop.f32.mrb[0].mxu0
    %v3837 = vpop.f32.mrb[0].mxu0
    %v3838 = vadd.f32 %v3775, %v3837
    %v3839 = vpop.f32.mrb[0].mxu0
    %3840 = vmatprep.mubr.bf16.mxu0 0
    %3841 = vmatmul.mubr.bf16.gmra.mrb[0].mxu0 %v3798
    %v3842 = vpop.f32.mrb[0].mxu0
    %v3843 = vadd.f32 %v3780, %v3842
    %v3844 = vpop.f32.mrb[0].mxu0
    %v3845 = vpop.f32.mrb[0].mxu0
    %v3846 = vadd.f32 %v3783, %v3845
    %v3847 = vpop.f32.mrb[0].mxu0
    %3848 = vdwg.mxu0
    %v3849 = vrot.slane %v3659, 5
    %v3850 = vrot.slane %v3849, 4
    %v3851 = vrot.slane %v3660, 5
    %v3852 = vsel %vm347, %v3850, %v3851
    %v3853 = vrot.slane %v3851, 4
    %v3854 = vrot.slane %v3661, 5
    %v3855 = vsel %vm347, %v3853, %v3854
    %v3856 = vrot.slane %v3662, 5
    %v3857 = vrot.slane %v3856, 4
    %v3858 = vrot.slane %v3663, 5
    %v3859 = vsel %vm347, %v3857, %v3858
    %v3860 = vrot.slane %v3858, 4
    %v3861 = vrot.slane %v3664, 5
    %v3862 = vsel %vm347, %v3860, %v3861
    %s3863 = scalar_lea.vmem %s3, 88
    %v3864 = vld [vmem:[%s3863] sm:$0xf]
    %v3865 = vld [vmem:[%s3863 + $0x4] sm:$0xf]
    %v3866 = vunpack.c.l.b16 %v3852
    %v3867 = vunpack.c.l.b16 %v3855
    %v3868 = vunpack.c.l.b16 %v3859
    %v3869 = vunpack.c.l.b16 %v3862
    %v3870 = vpack.c.b16 %v3867, %v3866
    %v3871 = vpack.c.b16 %v3869, %v3868
    %v3874 = vunpack.c.l.b16 %v3864
    %v3875 = vunpack.c.l.b16 %v3865
    %v3876 = vpack.c.b16 %v3875, %v3874
    %v3879 = vsel %vm805, %v3870, 0
    %v3882 = vsel %vm805, %v3871, 0
    %3884 = vmatprep.subr.bf16.mxu0 0
    %3885 = vmatpush1.bf16.msra.mxu0 %v3876
    %3886 = vmatprep.subr.bf16.mxu0 0
    %3887 = vmatpush1.bf16.msra.mxu0 0
    %3888 = vmatprep.subr.bf16.mxu0 0
    %3889 = vmatpush1.bf16.msra.mxu0 0
    %3890 = vmatprep.subr.bf16.mxu0 0
    %3891 = vmatpush1.bf16.msra.mxu0 0
    %3892 = vmatprep.subr.bf16.mxu0 0
    %3893 = vmatpush1.bf16.msra.mxu0 0
    %3894 = vmatprep.subr.bf16.mxu0 0
    %3895 = vmatpush1.bf16.msra.mxu0 0
    %3896 = vmatprep.subr.bf16.mxu0 0
    %3897 = vmatpush1.bf16.msra.mxu0 0
    %3898 = vmatprep.subr.bf16.mxu0 0
    %3899 = vmatpush1.bf16.msra.mxu0 0
    %3900 = vmatprep.subr.bf16.mxu0 0
    %3901 = vmatpush1.bf16.msra.mxu0 0
    %3902 = vmatprep.subr.bf16.mxu0 0
    %3903 = vmatpush1.bf16.msra.mxu0 0
    %3904 = vmatprep.subr.bf16.mxu0 0
    %3905 = vmatpush1.bf16.msra.mxu0 0
    %3906 = vmatprep.subr.bf16.mxu0 0
    %3907 = vmatpush1.bf16.msra.mxu0 0
    %3908 = vmatprep.subr.bf16.mxu0 0
    %3909 = vmatpush1.bf16.msra.mxu0 0
    %3910 = vmatprep.subr.bf16.mxu0 0
    %3911 = vmatpush1.bf16.msra.mxu0 0
    %3912 = vmatprep.subr.bf16.mxu0 0
    %3913 = vmatpush1.bf16.msra.mxu0 0
    %3914 = vmatprep.subr.bf16.mxu0 0
    %3915 = vmatpush1.bf16.msra.mxu0 0
    %3916 = vmatprep.mubr.bf16.mxu0 0
    %3917 = vmatmul.mubr.bf16.gmra.mrb[0].mxu0 %v3879
    %v3918 = vpop.f32.mrb[0].mxu0
    %v3919 = vadd.f32 0.0, %v3918
    %v3920 = vpop.f32.mrb[0].mxu0
    %v3921 = vpop.f32.mrb[0].mxu0
    %v3922 = vadd.f32 0.0, %v3921
    %v3923 = vpop.f32.mrb[0].mxu0
    %3924 = vmatprep.mubr.bf16.mxu0 0
    %3925 = vmatmul.mubr.bf16.gmra.mrb[0].mxu0 %v3882
    %v3926 = vpop.f32.mrb[0].mxu0
    %v3927 = vadd.f32 0.0, %v3926
    %v3928 = vpop.f32.mrb[0].mxu0
    %v3929 = vpop.f32.mrb[0].mxu0
    %v3930 = vadd.f32 0.0, %v3929
    %v3931 = vpop.f32.mrb[0].mxu0
    %3932 = vdwg.mxu0
    %v3933 = vadd.f32 %v3835, %v3919
    %v3934 = vadd.f32 %v3838, %v3922
    %v3935 = vadd.f32 %v3843, %v3927
    %v3936 = vadd.f32 %v3846, %v3930
    %s3937 = scalar_lea.vmem %s4, 3
    %v3938 = vld [vmem:[%s3937] sm:$0x1]
    %v3940 = vlaneseq
    %v3941 = vshrl.u32 %v3940, 7
    %v3942 = vsub.s32 0, %v3941
    %v3943 = vrot.slane %v3938, %v3942
    %v3945 = vadd.f32 %v3933, %v3943
    %v3946 = vadd.f32 %v3934, %v3943
    %v3947 = vadd.f32 %v3935, %v3943
    %v3948 = vadd.f32 %v3936, %v3943
    %v3949 = vtanh.pop %v3945
    %v3950 = vtanh.pop %v3946
    %v3951 = vtanh.pop %v3947
    %v3952 = vtanh.pop %v3948
    %v3953 = vsub.f32 %v1035, %v3949
    %v3954 = vsub.f32 %v1036, %v3950
    %v3955 = vsub.f32 %v1037, %v3951
    %v3956 = vsub.f32 %v1038, %v3952
    %v3957 = vld [vmem:[%s5] sm:$0x1]
    %v3959 = vlaneseq
    %v3960 = vshrl.u32 %v3959, 7
    %v3961 = vsub.s32 0, %v3960
    %v3962 = vrot.slane %v3957, %v3961
    %v3964 = vmul.f32 %v2983, %v3962
    %v3965 = vmul.f32 %v2984, %v3962
    %v3966 = vmul.f32 %v2985, %v3962
    %v3967 = vmul.f32 %v2986, %v3962
    %v3968 = vld [vmem:[%s6] sm:$0x1]
    %v3970 = vlaneseq
    %v3971 = vshrl.u32 %v3970, 7
    %v3972 = vsub.s32 0, %v3971
    %v3973 = vrot.slane %v3968, %v3972
    %v3975 = vadd.f32 %v3964, %v3973
    %v3976 = vadd.f32 %v3965, %v3973
    %v3977 = vadd.f32 %v3966, %v3973
    %v3978 = vadd.f32 %v3967, %v3973
    %v3979 = vmax.f32 %v3975, 0.0
    %v3980 = vmax.f32 %v3976, 0.0
    %v3981 = vmax.f32 %v3977, 0.0
    %v3982 = vmax.f32 %v3978, 0.0
    %v3983 = vpack.c.bf16 %v3980, %v3979
    %v3984 = vpack.c.bf16 %v3982, %v3981
    %v3985 = vld [vmem:[%s7] sm:$0xf]
    %v3987 = vsel %vm202, %v3983, 0
    %v3990 = vsel %vm202, %v3984, 0
    %v3993 = vsel %vm212, %v3985, 0
    %3995 = vmatprep.subr.bf16.mxu0 0
    %3996 = vmatpush1.bf16.msra.mxu0 %v3993
    %3997 = vmatprep.subr.bf16.mxu0 0
    %3998 = vmatpush1.bf16.msra.mxu0 0
    %3999 = vmatprep.subr.bf16.mxu0 0
    %4000 = vmatpush1.bf16.msra.mxu0 0
    %4001 = vmatprep.subr.bf16.mxu0 0
    %4002 = vmatpush1.bf16.msra.mxu0 0
    %4003 = vmatprep.subr.bf16.mxu0 0
    %4004 = vmatpush1.bf16.msra.mxu0 0
    %4005 = vmatprep.subr.bf16.mxu0 0
    %4006 = vmatpush1.bf16.msra.mxu0 0
    %4007 = vmatprep.subr.bf16.mxu0 0
    %4008 = vmatpush1.bf16.msra.mxu0 0
    %4009 = vmatprep.subr.bf16.mxu0 0
    %4010 = vmatpush1.bf16.msra.mxu0 0
    %4011 = vmatprep.subr.bf16.mxu0 0
    %4012 = vmatpush1.bf16.msra.mxu0 0
    %4013 = vmatprep.subr.bf16.mxu0 0
    %4014 = vmatpush1.bf16.msra.mxu0 0
    %4015 = vmatprep.subr.bf16.mxu0 0
    %4016 = vmatpush1.bf16.msra.mxu0 0
    %4017 = vmatprep.subr.bf16.mxu0 0
    %4018 = vmatpush1.bf16.msra.mxu0 0
    %4019 = vmatprep.subr.bf16.mxu0 0
    %4020 = vmatpush1.bf16.msra.mxu0 0
    %4021 = vmatprep.subr.bf16.mxu0 0
    %4022 = vmatpush1.bf16.msra.mxu0 0
    %4023 = vmatprep.subr.bf16.mxu0 0
    %4024 = vmatpush1.bf16.msra.mxu0 0
    %4025 = vmatprep.subr.bf16.mxu0 0
    %4026 = vmatpush1.bf16.msra.mxu0 0
    %4027 = vmatprep.mubr.bf16.mxu0 0
    %4028 = vmatmul.mubr.bf16.gmra.mrb[0].mxu0 %v3987
    %v4029 = vpop.f32.mrb[0].mxu0
    %v4030 = vadd.f32 0.0, %v4029
    %v4031 = vpop.f32.mrb[0].mxu0
    %v4032 = vpop.f32.mrb[0].mxu0
    %v4033 = vadd.f32 0.0, %v4032
    %v4034 = vpop.f32.mrb[0].mxu0
    %4035 = vmatprep.mubr.bf16.mxu0 0
    %4036 = vmatmul.mubr.bf16.gmra.mrb[0].mxu0 %v3990
    %v4037 = vpop.f32.mrb[0].mxu0
    %v4038 = vadd.f32 0.0, %v4037
    %v4039 = vpop.f32.mrb[0].mxu0
    %v4040 = vpop.f32.mrb[0].mxu0
    %v4041 = vadd.f32 0.0, %v4040
    %v4042 = vpop.f32.mrb[0].mxu0
    %4043 = vdwg.mxu0
    %4044 = vst.msk [vmem:[%s8] sm:$0xff] %vm202, %v4030
    %4045 = vst.msk [vmem:[%s8 + $0x8] sm:$0xff] %vm202, %v4033
    %4046 = vst.msk [vmem:[%s8 + $0x10] sm:$0xff] %vm202, %v4038
    %4047 = vst.msk [vmem:[%s8 + $0x18] sm:$0xff] %vm202, %v4041
    %4048 = vxpose.xlu0.b32.start [1/16] %v3953, 128
    %4049 = vxpose.xlu0.b32.cont [2/16] %v3954, 128
    %4050 = vxpose.xlu0.b32.cont [3/16] 0.0, 128
    %4051 = vxpose.xlu0.b32.cont [4/16] 0.0, 128
    %4052 = vxpose.xlu0.b32.cont [5/16] 0.0, 128
    %4053 = vxpose.xlu0.b32.cont [6/16] 0.0, 128
    %4054 = vxpose.xlu0.b32.cont [7/16] 0.0, 128
    %4055 = vxpose.xlu0.b32.cont [8/16] 0.0, 128
    %4056 = vxpose.xlu0.b32.cont [9/16] 0.0, 128
    %4057 = vxpose.xlu0.b32.cont [10/16] 0.0, 128
    %4058 = vxpose.xlu0.b32.cont [11/16] 0.0, 128
    %4059 = vxpose.xlu0.b32.cont [12/16] 0.0, 128
    %4060 = vxpose.xlu0.b32.cont [13/16] 0.0, 128
    %4061 = vxpose.xlu0.b32.cont [14/16] 0.0, 128
    %4062 = vxpose.xlu0.b32.cont [15/16] 0.0, 128
    %4063 = vxpose.xlu0.b32.end [16/16] 0.0, 128
    %v4064 = vpop.trf.xlu0
    %v4065 = vpop.trf.xlu0
    %v4066 = vpop.trf.xlu0
    %v4067 = vpop.trf.xlu0
    %v4068 = vpop.trf.xlu0
    %v4069 = vpop.trf.xlu0
    %v4070 = vpop.trf.xlu0
    %v4071 = vpop.trf.xlu0
    %v4072 = vpop.trf.xlu0
    %v4073 = vpop.trf.xlu0
    %v4074 = vpop.trf.xlu0
    %v4075 = vpop.trf.xlu0
    %v4076 = vpop.trf.xlu0
    %v4077 = vpop.trf.xlu0
    %v4078 = vpop.trf.xlu0
    %v4079 = vpop.trf.xlu0
    %4080 = vxpose.xlu0.b32.start [1/16] %v3955, 128
    %4081 = vxpose.xlu0.b32.cont [2/16] %v3956, 128
    %4082 = vxpose.xlu0.b32.cont [3/16] 0.0, 128
    %4083 = vxpose.xlu0.b32.cont [4/16] 0.0, 128
    %4084 = vxpose.xlu0.b32.cont [5/16] 0.0, 128
    %4085 = vxpose.xlu0.b32.cont [6/16] 0.0, 128
    %4086 = vxpose.xlu0.b32.cont [7/16] 0.0, 128
    %4087 = vxpose.xlu0.b32.cont [8/16] 0.0, 128
    %4088 = vxpose.xlu0.b32.cont [9/16] 0.0, 128
    %4089 = vxpose.xlu0.b32.cont [10/16] 0.0, 128
    %4090 = vxpose.xlu0.b32.cont [11/16] 0.0, 128
    %4091 = vxpose.xlu0.b32.cont [12/16] 0.0, 128
    %4092 = vxpose.xlu0.b32.cont [13/16] 0.0, 128
    %4093 = vxpose.xlu0.b32.cont [14/16] 0.0, 128
    %4094 = vxpose.xlu0.b32.cont [15/16] 0.0, 128
    %4095 = vxpose.xlu0.b32.end [16/16] 0.0, 128
    %v4096 = vpop.trf.xlu0
    %v4097 = vpop.trf.xlu0
    %v4098 = vpop.trf.xlu0
    %v4099 = vpop.trf.xlu0
    %v4100 = vpop.trf.xlu0
    %v4101 = vpop.trf.xlu0
    %v4102 = vpop.trf.xlu0
    %v4103 = vpop.trf.xlu0
    %v4104 = vpop.trf.xlu0
    %v4105 = vpop.trf.xlu0
    %v4106 = vpop.trf.xlu0
    %v4107 = vpop.trf.xlu0
    %v4108 = vpop.trf.xlu0
    %v4109 = vpop.trf.xlu0
    %v4110 = vpop.trf.xlu0
    %v4111 = vpop.trf.xlu0
    %4112 = vst.msk [vmem:[#allocation2] sm:$0xff] %vm805, %v4064
    %4113 = vst.msk [vmem:[#allocation2 + $0x8] sm:$0xff] %vm805, %v4096
    // Predicated region
    $region34: #{level_idcn_forward.1} parent=1 // pred_check
      _
    $region35: #{level_idcn_forward.1} parent=1 // pred_check_branch
      %4115 = sbr.rel (0) target = $region37
    $region36: #{level_idcn_forward.1} parent=1 // pred_region
      _
    $region37: #{level_idcn_forward.1} parent=1 // pred_fallthru
      _
    // Predicated region
    $region38: #{level_idcn_forward.1} parent=1 // pred_check
      _
    $region39: #{level_idcn_forward.1} parent=1 // pred_check_branch
      %4117 = sbr.rel (0) target = $region41
    $region40: #{level_idcn_forward.1} parent=1 // pred_region
      %s4119 = ssub.s32 256, 256
      %4120 = vsyncadd [#allocation3], %s4119
      %s4121 = sshll.u32 [#allocation2], 4
      %s4122 = int_to_ptr.vmem [resolvable:$true] %s4121
      %4127 = dma.vmem_to_hbm [thread:$0]  %s4122, 256, %s9, [#allocation3], 128, 128, 8
    $region41: #{level_idcn_forward.1} parent=1 // pred_fallthru
      _
    // Predicated region
    $region42: #{level_idcn_forward.1} parent=1 // pred_check
      _
    $region43: #{level_idcn_forward.1} parent=1 // pred_check_branch
      %4129 = sbr.rel (0) target = $region45
    $region44: #{level_idcn_forward.1} parent=1 // pred_region
      _
    $region45: #{level_idcn_forward.1} parent=1 // pred_fallthru
      _
    // Predicated region
    $region46: #{level_idcn_forward.1} parent=1 // pred_check
      _
    $region47: #{level_idcn_forward.1} parent=1 // pred_check_branch
      %4131 = sbr.rel (0) target = $region49
    $region48: #{level_idcn_forward.1} parent=1 // pred_region
      %4132 = dma.done [#allocation3], 256
    $region49: #{level_idcn_forward.1} parent=1 // pred_fallthru
      _
    %4133 = vsyncpa [#allocation3], 1

</llo_original>
